<compile_context>
chip_gen: v6e
topology: v6e:2x2x1
jax: 0.10.0
libtpu: 0.0.40
codegen_flags: <defaults>
</compile_context>

<pallas_src>
import jax
import jax.numpy as jnp
from jax.scipy.linalg import block_diag
from jax.experimental import pallas as pl
from jax.experimental.pallas import tpu as pltpu


def _round_up(v, m):
    return ((v + m - 1) // m) * m


# ----------------------------------------------------------------------------
# Parameter construction (deterministic, SIREN-style init; torch Linear weight
# (out,in) is stored transposed as (in,out): W in (in, out), b in (1, out)).
# ----------------------------------------------------------------------------
def init_siren_params(key, dim_in, dim_hidden, dim_out, num_layers, w0_initial):
    params = []  # flat list: [W0, b0, W1, b1, ..., W_last, b_last]
    keys = jax.random.split(key, num_layers + 1)
    for i in range(num_layers):
        d_in = dim_in if i == 0 else dim_hidden
        w0 = w0_initial if i == 0 else 1.0
        bound = (1.0 / d_in) if i == 0 else (6.0 / d_in) ** 0.5 / w0
        kw, kb = jax.random.split(keys[i])
        W = jax.random.uniform(kw, (d_in, dim_hidden), jnp.float32, -bound, bound)
        b = jax.random.uniform(kb, (1, dim_hidden), jnp.float32, -bound, bound)
        params += [W, b]
    # last layer (Identity final activation)
    d_in = dim_hidden
    bound = (6.0 / d_in) ** 0.5
    kw, kb = jax.random.split(keys[-1])
    W = jax.random.uniform(kw, (d_in, dim_out), jnp.float32, -bound, bound)
    b = jax.random.uniform(kb, (1, dim_out), jnp.float32, -bound, bound)
    params += [W, b]
    return params


# ----------------------------------------------------------------------------
# Offline parameter fusion + packing:
#   - fuse the two nets (width H each) into one width-2H net,
#   - fold the input normalization and w0_initial into layer 0,
#   - transpose everything to (out, in) so the kernel can do  W @ h  with the
#     batch on the lane axis,
#   - pack into 3 arrays to minimize pipeline inputs:
#       w_stack: (num_layers, 2H, 2H)  layer 0 zero-padded on K (only [:, :3] used)
#       b_stack: (2H, num_layers)      per-layer biases as columns
#       wfb:     (3, 2H + 1)           fused final weight with bias as last column
# ----------------------------------------------------------------------------
def fuse_and_pack_params(rho_params, v_params, num_layers, w0_initial):
    H = rho_params[0].shape[1]
    two_h = 2 * H
    shift = jnp.array([0.0, 4.0, 4.0], jnp.float32)
    inv_div = jnp.array([1.0 / 1.2, 1.0 / 8.0, 1.0 / 8.0], jnp.float32)

    # layer 0: concat along the output dim, fold normalization + w0_initial
    W0 = jnp.concatenate([rho_params[0], v_params[0]], axis=1)            # (3, 2H)
    b0 = jnp.concatenate([rho_params[1], v_params[1]], axis=1)            # (1, 2H)
    W0_eff = (w0_initial * (inv_div[:, None] * W0)).T                     # (2H, 3)
    b0_eff = (w0_initial * (b0 + (shift * inv_div)[None, :] @ W0)).T      # (2H, 1)

    w_layers = [jnp.pad(W0_eff, ((0, 0), (0, two_h - 3)))]                # (2H, 2H)
    b_cols = [b0_eff]

    # hidden sine layers 1..num_layers-1: block-diagonal fusion (w0 = 1)
    for i in range(1, num_layers):
        W = block_diag(rho_params[2 * i], v_params[2 * i]).T              # (2H, 2H)
        b = jnp.concatenate([rho_params[2 * i + 1],
                             v_params[2 * i + 1]], axis=1).T              # (2H, 1)
        w_layers.append(W)
        b_cols.append(b)

    # final (Identity) layer: fuse into a single (3, 2H) matmul, bias appended
    Wf = block_diag(rho_params[-2], v_params[-2]).T                       # (3, 2H)
    bf = jnp.concatenate([rho_params[-1], v_params[-1]], axis=1).T        # (3, 1)

    w_stack = jnp.stack(w_layers, axis=0)                                 # (L, 2H, 2H)
    b_stack = jnp.concatenate(b_cols, axis=1)                             # (2H, L)
    wfb = jnp.concatenate([Wf, bf], axis=1)                               # (3, 2H+1)
    return w_stack, b_stack, wfb, two_h


# ----------------------------------------------------------------------------
# Pallas kernel: fused SIREN net, batch on lanes, all weights resident in VMEM.
# ----------------------------------------------------------------------------
def make_kernel(num_layers, two_h, hidden_matmul_dtype=jnp.float32):
    use_lowp = jnp.dtype(hidden_matmul_dtype) != jnp.dtype(jnp.float32)

    def kernel(x_ref, w_ref, b_ref, wfb_ref, out_ref):
        b_all = b_ref[...]                              # (2H, L)
        h = x_ref[...]                                  # (3, TN), f32
        for i in range(num_layers):
            if i == 0:
                # only the first 3 columns of the zero-padded layer-0 slot hold weights
                W = w_ref[0][:, 0:3]                    # (2H, 3)
                z = jnp.dot(W, h, preferred_element_type=jnp.float32)
            else:
                W = w_ref[i]                            # (2H, 2H)
                if use_lowp:
                    # bf16 MXU inputs (avoid f32 multi-pass emulation), f32 accumulate
                    z = jnp.dot(W.astype(hidden_matmul_dtype),
                                h.astype(hidden_matmul_dtype),
                                preferred_element_type=jnp.float32)
                else:
                    z = jnp.dot(W, h, preferred_element_type=jnp.float32)
            h = jnp.sin(z + b_all[:, i:i + 1])          # bias-add + sin in f32
        wfb = wfb_ref[...]                              # (3, 2H+1)
        out_ref[...] = (jnp.dot(wfb[:, :two_h], h, preferred_element_type=jnp.float32)
                        + wfb[:, two_h:two_h + 1])
    return kernel


# ----------------------------------------------------------------------------
# Primary entry point: lane-dense layout, x_t is (3, N), output is (3, N).
# No transposes anywhere on this path.
# ----------------------------------------------------------------------------
def mass_cons_pinn_forward_lanes(x_t, rho_params, v_params, *, num_layers,
                                 w0_initial, tile_n=8192,
                                 hidden_matmul_dtype=jnp.float32):
    F, N = x_t.shape
    assert F == 3, "space_dim=2 -> in_features = 3 ([t, x, y])"

    w_stack, b_stack, wfb, two_h = fuse_and_pack_params(
        rho_params, v_params, num_layers, w0_initial)

    # --- batch (lane) tiling -------------------------------------------------
    # Big tiles amortize the ~0.35us/grid-step pipeline overhead; cap at 16K.
    n128 = _round_up(N, 128)
    tn = min(_round_up(min(tile_n, 16384), 128), n128)
    if N >= 256:
        # keep >= 2 grid steps so both v7x TensorCores get work under
        # dimension_semantics=("parallel",); neutral on single-TC v5e/v6e.
        tn = min(tn, _round_up(pl.cdiv(N, 2), 128))
    tn = max(128, tn)
    grid = (pl.cdiv(N, tn),)
    # NOTE: with a ragged tail (N not a multiple of tn), the extra lane columns
    # of the last block carry garbage; this is safe because every output column
    # depends only on its own input column and the writeback is bounded.

    in_specs = [
        pl.BlockSpec((F, tn), lambda i: (0, i)),            # x tile (lane-dense)
        pl.BlockSpec(w_stack.shape, lambda i: (0, 0, 0)),    # resident weight stack
        pl.BlockSpec(b_stack.shape, lambda i: (0, 0)),       # resident bias slab
        pl.BlockSpec(wfb.shape, lambda i: (0, 0)),           # resident final W|b
    ]
    out_specs = pl.BlockSpec((F, tn), lambda i: (0, i))

    out_t = pl.pallas_call(
        make_kernel(num_layers, two_h, hidden_matmul_dtype),
        out_shape=jax.ShapeDtypeStruct((F, N), jnp.float32),
        grid_spec=pltpu.PrefetchScalarGridSpec(
            num_scalar_prefetch=0,
            grid=grid,
            in_specs=in_specs,
            out_specs=out_specs,
        ),
        compiler_params=pltpu.CompilerParams(
            dimension_semantics=("parallel",),
            # 64xTN f32 intermediates (4 MiB at TN=16K) + double-buffered I/O:
            # raise the scoped-VMEM limit (v5e default is only 16 MiB), stay
            # safely under v7x's 64 MiB physical per-TC VMEM.
            vmem_limit_bytes=48 * 1024 * 1024,
        ),
    )(x_t, w_stack, b_stack, wfb)

    return out_t                                             # (3, N) = [log_rho, vx, vy]


# ----------------------------------------------------------------------------
# Torch-module-compatible wrapper: x is (N, 3), output is (N, 3).
# The two transposes here are only for API compatibility; layout-controlling
# callers should use mass_cons_pinn_forward_lanes directly to avoid them.
# ----------------------------------------------------------------------------
def mass_cons_pinn_forward(x, rho_params, v_params, *, num_layers, w0_initial,
                           tile_n=8192, hidden_matmul_dtype=jnp.float32):
    out_t = mass_cons_pinn_forward_lanes(
        x.T, rho_params, v_params, num_layers=num_layers, w0_initial=w0_initial,
        tile_n=tile_n, hidden_matmul_dtype=hidden_matmul_dtype)
    return out_t.T


# ----------------------------------------------------------------------------
# Pure-JAX reference (unfused, matches the torch module's op order)
# ----------------------------------------------------------------------------
def reference_forward(x, rho_params, v_params, *, num_layers, w0_initial):
    shift = jnp.array([0.0, 4.0, 4.0], jnp.float32)
    div = jnp.array([1.2, 8.0, 8.0], jnp.float32)
    xn = (x + shift) / div

    def mlp(h, p):
        for i in range(num_layers):
            w0 = w0_initial if i == 0 else 1.0
            h = jnp.sin(w0 * (h @ p[2 * i] + p[2 * i + 1]))
        return h @ p[-2] + p[-1]

    rho = mlp(xn, rho_params)
    vel = mlp(xn, v_params)
    return jnp.concatenate([rho, vel], axis=-1)


if __name__ == "__main__":
    # Small config consistent with the module:
    #   space_dim=2 -> in_features = out_features = 3
    space_dim = 2
    in_features = space_dim + 1          # 3
    hidden_features = 32
    num_layers = 3
    w0_initial = 30.0
    N = 512                              # number of (t, x, y) query points (>=256 -> 2 grid steps)

    key = jax.random.PRNGKey(0)
    k_x, k_rho, k_v = jax.random.split(key, 3)

    # sample points in the physical domain: t in [0, 1.2], x,y in [-4, 4]
    u = jax.random.uniform(k_x, (N, in_features), jnp.float32)
    t = u[:, :1] * 1.2
    xy = (u[:, 1:] * 2.0 - 1.0) * 4.0
    x = jnp.concatenate([t, xy], axis=-1)

    rho_params = init_siren_params(k_rho, in_features, hidden_features, 1,
                                   num_layers, w0_initial)
    v_params = init_siren_params(k_v, in_features, hidden_features, space_dim,
                                 num_layers, w0_initial)

    ref = reference_forward(x, rho_params, v_params,
                            num_layers=num_layers, w0_initial=w0_initial)

    # ---- f32 path (default): must match the f32 reference tightly ----------
    out = mass_cons_pinn_forward(x, rho_params, v_params,
                                 num_layers=num_layers, w0_initial=w0_initial)
    out = jax.block_until_ready(out)
    assert out.shape == (N, in_features), out.shape
    assert jnp.allclose(out, ref, rtol=2e-3, atol=2e-3), (
        "f32 mismatch vs reference, max abs diff = %g"
        % float(jnp.max(jnp.abs(out - ref))))

    # ---- bf16 hidden-matmul path (recommended on v6e/v7x) ------------------
    # bf16 MXU inputs for the (64,64)x(64,TN) matmuls; sin outputs in [-1,1]
    # propagated through two 64-wide sums give O(1e-2) absolute error, so this
    # path intentionally uses a looser accuracy budget than the f32 check.
    out_bf16 = mass_cons_pinn_forward(x, rho_params, v_params,
                                      num_layers=num_layers, w0_initial=w0_initial,
                                      hidden_matmul_dtype=jnp.bfloat16)
    out_bf16 = jax.block_until_ready(out_bf16)
    bf16_err = float(jnp.max(jnp.abs(out_bf16 - ref)))
    assert bf16_err < 0.15, "bf16 path mismatch vs reference, max abs diff = %g" % bf16_err

    print("KERNEL_OK")
</pallas_src>

<mosaic_0001>
module attributes {stable_mosaic.version = 11 : i64} {
  func.func @kernel(%arg0: i32, %arg1: memref<3x256xf32, #tpu.memory_space<vmem>>, %arg2: memref<3x64x64xf32, #tpu.memory_space<vmem>>, %arg3: memref<64x3xf32, #tpu.memory_space<vmem>>, %arg4: memref<3x65xf32, #tpu.memory_space<vmem>>, %arg5: memref<3x256xf32, #tpu.memory_space<vmem>>) attributes {dimension_semantics = [#tpu.dimension_semantics<parallel>], iteration_bounds = array<i64: 2>, scalar_prefetch = 0 : i64, scratch_operands = 0 : i64, tpu.core_type = #tpu.core_type<tc>, window_params = [{transform_indices = @transform_0, window_bounds = array<i64: 3, 256>}, {pipeline_mode = #tpu.pipeline_mode<synchronous>, transform_indices = @transform_1, window_bounds = array<i64: 3, 64, 64>}, {pipeline_mode = #tpu.pipeline_mode<synchronous>, transform_indices = @transform_2, window_bounds = array<i64: 64, 3>}, {pipeline_mode = #tpu.pipeline_mode<synchronous>, transform_indices = @transform_3, window_bounds = array<i64: 3, 65>}, {transform_indices = @transform_4, window_bounds = array<i64: 3, 256>}]} {
    %c0 = arith.constant 0 : index
    %c0_0 = arith.constant 0 : index
    %0 = vector.load %arg3[%c0, %c0_0] : memref<64x3xf32, #tpu.memory_space<vmem>>, vector<64x3xf32>
    %c0_1 = arith.constant 0 : index
    %c0_2 = arith.constant 0 : index
    %1 = vector.load %arg1[%c0_1, %c0_2] : memref<3x256xf32, #tpu.memory_space<vmem>>, vector<3x256xf32>
    %c0_3 = arith.constant 0 : index
    %c0_4 = arith.constant 0 : index
    %c0_5 = arith.constant 0 : index
    %2 = vector.load %arg2[%c0_3, %c0_4, %c0_5] : memref<3x64x64xf32, #tpu.memory_space<vmem>>, vector<1x64x64xf32>
    %3 = vector.shape_cast %2 : vector<1x64x64xf32> to vector<64x64xf32>
    %4 = vector.extract_strided_slice %3 {offsets = [0, 0], sizes = [64, 3], strides = [1, 1]} : vector<64x64xf32> to vector<64x3xf32>
    %cst = arith.constant dense<0.000000e+00> : vector<64x256xf32>
    %5 = tpu.matmul %4, %1, %cst {dimension_numbers = #tpu.dot_dimension_numbers<[1], [0], [0], [1], [0, 0, 1, 1], [], []>} : vector<64x3xf32>, vector<3x256xf32>, vector<64x256xf32> -> vector<64x256xf32>
    %6 = vector.extract_strided_slice %0 {offsets = [0, 0], sizes = [64, 1], strides = [1, 1]} : vector<64x3xf32> to vector<64x1xf32>
    %7 = vector.broadcast %6 : vector<64x1xf32> to vector<64x256xf32>
    %8 = arith.addf %5, %7 : vector<64x256xf32>
    %9 = math.sin %8 : vector<64x256xf32>
    %c1 = arith.constant 1 : index
    %c0_6 = arith.constant 0 : index
    %c0_7 = arith.constant 0 : index
    %10 = vector.load %arg2[%c1, %c0_6, %c0_7] : memref<3x64x64xf32, #tpu.memory_space<vmem>>, vector<1x64x64xf32>
    %11 = vector.shape_cast %10 : vector<1x64x64xf32> to vector<64x64xf32>
    %cst_8 = arith.constant dense<0.000000e+00> : vector<64x256xf32>
    %12 = tpu.matmul %11, %9, %cst_8 {dimension_numbers = #tpu.dot_dimension_numbers<[1], [0], [0], [1], [0, 0, 1, 1], [], []>} : vector<64x64xf32>, vector<64x256xf32>, vector<64x256xf32> -> vector<64x256xf32>
    %13 = vector.extract_strided_slice %0 {offsets = [0, 1], sizes = [64, 1], strides = [1, 1]} : vector<64x3xf32> to vector<64x1xf32>
    %14 = vector.broadcast %13 : vector<64x1xf32> to vector<64x256xf32>
    %15 = arith.addf %12, %14 : vector<64x256xf32>
    %16 = math.sin %15 : vector<64x256xf32>
    %c2 = arith.constant 2 : index
    %c0_9 = arith.constant 0 : index
    %c0_10 = arith.constant 0 : index
    %17 = vector.load %arg2[%c2, %c0_9, %c0_10] : memref<3x64x64xf32, #tpu.memory_space<vmem>>, vector<1x64x64xf32>
    %18 = vector.shape_cast %17 : vector<1x64x64xf32> to vector<64x64xf32>
    %cst_11 = arith.constant dense<0.000000e+00> : vector<64x256xf32>
    %19 = tpu.matmul %18, %16, %cst_11 {dimension_numbers = #tpu.dot_dimension_numbers<[1], [0], [0], [1], [0, 0, 1, 1], [], []>} : vector<64x64xf32>, vector<64x256xf32>, vector<64x256xf32> -> vector<64x256xf32>
    %20 = vector.extract_strided_slice %0 {offsets = [0, 2], sizes = [64, 1], strides = [1, 1]} : vector<64x3xf32> to vector<64x1xf32>
    %21 = vector.broadcast %20 : vector<64x1xf32> to vector<64x256xf32>
    %22 = arith.addf %19, %21 : vector<64x256xf32>
    %23 = math.sin %22 : vector<64x256xf32>
    %c0_12 = arith.constant 0 : index
    %c0_13 = arith.constant 0 : index
    %24 = vector.load %arg4[%c0_12, %c0_13] : memref<3x65xf32, #tpu.memory_space<vmem>>, vector<3x65xf32>
    %25 = vector.extract_strided_slice %24 {offsets = [0, 0], sizes = [3, 64], strides = [1, 1]} : vector<3x65xf32> to vector<3x64xf32>
    %cst_14 = arith.constant dense<0.000000e+00> : vector<3x256xf32>
    %26 = tpu.matmul %25, %23, %cst_14 {dimension_numbers = #tpu.dot_dimension_numbers<[1], [0], [0], [1], [0, 0, 1, 1], [], []>} : vector<3x64xf32>, vector<64x256xf32>, vector<3x256xf32> -> vector<3x256xf32>
    %27 = vector.extract_strided_slice %24 {offsets = [0, 64], sizes = [3, 1], strides = [1, 1]} : vector<3x65xf32> to vector<3x1xf32>
    %28 = vector.broadcast %27 : vector<3x1xf32> to vector<3x256xf32>
    %29 = arith.addf %26, %28 : vector<3x256xf32>
    %c0_15 = arith.constant 0 : index
    %c0_16 = arith.constant 0 : index
    %30 = vector.load %arg5[%c0_15, %c0_16] : memref<3x256xf32, #tpu.memory_space<vmem>>, vector<3x256xf32>
    tpu.vector_store %arg5[%c0_15, %c0_16], %29 {strides = array<i32>} : memref<3x256xf32, #tpu.memory_space<vmem>>, vector<3x256xf32>,
    return
  }
  func.func @transform_0(%arg0: i32) -> (i32, i32) {
    %c0_i32 = arith.constant 0 : i32
    %c0_i32_0 = arith.constant 0 : i32
    return %c0_i32, %arg0 : i32, i32
  }
  func.func @transform_1(%arg0: i32) -> (i32, i32, i32) {
    %c0_i32 = arith.constant 0 : i32
    %c0_i32_0 = arith.constant 0 : i32
    %c0_i32_1 = arith.constant 0 : i32
    %c0_i32_2 = arith.constant 0 : i32
    return %c0_i32, %c0_i32_0, %c0_i32_1 : i32, i32, i32
  }
  func.func @transform_2(%arg0: i32) -> (i32, i32) {
    %c0_i32 = arith.constant 0 : i32
    %c0_i32_0 = arith.constant 0 : i32
    %c0_i32_1 = arith.constant 0 : i32
    return %c0_i32, %c0_i32_0 : i32, i32
  }
  func.func @transform_3(%arg0: i32) -> (i32, i32) {
    %c0_i32 = arith.constant 0 : i32
    %c0_i32_0 = arith.constant 0 : i32
    %c0_i32_1 = arith.constant 0 : i32
    return %c0_i32, %c0_i32_0 : i32, i32
  }
  func.func @transform_4(%arg0: i32) -> (i32, i32) {
    %c0_i32 = arith.constant 0 : i32
    %c0_i32_0 = arith.constant 0 : i32
    return %c0_i32, %arg0 : i32, i32
  }
}

</mosaic_0001>

<llo_original>
// kernel: tpu_custom_call.1
$region0: #{tpu_custom_call.1}
  #allocation0 [shape = 'u32[]', space=smem, size = 0x4, offset = 0x4, fixed_abs, tag = 'smem constant byte address 0x4 - core index']
  #allocation1 [shape = 'u32[144,128]{1,0:T(1,128)}', space=vmem, size = 0x12000, scoped, tag = 'internal scratch']
  %s0 = inlined_call_operand.vmem [shape: f32[3,512], index: 0, kind: input, shape index: {}]
  %s1 = inlined_call_operand.hbm [shape: f32[3,64,64], index: 1, kind: input, shape index: {}]
  %s2 = inlined_call_operand.vmem [shape: f32[64,3], index: 2, kind: input, shape index: {}]
  %s3 = inlined_call_operand.vmem [shape: f32[3,65], index: 3, kind: input, shape index: {}]
  %s4 = inlined_call_operand.hbm [shape: f32[3,512], index: 4, kind: output, shape index: {}]
  %s5 = sld [smem:[#allocation0]]
  $region53: #{tpu_custom_call.1} parent=0
    _
  %s7 = ssub.s32 1, %s5
  %s8 = scalar_select 0, %s7, %s5
  $region1: #{tpu_custom_call.1} parent=0
    #allocation2 [shape = 'u8[98304]{0}', space=vmem, size = 0x18000, scoped, tag = 'input window, operand 1, single buffered']
    #allocation3 [shape = 's32[2]{0}', space=sflag, size = 0x8, scoped, tag = 'scoped memory for tpu_custom_call.1']
    #allocation4 [shape = 's32[2]{0}', space=sflag, size = 0x8, scoped, tag = 'scoped memory for tpu_custom_call.1']
    #allocation5 [shape = 'u8[8192]{0}', space=vmem, size = 0x2000, scoped, tag = 'output window, operand 0']
    %9 = vsyncpa [#allocation3], 0
    %10 = vsyncpa [#allocation4], 0
    %s11 = scalar_lea.sflag [#allocation4], 1
    %12 = vsyncpa %s11, 0
    loop: start=0, step=1, limit=4
    $region2: #{tpu_custom_call.1} parent=1 // loop_pre_header
      _
    $region3: #{tpu_custom_call.1} parent=1 // loop_header
      %s14 = sphi 0, %s18
      %p15 = scmp.ge.s32.totalorder %s14, 4
      %s24 = sphi 0, %s26
      %s27 = sphi 0, %s24
      %s28 = sphi 0, %s27
      %s44 = sphi 0, %s28
      %s48 = sphi 0, %s48
      %s50 = sphi 0, %s48
      %s51 = sphi 0, %s50
      %s65 = sphi 0, %s51
      %s69 = sphi 0, %s69
      %s71 = sphi 0, %s69
      %s72 = sphi 0, %s71
      %s86 = sphi 0, %s72
      %s90 = sphi 0, %s90
      %s92 = sphi 0, %s90
      %s93 = sphi 0, %s92
      %s107 = sphi 0, %s93
      %s113 = sphi 0, %s115
      %s116 = sphi 0, %s113
      %s117 = sphi 0, %s116
      %s133 = sphi 0, %s117
    $region4: #{tpu_custom_call.1} parent=1 // loop_header_branch
      %17 = sbr.rel (%p15) target = $region8
    $region5: #{tpu_custom_call.1} parent=1 // loop_body
      %s19 = ssub.s32 %s14, 1
      %s20 = ssub.s32 %s14, 2
      %s21 = sadd.s32 %s14, 1
      %s22 = ssub.s32 %s14, %s21
      %p23 = scmp.eq.s32.totalorder %s22, 0
      %s25 = sadd.s32 %s24, 1
      %s26 = scalar_select %p23, %s24, %s25
      %p29 = pneg %p23
      %p30 = scmp.eq.s32.totalorder %s14, 1
      %p31 = por %p29, %p30
      %p32 = scmp.ne.s32.totalorder %s24, %s27
      %p33 = scmp.eq.s32.totalorder %s14, 0
      %p34 = por %p32, %p33
      %p35 = scmp.ne.s32.totalorder %s24, %s27
      %p36 = scmp.eq.s32.totalorder %s19, 1
      %p37 = por %p35, %p36
      %p38 = scmp.ne.s32.totalorder %s27, %s28
      %p39 = scmp.eq.s32.totalorder %s19, 0
      %p40 = por %p38, %p39
      %p41 = scmp.ne.s32.totalorder %s27, %s28
      %p42 = scmp.eq.s32.totalorder %s20, 1
      %p43 = por %p41, %p42
      %p45 = scmp.ne.s32.totalorder %s28, %s44
      %p46 = scmp.eq.s32.totalorder %s20, 0
      %p47 = por %p45, %p46
      %s49 = sadd.s32 %s48, 1
      %p52 = scmp.eq.s32.totalorder %s14, 1
      %p53 = scmp.ne.s32.totalorder %s48, %s50
      %p54 = scmp.eq.s32.totalorder %s14, 0
      %p55 = por %p53, %p54
      %p56 = scmp.ne.s32.totalorder %s48, %s50
      %p57 = scmp.eq.s32.totalorder %s19, 1
      %p58 = por %p56, %p57
      %p59 = scmp.ne.s32.totalorder %s50, %s51
      %p60 = scmp.eq.s32.totalorder %s19, 0
      %p61 = por %p59, %p60
      %p62 = scmp.ne.s32.totalorder %s50, %s51
      %p63 = scmp.eq.s32.totalorder %s20, 1
      %p64 = por %p62, %p63
      %p66 = scmp.ne.s32.totalorder %s51, %s65
      %p67 = scmp.eq.s32.totalorder %s20, 0
      %p68 = por %p66, %p67
      %s70 = sadd.s32 %s69, 1
      %p73 = scmp.eq.s32.totalorder %s14, 1
      %p74 = scmp.ne.s32.totalorder %s69, %s71
      %p75 = scmp.eq.s32.totalorder %s14, 0
      %p76 = por %p74, %p75
      %p77 = scmp.ne.s32.totalorder %s69, %s71
      %p78 = scmp.eq.s32.totalorder %s19, 1
      %p79 = por %p77, %p78
      %p80 = scmp.ne.s32.totalorder %s71, %s72
      %p81 = scmp.eq.s32.totalorder %s19, 0
      %p82 = por %p80, %p81
      %p83 = scmp.ne.s32.totalorder %s71, %s72
      %p84 = scmp.eq.s32.totalorder %s20, 1
      %p85 = por %p83, %p84
      %p87 = scmp.ne.s32.totalorder %s72, %s86
      %p88 = scmp.eq.s32.totalorder %s20, 0
      %p89 = por %p87, %p88
      %s91 = sadd.s32 %s90, 1
      %p94 = scmp.eq.s32.totalorder %s14, 1
      %p95 = scmp.ne.s32.totalorder %s90, %s92
      %p96 = scmp.eq.s32.totalorder %s14, 0
      %p97 = por %p95, %p96
      %p98 = scmp.ne.s32.totalorder %s90, %s92
      %p99 = scmp.eq.s32.totalorder %s19, 1
      %p100 = por %p98, %p99
      %p101 = scmp.ne.s32.totalorder %s92, %s93
      %p102 = scmp.eq.s32.totalorder %s19, 0
      %p103 = por %p101, %p102
      %p104 = scmp.ne.s32.totalorder %s92, %s93
      %p105 = scmp.eq.s32.totalorder %s20, 1
      %p106 = por %p104, %p105
      %p108 = scmp.ne.s32.totalorder %s93, %s107
      %p109 = scmp.eq.s32.totalorder %s20, 0
      %p110 = por %p108, %p109
      %s111 = ssub.s32 %s14, %s21
      %p112 = scmp.eq.s32.totalorder %s111, 0
      %s114 = sadd.s32 %s113, 1
      %s115 = scalar_select %p112, %s113, %s114
      %p118 = pneg %p112
      %p119 = scmp.eq.s32.totalorder %s14, 1
      %p120 = por %p118, %p119
      %p121 = scmp.ne.s32.totalorder %s113, %s116
      %p122 = scmp.eq.s32.totalorder %s14, 0
      %p123 = por %p121, %p122
      %p124 = scmp.ne.s32.totalorder %s113, %s116
      %p125 = scmp.eq.s32.totalorder %s19, 1
      %p126 = por %p124, %p125
      %p127 = scmp.ne.s32.totalorder %s116, %s117
      %p128 = scmp.eq.s32.totalorder %s19, 0
      %p129 = por %p127, %p128
      %p130 = scmp.ne.s32.totalorder %s116, %s117
      %p131 = scmp.eq.s32.totalorder %s20, 1
      %p132 = por %p130, %p131
      %p134 = scmp.ne.s32.totalorder %s117, %s133
      %p135 = scmp.eq.s32.totalorder %s20, 0
      %p136 = por %p134, %p135
      %p137 = scmp.le.s32.totalorder 1, %s14
      %p138 = scmp.lt.s32.totalorder %s14, 3
      %p139 = pnand %p137, %p138
      %p140 = pneg %p139
      // Predicated region
      $region9: #{tpu_custom_call.1} parent=5 // pred_check
        _
      $region10: #{tpu_custom_call.1} parent=5 // pred_check_branch
        %142 = sbr.rel (%p139) target = $region12
      $region11: #{tpu_custom_call.1} parent=5 // pred_region
        %s143 = ssub.s32 %s14, 1
        // Predicated region
        $region13: #{tpu_custom_call.1} parent=11 // pred_check
          %p144 = pneg %p61
        $region14: #{tpu_custom_call.1} parent=11 // pred_check_branch
          %146 = sbr.rel (%p144) target = $region16
        $region15: #{tpu_custom_call.1} parent=11 // pred_region
          %s148 = ssub.s32 3072, 3072
          %149 = vsyncadd [#allocation3], %s148
          %s150 = sshll.u32 [#allocation2], 4
          %s151 = int_to_ptr.vmem [resolvable:$true] %s150
          %156 = dma.hbm_to_vmem [thread:$0]  %s1, 3072, %s151, [#allocation3], 128, 128, 8
        $region16: #{tpu_custom_call.1} parent=11 // pred_fallthru
          _
        // Predicated region
        $region17: #{tpu_custom_call.1} parent=11 // pred_check
          %p157 = pneg %p82
        $region18: #{tpu_custom_call.1} parent=11 // pred_check_branch
          %159 = sbr.rel (%p157) target = $region20
        $region19: #{tpu_custom_call.1} parent=11 // pred_region
          _
        $region20: #{tpu_custom_call.1} parent=11 // pred_fallthru
          _
        // Predicated region
        $region21: #{tpu_custom_call.1} parent=11 // pred_check
          %p160 = pneg %p103
        $region22: #{tpu_custom_call.1} parent=11 // pred_check_branch
          %162 = sbr.rel (%p160) target = $region24
        $region23: #{tpu_custom_call.1} parent=11 // pred_region
          _
        $region24: #{tpu_custom_call.1} parent=11 // pred_fallthru
          _
      $region12: #{tpu_custom_call.1} parent=5 // pred_fallthru
        _
      %p163 = scmp.lt.s32.totalorder %s14, 2
      // Predicated region
      $region25: #{tpu_custom_call.1} parent=5 // pred_check
        %p164 = pneg %p163
      $region26: #{tpu_custom_call.1} parent=5 // pred_check_branch
        %166 = sbr.rel (%p164) target = $region28
      $region27: #{tpu_custom_call.1} parent=5 // pred_region
        // Predicated region
        $region29: #{tpu_custom_call.1} parent=27 // pred_check
          %p167 = pneg %p34
        $region30: #{tpu_custom_call.1} parent=27 // pred_check_branch
          %169 = sbr.rel (%p167) target = $region32
        $region31: #{tpu_custom_call.1} parent=27 // pred_region
          %s170 = smul.u32 2, %s14
          %p171 = scmp.lt.s32.totalorder %s170, 3
          %s172 = scalar_select %p171, %s170, 3
          %s173 = smul.addr %s172, 4
          %s174 = scalar_lea.vmem %s0, %s173
          %s175 = smul.u32 2, %s14
        $region32: #{tpu_custom_call.1} parent=27 // pred_fallthru
          _
      $region28: #{tpu_custom_call.1} parent=5 // pred_fallthru
        _
      %p176 = scmp.le.s32.totalorder 1, %s14
      %p177 = scmp.lt.s32.totalorder %s14, 3
      %p178 = pnand %p176, %p177
      %p179 = pneg %p178
      // Predicated region
      $region33: #{tpu_custom_call.1} parent=5 // pred_check
        _
      $region34: #{tpu_custom_call.1} parent=5 // pred_check_branch
        %181 = sbr.rel (%p178) target = $region36
      $region35: #{tpu_custom_call.1} parent=5 // pred_region
        %s182 = ssub.s32 %s14, 1
        // Predicated region
        $region37: #{tpu_custom_call.1} parent=35 // pred_check
          %p183 = pneg %p61
        $region38: #{tpu_custom_call.1} parent=35 // pred_check_branch
          %185 = sbr.rel (%p183) target = $region40
        $region39: #{tpu_custom_call.1} parent=35 // pred_region
          %186 = dma.done [#allocation3], 3072
        $region40: #{tpu_custom_call.1} parent=35 // pred_fallthru
          _
        %s187 = smul.u32 2, %s19
        %p188 = scmp.lt.s32.totalorder %s187, 3
        %s189 = scalar_select %p188, %s187, 3
        %s190 = smul.addr %s189, 4
        %s191 = scalar_lea.vmem %s0, %s190
        %p192 = pneg %p40
        %p193 = pneg %p37
        %p194 = pneg %p61
        %p195 = pneg %p58
        %p196 = pneg %p82
        %p197 = pneg %p79
        %p198 = pneg %p103
        %p199 = pneg %p100
        %p200 = pneg %p129
        %p201 = pneg %p126
        %s202 = sand.u32 %s116, 1
        %s203 = scalar_lea.sflag [#allocation4], %s202
        %s204 = sand.u32 %s116, 1
        %s205 = smul.addr %s204, 8
        %s206 = scalar_lea.vmem [#allocation5], %s205
        %s207 = smul.u32 2, %s19
        %p208 = scmp.lt.s32.totalorder %s207, 3
        %s209 = scalar_select %p208, %s207, 3
        %s210 = smul.addr %s209, 4
        %s211 = scalar_lea.vmem %s0, %s210
        %s212 = smul.u32 2, %s19
        %s213 = smul.u32 2, %s19
        %v214 = vld [vmem:[%s2] sm:$0xff]
        %v215 = vld [vmem:[%s2 + $0x8] sm:$0xff]
        %v216 = vld [vmem:[%s2 + $0x10] sm:$0xff]
        %v217 = vld [vmem:[%s2 + $0x18] sm:$0xff]
        %v218 = vld [vmem:[%s2 + $0x20] sm:$0xff]
        %v219 = vld [vmem:[%s2 + $0x28] sm:$0xff]
        %v220 = vld [vmem:[%s2 + $0x30] sm:$0xff]
        %v221 = vld [vmem:[%s2 + $0x38] sm:$0xff]
        %v222 = vld [vmem:[%s211] sm:$0x77]
        %v223 = vld [vmem:[#allocation2] sm:$0xff]
        %v224 = vld [vmem:[#allocation2 + $0x8] sm:$0xff]
        %v225 = vld [vmem:[#allocation2 + $0x10] sm:$0xff]
        %v226 = vld [vmem:[#allocation2 + $0x18] sm:$0xff]
        %v227 = vld [vmem:[#allocation2 + $0x20] sm:$0xff]
        %v228 = vld [vmem:[#allocation2 + $0x28] sm:$0xff]
        %v229 = vld [vmem:[#allocation2 + $0x30] sm:$0xff]
        %v230 = vld [vmem:[#allocation2 + $0x38] sm:$0xff]
        %232 = vset.pattern.permute.xlu0 0
        %233 = vperm.xlu0 %232, %v214
        %v234 = vpop.permute.xlu0 %233
        %237 = vset.pattern.permute.xlu0 0
        %238 = vperm.xlu0 %237, %v215
        %v239 = vpop.permute.xlu0 %238
        %242 = vset.pattern.permute.xlu0 0
        %243 = vperm.xlu0 %242, %v216
        %v244 = vpop.permute.xlu0 %243
        %247 = vset.pattern.permute.xlu0 0
        %248 = vperm.xlu0 %247, %v217
        %v249 = vpop.permute.xlu0 %248
        %252 = vset.pattern.permute.xlu0 0
        %253 = vperm.xlu0 %252, %v218
        %v254 = vpop.permute.xlu0 %253
        %257 = vset.pattern.permute.xlu0 0
        %258 = vperm.xlu0 %257, %v219
        %v259 = vpop.permute.xlu0 %258
        %262 = vset.pattern.permute.xlu0 0
        %263 = vperm.xlu0 %262, %v220
        %v264 = vpop.permute.xlu0 %263
        %267 = vset.pattern.permute.xlu0 0
        %268 = vperm.xlu0 %267, %v221
        %v269 = vpop.permute.xlu0 %268
        %v272 = vcombine.high %v222, %v222
        %vm273 = vcmask 23552
        %v275 = vsel %vm273, %v223, 0
        %v278 = vsel %vm273, %v224, 0
        %v281 = vsel %vm273, %v225, 0
        %v284 = vsel %vm273, %v226, 0
        %v287 = vsel %vm273, %v227, 0
        %v290 = vsel %vm273, %v228, 0
        %v293 = vsel %vm273, %v229, 0
        %v296 = vsel %vm273, %v230, 0
        %vm298 = vcmask 1042432
        %v299 = vsel %vm298, %v222, 0
        %v301 = vsel %vm298, %v272, 0
        %303 = vmatprep.subr.mxu0 0.0
        %304 = vmatpush1.msra.mxu0 0.0
        %305 = vmatprep.subr.mxu0 0.0
        %306 = vmatpush1.msra.mxu0 0.0
        %307 = vmatprep.subr.mxu0 0.0
        %308 = vmatpush1.msra.mxu0 0.0
        %309 = vmatprep.subr.mxu0 0.0
        %310 = vmatpush1.msra.mxu0 0.0
        %311 = vmatprep.subr.mxu0 0.0
        %312 = vmatpush1.msra.mxu0 0.0
        %313 = vmatprep.subr.mxu0 0.0
        %314 = vmatpush1.msra.mxu0 0.0
        %315 = vmatprep.subr.mxu0 0.0
        %316 = vmatpush1.msra.mxu0 0.0
        %317 = vmatprep.subr.mxu0 0.0
        %318 = vmatpush1.msra.mxu0 0.0
        %319 = vmatprep.subr.mxu0 0.0
        %320 = vmatpush1.msra.mxu0 0.0
        %321 = vmatprep.subr.mxu0 0.0
        %322 = vmatpush1.msra.mxu0 0.0
        %323 = vmatprep.subr.mxu0 0.0
        %324 = vmatpush1.msra.mxu0 0.0
        %325 = vmatprep.subr.mxu0 0.0
        %326 = vmatpush1.msra.mxu0 0.0
        %327 = vmatprep.subr.mxu0 0.0
        %328 = vmatpush1.msra.mxu0 0.0
        %329 = vmatprep.subr.mxu0 0.0
        %330 = vmatpush1.msra.mxu0 0.0
        %331 = vmatprep.subr.mxu0 0.0
        %332 = vmatpush1.msra.mxu0 0.0
        %333 = vmatprep.subr.mxu0 %v301
        %334 = vmatpush1.msra.mxu0 %v299
        %335 = vmatprep.subr.mxu0 0.0
        %336 = vmatpush2.msra.mxu0 0.0
        %337 = vmatprep.subr.mxu0 0.0
        %338 = vmatpush2.msra.mxu0 0.0
        %339 = vmatprep.subr.mxu0 0.0
        %340 = vmatpush2.msra.mxu0 0.0
        %341 = vmatprep.subr.mxu0 0.0
        %342 = vmatpush2.msra.mxu0 0.0
        %343 = vmatprep.subr.mxu0 0.0
        %344 = vmatpush2.msra.mxu0 0.0
        %345 = vmatprep.subr.mxu0 0.0
        %346 = vmatpush2.msra.mxu0 0.0
        %347 = vmatprep.subr.mxu0 0.0
        %348 = vmatpush2.msra.mxu0 0.0
        %349 = vmatprep.subr.mxu0 0.0
        %350 = vmatpush2.msra.mxu0 0.0
        %351 = vmatprep.subr.mxu0 0.0
        %352 = vmatpush2.msra.mxu0 0.0
        %353 = vmatprep.subr.mxu0 0.0
        %354 = vmatpush2.msra.mxu0 0.0
        %355 = vmatprep.subr.mxu0 0.0
        %356 = vmatpush2.msra.mxu0 0.0
        %357 = vmatprep.subr.mxu0 0.0
        %358 = vmatpush2.msra.mxu0 0.0
        %359 = vmatprep.subr.mxu0 0.0
        %360 = vmatpush2.msra.mxu0 0.0
        %361 = vmatprep.subr.mxu0 0.0
        %362 = vmatpush2.msra.mxu0 0.0
        %363 = vmatprep.subr.mxu0 0.0
        %364 = vmatpush2.msra.mxu0 0.0
        %365 = vmatprep.subr.mxu0 0.0
        %366 = vmatpush2.msra.mxu0 0.0
        %367 = vmatprep.mubr.f32.mxu0 0.0
        %368 = vmatmul.mubr.f32.gmra.mxu0 %v275
        %v369 = vpop.f32.mrf.mxu0
        %v370 = vadd.f32 %v234, %v369
        %v371 = vpop.f32.mrf.mxu0
        %v372 = vadd.f32 %v234, %v371
        %373 = vmatprep.mubr.f32.mxu0 0.0
        %374 = vmatmul.mubr.f32.gmra.mxu0 %v278
        %v375 = vpop.f32.mrf.mxu0
        %v376 = vadd.f32 %v239, %v375
        %v377 = vpop.f32.mrf.mxu0
        %v378 = vadd.f32 %v239, %v377
        %379 = vmatprep.mubr.f32.mxu0 0.0
        %380 = vmatmul.mubr.f32.gmra.mxu0 %v281
        %v381 = vpop.f32.mrf.mxu0
        %v382 = vadd.f32 %v244, %v381
        %v383 = vpop.f32.mrf.mxu0
        %v384 = vadd.f32 %v244, %v383
        %385 = vmatprep.mubr.f32.mxu0 0.0
        %386 = vmatmul.mubr.f32.gmra.mxu0 %v284
        %v387 = vpop.f32.mrf.mxu0
        %v388 = vadd.f32 %v249, %v387
        %v389 = vpop.f32.mrf.mxu0
        %v390 = vadd.f32 %v249, %v389
        %391 = vmatprep.mubr.f32.mxu0 0.0
        %392 = vmatmul.mubr.f32.gmra.mxu0 %v287
        %v393 = vpop.f32.mrf.mxu0
        %v394 = vadd.f32 %v254, %v393
        %v395 = vpop.f32.mrf.mxu0
        %v396 = vadd.f32 %v254, %v395
        %397 = vmatprep.mubr.f32.mxu0 0.0
        %398 = vmatmul.mubr.f32.gmra.mxu0 %v290
        %v399 = vpop.f32.mrf.mxu0
        %v400 = vadd.f32 %v259, %v399
        %v401 = vpop.f32.mrf.mxu0
        %v402 = vadd.f32 %v259, %v401
        %403 = vmatprep.mubr.f32.mxu0 0.0
        %404 = vmatmul.mubr.f32.gmra.mxu0 %v293
        %v405 = vpop.f32.mrf.mxu0
        %v406 = vadd.f32 %v264, %v405
        %v407 = vpop.f32.mrf.mxu0
        %v408 = vadd.f32 %v264, %v407
        %409 = vmatprep.mubr.f32.mxu0 0.0
        %410 = vmatmul.mubr.f32.gmra.mxu0 %v296
        %v411 = vpop.f32.mrf.mxu0
        %v412 = vadd.f32 %v269, %v411
        %v413 = vpop.f32.mrf.mxu0
        %v414 = vadd.f32 %v269, %v413
        %415 = vdwg.mxu0
        %v416 = vand.u32 2147483647, %v370
        %vm417 = vcmp.le.f32.partialorder %v416, 0.7853982
        %vm418 = vcmp.lt.s32.totalorder %v370, 0
        %v419 = vand.u32 %v370, 2139095040
        %v420 = vshrl.u32 %v419, 23
        %v421 = vsub.s32 %v420, 127
        %v422 = vand.u32 2147483647, %v370
        %v423 = vand.u32 %v422, 8388607
        %v424 = vor.u32 %v423, 8388608
        %v425 = vsub.s32 0, %v424
        %v426 = vadd.s32 %v421, 1
        %vm427 = vcmp.gt.s32.totalorder %v426, 0
        %v428 = vsel %vm427, %v426, 0
        %v429 = vshrl.u32 %v428, 5
        %v430 = vand.u32 %v428, 31
        %v431 = vsub.s32 32, %v430
        %v432 = vshrl.u32 683565275, %v431
        %v433 = vshll.u32 683565275, %v430
        %v434 = vshrl.u32 2475754826, %v431
        %v435 = vor.u32 %v433, %v434
        %v436 = vshll.u32 2475754826, %v430
        %v437 = vshrl.u32 2131351028, %v431
        %v438 = vor.u32 %v436, %v437
        %v439 = vshll.u32 2131351028, %v430
        %v440 = vshrl.u32 2102212464, %v431
        %v441 = vor.u32 %v439, %v440
        %v442 = vshll.u32 2102212464, %v430
        %v443 = vshrl.u32 920167782, %v431
        %v444 = vor.u32 %v442, %v443
        %v445 = vshll.u32 920167782, %v430
        %v446 = vshrl.u32 1326507024, %v431
        %v447 = vor.u32 %v445, %v446
        %vm448 = vcmp.lt.s32.totalorder %v429, 1
        %vm449 = vcmp.lt.s32.totalorder %v429, 2
        %vm450 = vcmp.lt.s32.totalorder %v429, 3
        %vm451 = vcmp.lt.s32.totalorder %v429, 4
        %v452 = vsel %vm448, %v432, %v435
        %v453 = vsel %vm451, %v441, 2102212464
        %v454 = vsel %vm450, %v438, %v453
        %v455 = vsel %vm449, %v452, %v454
        %v456 = vsel %vm448, %v435, %v438
        %v457 = vsel %vm451, %v444, 920167782
        %v458 = vsel %vm450, %v441, %v457
        %v459 = vsel %vm449, %v456, %v458
        %v460 = vsel %vm448, %v438, %v441
        %v461 = vsel %vm451, %v447, 1326507024
        %v462 = vsel %vm450, %v444, %v461
        %v463 = vsel %vm449, %v460, %v462
        %v464 = vshll.u32 %v424, 8
        %v465 = vmul.u32.u64.compose %v464, %v463
        %v466 = vextract.low.u32 %v465
        %v467 = vextract.high.u32 %v465
        %v468 = vmul.u32.u64.compose %v464, %v459
        %v469 = vextract.low.u32 %v468
        %v470 = vextract.high.u32 %v468
        %v471 = vmul.u32 %v464, %v455
        %v472 = vadd.s32 %v467, %v469
        %vm473 = vc.u32 %v467, %v469
        %v474 = vadd.s32 %v470, 1
        %v475 = vsel %vm473, %v474, %v470
        %v476 = vadd.s32 %v471, %v475
        %v477 = vadd.s32 %v476, 536870912
        %v478 = vshrl.u32 %v477, 30
        %v479 = vshll.u32 %v478, 30
        %v480 = vsub.s32 %v476, %v479
        %vm481 = vcmp.lt.s32.totalorder %v480, 0
        %v482 = vsub.s32 0, %v480
        %v483 = vsel %vm481, %v482, %v480
        %v484 = vclz %v483
        %v485 = vsub.s32 %v484, 2
        %vm486 = vcmp.gt.s32.totalorder 0, %v485
        %v487 = vsel %vm486, 0, %v485
        %v488 = vsub.s32 32, %v487
        %v489 = vshll.u32 %v480, %v487
        %v490 = vshrl.u32 %v472, %v488
        %v491 = vor.u32 %v489, %v490
        %v492 = vsub.s32 4294967266, %v487
        %v493 = vadd.s32 %v492, 127
        %v494 = vshll.u32 %v493, 23
        %v495 = vor.u32 4788187, %v494
        %v496 = vand.u32 2147483647, %v495
        %v498 = vcvt.s32.f32 %v491
        %v499 = vmul.f32 %v498, %v496
        %v500 = vxor.u32 %v499, 2147483648
        %v501 = vsel %vm418, %v500, %v499
        %v502 = vsub.s32 4, %v478
        %v503 = vsel %vm418, %v502, %v478
        %v504 = vsel %vm417, %v370, %v501
        %v505 = vsel %vm417, 0, %v503
        %v506 = vcosq.f32.pop %v504
        %v507 = vsinq.f32.pop %v504
        %vm508 = vweird.f32 %v370
        %v509 = vadd.s32 %v505, 3
        %v510 = vand.u32 %v509, 3
        %vm511 = vcmp.lt.s32.totalorder %v510, 2
        %vm512 = vcmp.eq.s32.totalorder %v510, 0
        %v513 = vxor.u32 %v507, 2147483648
        %v514 = vsel %vm512, %v506, %v513
        %vm515 = vcmp.eq.s32.totalorder %v510, 2
        %v516 = vxor.u32 %v506, 2147483648
        %v517 = vsel %vm515, %v516, %v507
        %v518 = vsel %vm511, %v514, %v517
        %v519 = vsel %vm508, nan, %v518
        %v520 = vand.u32 2147483647, %v372
        %vm521 = vcmp.le.f32.partialorder %v520, 0.7853982
        %vm522 = vcmp.lt.s32.totalorder %v372, 0
        %v523 = vand.u32 %v372, 2139095040
        %v524 = vshrl.u32 %v523, 23
        %v525 = vsub.s32 %v524, 127
        %v526 = vand.u32 2147483647, %v372
        %v527 = vand.u32 %v526, 8388607
        %v528 = vor.u32 %v527, 8388608
        %v529 = vsub.s32 0, %v528
        %v530 = vadd.s32 %v525, 1
        %vm531 = vcmp.gt.s32.totalorder %v530, 0
        %v532 = vsel %vm531, %v530, 0
        %v533 = vshrl.u32 %v532, 5
        %v534 = vand.u32 %v532, 31
        %v535 = vsub.s32 32, %v534
        %v536 = vshrl.u32 683565275, %v535
        %v537 = vshll.u32 683565275, %v534
        %v538 = vshrl.u32 2475754826, %v535
        %v539 = vor.u32 %v537, %v538
        %v540 = vshll.u32 2475754826, %v534
        %v541 = vshrl.u32 2131351028, %v535
        %v542 = vor.u32 %v540, %v541
        %v543 = vshll.u32 2131351028, %v534
        %v544 = vshrl.u32 2102212464, %v535
        %v545 = vor.u32 %v543, %v544
        %v546 = vshll.u32 2102212464, %v534
        %v547 = vshrl.u32 920167782, %v535
        %v548 = vor.u32 %v546, %v547
        %v549 = vshll.u32 920167782, %v534
        %v550 = vshrl.u32 1326507024, %v535
        %v551 = vor.u32 %v549, %v550
        %vm552 = vcmp.lt.s32.totalorder %v533, 1
        %vm553 = vcmp.lt.s32.totalorder %v533, 2
        %vm554 = vcmp.lt.s32.totalorder %v533, 3
        %vm555 = vcmp.lt.s32.totalorder %v533, 4
        %v556 = vsel %vm552, %v536, %v539
        %v557 = vsel %vm555, %v545, 2102212464
        %v558 = vsel %vm554, %v542, %v557
        %v559 = vsel %vm553, %v556, %v558
        %v560 = vsel %vm552, %v539, %v542
        %v561 = vsel %vm555, %v548, 920167782
        %v562 = vsel %vm554, %v545, %v561
        %v563 = vsel %vm553, %v560, %v562
        %v564 = vsel %vm552, %v542, %v545
        %v565 = vsel %vm555, %v551, 1326507024
        %v566 = vsel %vm554, %v548, %v565
        %v567 = vsel %vm553, %v564, %v566
        %v568 = vshll.u32 %v528, 8
        %v569 = vmul.u32.u64.compose %v568, %v567
        %v570 = vextract.low.u32 %v569
        %v571 = vextract.high.u32 %v569
        %v572 = vmul.u32.u64.compose %v568, %v563
        %v573 = vextract.low.u32 %v572
        %v574 = vextract.high.u32 %v572
        %v575 = vmul.u32 %v568, %v559
        %v576 = vadd.s32 %v571, %v573
        %vm577 = vc.u32 %v571, %v573
        %v578 = vadd.s32 %v574, 1
        %v579 = vsel %vm577, %v578, %v574
        %v580 = vadd.s32 %v575, %v579
        %v581 = vadd.s32 %v580, 536870912
        %v582 = vshrl.u32 %v581, 30
        %v583 = vshll.u32 %v582, 30
        %v584 = vsub.s32 %v580, %v583
        %vm585 = vcmp.lt.s32.totalorder %v584, 0
        %v586 = vsub.s32 0, %v584
        %v587 = vsel %vm585, %v586, %v584
        %v588 = vclz %v587
        %v589 = vsub.s32 %v588, 2
        %vm590 = vcmp.gt.s32.totalorder 0, %v589
        %v591 = vsel %vm590, 0, %v589
        %v592 = vsub.s32 32, %v591
        %v593 = vshll.u32 %v584, %v591
        %v594 = vshrl.u32 %v576, %v592
        %v595 = vor.u32 %v593, %v594
        %v596 = vsub.s32 4294967266, %v591
        %v597 = vadd.s32 %v596, 127
        %v598 = vshll.u32 %v597, 23
        %v599 = vor.u32 4788187, %v598
        %v600 = vand.u32 2147483647, %v599
        %v602 = vcvt.s32.f32 %v595
        %v603 = vmul.f32 %v602, %v600
        %v604 = vxor.u32 %v603, 2147483648
        %v605 = vsel %vm522, %v604, %v603
        %v606 = vsub.s32 4, %v582
        %v607 = vsel %vm522, %v606, %v582
        %v608 = vsel %vm521, %v372, %v605
        %v609 = vsel %vm521, 0, %v607
        %v610 = vcosq.f32.pop %v608
        %v611 = vsinq.f32.pop %v608
        %vm612 = vweird.f32 %v372
        %v613 = vadd.s32 %v609, 3
        %v614 = vand.u32 %v613, 3
        %vm615 = vcmp.lt.s32.totalorder %v614, 2
        %vm616 = vcmp.eq.s32.totalorder %v614, 0
        %v617 = vxor.u32 %v611, 2147483648
        %v618 = vsel %vm616, %v610, %v617
        %vm619 = vcmp.eq.s32.totalorder %v614, 2
        %v620 = vxor.u32 %v610, 2147483648
        %v621 = vsel %vm619, %v620, %v611
        %v622 = vsel %vm615, %v618, %v621
        %v623 = vsel %vm612, nan, %v622
        %v624 = vand.u32 2147483647, %v376
        %vm625 = vcmp.le.f32.partialorder %v624, 0.7853982
        %vm626 = vcmp.lt.s32.totalorder %v376, 0
        %v627 = vand.u32 %v376, 2139095040
        %v628 = vshrl.u32 %v627, 23
        %v629 = vsub.s32 %v628, 127
        %v630 = vand.u32 2147483647, %v376
        %v631 = vand.u32 %v630, 8388607
        %v632 = vor.u32 %v631, 8388608
        %v633 = vsub.s32 0, %v632
        %v634 = vadd.s32 %v629, 1
        %vm635 = vcmp.gt.s32.totalorder %v634, 0
        %v636 = vsel %vm635, %v634, 0
        %v637 = vshrl.u32 %v636, 5
        %v638 = vand.u32 %v636, 31
        %v639 = vsub.s32 32, %v638
        %v640 = vshrl.u32 683565275, %v639
        %v641 = vshll.u32 683565275, %v638
        %v642 = vshrl.u32 2475754826, %v639
        %v643 = vor.u32 %v641, %v642
        %v644 = vshll.u32 2475754826, %v638
        %v645 = vshrl.u32 2131351028, %v639
        %v646 = vor.u32 %v644, %v645
        %v647 = vshll.u32 2131351028, %v638
        %v648 = vshrl.u32 2102212464, %v639
        %v649 = vor.u32 %v647, %v648
        %v650 = vshll.u32 2102212464, %v638
        %v651 = vshrl.u32 920167782, %v639
        %v652 = vor.u32 %v650, %v651
        %v653 = vshll.u32 920167782, %v638
        %v654 = vshrl.u32 1326507024, %v639
        %v655 = vor.u32 %v653, %v654
        %vm656 = vcmp.lt.s32.totalorder %v637, 1
        %vm657 = vcmp.lt.s32.totalorder %v637, 2
        %vm658 = vcmp.lt.s32.totalorder %v637, 3
        %vm659 = vcmp.lt.s32.totalorder %v637, 4
        %v660 = vsel %vm656, %v640, %v643
        %v661 = vsel %vm659, %v649, 2102212464
        %v662 = vsel %vm658, %v646, %v661
        %v663 = vsel %vm657, %v660, %v662
        %v664 = vsel %vm656, %v643, %v646
        %v665 = vsel %vm659, %v652, 920167782
        %v666 = vsel %vm658, %v649, %v665
        %v667 = vsel %vm657, %v664, %v666
        %v668 = vsel %vm656, %v646, %v649
        %v669 = vsel %vm659, %v655, 1326507024
        %v670 = vsel %vm658, %v652, %v669
        %v671 = vsel %vm657, %v668, %v670
        %v672 = vshll.u32 %v632, 8
        %v673 = vmul.u32.u64.compose %v672, %v671
        %v674 = vextract.low.u32 %v673
        %v675 = vextract.high.u32 %v673
        %v676 = vmul.u32.u64.compose %v672, %v667
        %v677 = vextract.low.u32 %v676
        %v678 = vextract.high.u32 %v676
        %v679 = vmul.u32 %v672, %v663
        %v680 = vadd.s32 %v675, %v677
        %vm681 = vc.u32 %v675, %v677
        %v682 = vadd.s32 %v678, 1
        %v683 = vsel %vm681, %v682, %v678
        %v684 = vadd.s32 %v679, %v683
        %v685 = vadd.s32 %v684, 536870912
        %v686 = vshrl.u32 %v685, 30
        %v687 = vshll.u32 %v686, 30
        %v688 = vsub.s32 %v684, %v687
        %vm689 = vcmp.lt.s32.totalorder %v688, 0
        %v690 = vsub.s32 0, %v688
        %v691 = vsel %vm689, %v690, %v688
        %v692 = vclz %v691
        %v693 = vsub.s32 %v692, 2
        %vm694 = vcmp.gt.s32.totalorder 0, %v693
        %v695 = vsel %vm694, 0, %v693
        %v696 = vsub.s32 32, %v695
        %v697 = vshll.u32 %v688, %v695
        %v698 = vshrl.u32 %v680, %v696
        %v699 = vor.u32 %v697, %v698
        %v700 = vsub.s32 4294967266, %v695
        %v701 = vadd.s32 %v700, 127
        %v702 = vshll.u32 %v701, 23
        %v703 = vor.u32 4788187, %v702
        %v704 = vand.u32 2147483647, %v703
        %v706 = vcvt.s32.f32 %v699
        %v707 = vmul.f32 %v706, %v704
        %v708 = vxor.u32 %v707, 2147483648
        %v709 = vsel %vm626, %v708, %v707
        %v710 = vsub.s32 4, %v686
        %v711 = vsel %vm626, %v710, %v686
        %v712 = vsel %vm625, %v376, %v709
        %v713 = vsel %vm625, 0, %v711
        %v714 = vcosq.f32.pop %v712
        %v715 = vsinq.f32.pop %v712
        %vm716 = vweird.f32 %v376
        %v717 = vadd.s32 %v713, 3
        %v718 = vand.u32 %v717, 3
        %vm719 = vcmp.lt.s32.totalorder %v718, 2
        %vm720 = vcmp.eq.s32.totalorder %v718, 0
        %v721 = vxor.u32 %v715, 2147483648
        %v722 = vsel %vm720, %v714, %v721
        %vm723 = vcmp.eq.s32.totalorder %v718, 2
        %v724 = vxor.u32 %v714, 2147483648
        %v725 = vsel %vm723, %v724, %v715
        %v726 = vsel %vm719, %v722, %v725
        %v727 = vsel %vm716, nan, %v726
        %v728 = vand.u32 2147483647, %v378
        %vm729 = vcmp.le.f32.partialorder %v728, 0.7853982
        %vm730 = vcmp.lt.s32.totalorder %v378, 0
        %v731 = vand.u32 %v378, 2139095040
        %v732 = vshrl.u32 %v731, 23
        %v733 = vsub.s32 %v732, 127
        %v734 = vand.u32 2147483647, %v378
        %v735 = vand.u32 %v734, 8388607
        %v736 = vor.u32 %v735, 8388608
        %v737 = vsub.s32 0, %v736
        %v738 = vadd.s32 %v733, 1
        %vm739 = vcmp.gt.s32.totalorder %v738, 0
        %v740 = vsel %vm739, %v738, 0
        %v741 = vshrl.u32 %v740, 5
        %v742 = vand.u32 %v740, 31
        %v743 = vsub.s32 32, %v742
        %v744 = vshrl.u32 683565275, %v743
        %v745 = vshll.u32 683565275, %v742
        %v746 = vshrl.u32 2475754826, %v743
        %v747 = vor.u32 %v745, %v746
        %v748 = vshll.u32 2475754826, %v742
        %v749 = vshrl.u32 2131351028, %v743
        %v750 = vor.u32 %v748, %v749
        %v751 = vshll.u32 2131351028, %v742
        %v752 = vshrl.u32 2102212464, %v743
        %v753 = vor.u32 %v751, %v752
        %v754 = vshll.u32 2102212464, %v742
        %v755 = vshrl.u32 920167782, %v743
        %v756 = vor.u32 %v754, %v755
        %v757 = vshll.u32 920167782, %v742
        %v758 = vshrl.u32 1326507024, %v743
        %v759 = vor.u32 %v757, %v758
        %vm760 = vcmp.lt.s32.totalorder %v741, 1
        %vm761 = vcmp.lt.s32.totalorder %v741, 2
        %vm762 = vcmp.lt.s32.totalorder %v741, 3
        %vm763 = vcmp.lt.s32.totalorder %v741, 4
        %v764 = vsel %vm760, %v744, %v747
        %v765 = vsel %vm763, %v753, 2102212464
        %v766 = vsel %vm762, %v750, %v765
        %v767 = vsel %vm761, %v764, %v766
        %v768 = vsel %vm760, %v747, %v750
        %v769 = vsel %vm763, %v756, 920167782
        %v770 = vsel %vm762, %v753, %v769
        %v771 = vsel %vm761, %v768, %v770
        %v772 = vsel %vm760, %v750, %v753
        %v773 = vsel %vm763, %v759, 1326507024
        %v774 = vsel %vm762, %v756, %v773
        %v775 = vsel %vm761, %v772, %v774
        %v776 = vshll.u32 %v736, 8
        %v777 = vmul.u32.u64.compose %v776, %v775
        %v778 = vextract.low.u32 %v777
        %v779 = vextract.high.u32 %v777
        %v780 = vmul.u32.u64.compose %v776, %v771
        %v781 = vextract.low.u32 %v780
        %v782 = vextract.high.u32 %v780
        %v783 = vmul.u32 %v776, %v767
        %v784 = vadd.s32 %v779, %v781
        %vm785 = vc.u32 %v779, %v781
        %v786 = vadd.s32 %v782, 1
        %v787 = vsel %vm785, %v786, %v782
        %v788 = vadd.s32 %v783, %v787
        %v789 = vadd.s32 %v788, 536870912
        %v790 = vshrl.u32 %v789, 30
        %v791 = vshll.u32 %v790, 30
        %v792 = vsub.s32 %v788, %v791
        %vm793 = vcmp.lt.s32.totalorder %v792, 0
        %v794 = vsub.s32 0, %v792
        %v795 = vsel %vm793, %v794, %v792
        %v796 = vclz %v795
        %v797 = vsub.s32 %v796, 2
        %vm798 = vcmp.gt.s32.totalorder 0, %v797
        %v799 = vsel %vm798, 0, %v797
        %v800 = vsub.s32 32, %v799
        %v801 = vshll.u32 %v792, %v799
        %v802 = vshrl.u32 %v784, %v800
        %v803 = vor.u32 %v801, %v802
        %v804 = vsub.s32 4294967266, %v799
        %v805 = vadd.s32 %v804, 127
        %v806 = vshll.u32 %v805, 23
        %v807 = vor.u32 4788187, %v806
        %v808 = vand.u32 2147483647, %v807
        %v810 = vcvt.s32.f32 %v803
        %v811 = vmul.f32 %v810, %v808
        %v812 = vxor.u32 %v811, 2147483648
        %v813 = vsel %vm730, %v812, %v811
        %v814 = vsub.s32 4, %v790
        %v815 = vsel %vm730, %v814, %v790
        %v816 = vsel %vm729, %v378, %v813
        %v817 = vsel %vm729, 0, %v815
        %v818 = vcosq.f32.pop %v816
        %v819 = vsinq.f32.pop %v816
        %vm820 = vweird.f32 %v378
        %v821 = vadd.s32 %v817, 3
        %v822 = vand.u32 %v821, 3
        %vm823 = vcmp.lt.s32.totalorder %v822, 2
        %vm824 = vcmp.eq.s32.totalorder %v822, 0
        %v825 = vxor.u32 %v819, 2147483648
        %v826 = vsel %vm824, %v818, %v825
        %vm827 = vcmp.eq.s32.totalorder %v822, 2
        %v828 = vxor.u32 %v818, 2147483648
        %v829 = vsel %vm827, %v828, %v819
        %v830 = vsel %vm823, %v826, %v829
        %v831 = vsel %vm820, nan, %v830
        %v832 = vand.u32 2147483647, %v382
        %vm833 = vcmp.le.f32.partialorder %v832, 0.7853982
        %vm834 = vcmp.lt.s32.totalorder %v382, 0
        %v835 = vand.u32 %v382, 2139095040
        %v836 = vshrl.u32 %v835, 23
        %v837 = vsub.s32 %v836, 127
        %v838 = vand.u32 2147483647, %v382
        %v839 = vand.u32 %v838, 8388607
        %v840 = vor.u32 %v839, 8388608
        %v841 = vsub.s32 0, %v840
        %v842 = vadd.s32 %v837, 1
        %vm843 = vcmp.gt.s32.totalorder %v842, 0
        %v844 = vsel %vm843, %v842, 0
        %v845 = vshrl.u32 %v844, 5
        %v846 = vand.u32 %v844, 31
        %v847 = vsub.s32 32, %v846
        %v848 = vshrl.u32 683565275, %v847
        %v849 = vshll.u32 683565275, %v846
        %v850 = vshrl.u32 2475754826, %v847
        %v851 = vor.u32 %v849, %v850
        %v852 = vshll.u32 2475754826, %v846
        %v853 = vshrl.u32 2131351028, %v847
        %v854 = vor.u32 %v852, %v853
        %v855 = vshll.u32 2131351028, %v846
        %v856 = vshrl.u32 2102212464, %v847
        %v857 = vor.u32 %v855, %v856
        %v858 = vshll.u32 2102212464, %v846
        %v859 = vshrl.u32 920167782, %v847
        %v860 = vor.u32 %v858, %v859
        %v861 = vshll.u32 920167782, %v846
        %v862 = vshrl.u32 1326507024, %v847
        %v863 = vor.u32 %v861, %v862
        %vm864 = vcmp.lt.s32.totalorder %v845, 1
        %vm865 = vcmp.lt.s32.totalorder %v845, 2
        %vm866 = vcmp.lt.s32.totalorder %v845, 3
        %vm867 = vcmp.lt.s32.totalorder %v845, 4
        %v868 = vsel %vm864, %v848, %v851
        %v869 = vsel %vm867, %v857, 2102212464
        %v870 = vsel %vm866, %v854, %v869
        %v871 = vsel %vm865, %v868, %v870
        %v872 = vsel %vm864, %v851, %v854
        %v873 = vsel %vm867, %v860, 920167782
        %v874 = vsel %vm866, %v857, %v873
        %v875 = vsel %vm865, %v872, %v874
        %v876 = vsel %vm864, %v854, %v857
        %v877 = vsel %vm867, %v863, 1326507024
        %v878 = vsel %vm866, %v860, %v877
        %v879 = vsel %vm865, %v876, %v878
        %v880 = vshll.u32 %v840, 8
        %v881 = vmul.u32.u64.compose %v880, %v879
        %v882 = vextract.low.u32 %v881
        %v883 = vextract.high.u32 %v881
        %v884 = vmul.u32.u64.compose %v880, %v875
        %v885 = vextract.low.u32 %v884
        %v886 = vextract.high.u32 %v884
        %v887 = vmul.u32 %v880, %v871
        %v888 = vadd.s32 %v883, %v885
        %vm889 = vc.u32 %v883, %v885
        %v890 = vadd.s32 %v886, 1
        %v891 = vsel %vm889, %v890, %v886
        %v892 = vadd.s32 %v887, %v891
        %v893 = vadd.s32 %v892, 536870912
        %v894 = vshrl.u32 %v893, 30
        %v895 = vshll.u32 %v894, 30
        %v896 = vsub.s32 %v892, %v895
        %vm897 = vcmp.lt.s32.totalorder %v896, 0
        %v898 = vsub.s32 0, %v896
        %v899 = vsel %vm897, %v898, %v896
        %v900 = vclz %v899
        %v901 = vsub.s32 %v900, 2
        %vm902 = vcmp.gt.s32.totalorder 0, %v901
        %v903 = vsel %vm902, 0, %v901
        %v904 = vsub.s32 32, %v903
        %v905 = vshll.u32 %v896, %v903
        %v906 = vshrl.u32 %v888, %v904
        %v907 = vor.u32 %v905, %v906
        %v908 = vsub.s32 4294967266, %v903
        %v909 = vadd.s32 %v908, 127
        %v910 = vshll.u32 %v909, 23
        %v911 = vor.u32 4788187, %v910
        %v912 = vand.u32 2147483647, %v911
        %v914 = vcvt.s32.f32 %v907
        %v915 = vmul.f32 %v914, %v912
        %v916 = vxor.u32 %v915, 2147483648
        %v917 = vsel %vm834, %v916, %v915
        %v918 = vsub.s32 4, %v894
        %v919 = vsel %vm834, %v918, %v894
        %v920 = vsel %vm833, %v382, %v917
        %v921 = vsel %vm833, 0, %v919
        %v922 = vcosq.f32.pop %v920
        %v923 = vsinq.f32.pop %v920
        %vm924 = vweird.f32 %v382
        %v925 = vadd.s32 %v921, 3
        %v926 = vand.u32 %v925, 3
        %vm927 = vcmp.lt.s32.totalorder %v926, 2
        %vm928 = vcmp.eq.s32.totalorder %v926, 0
        %v929 = vxor.u32 %v923, 2147483648
        %v930 = vsel %vm928, %v922, %v929
        %vm931 = vcmp.eq.s32.totalorder %v926, 2
        %v932 = vxor.u32 %v922, 2147483648
        %v933 = vsel %vm931, %v932, %v923
        %v934 = vsel %vm927, %v930, %v933
        %v935 = vsel %vm924, nan, %v934
        %v936 = vand.u32 2147483647, %v384
        %vm937 = vcmp.le.f32.partialorder %v936, 0.7853982
        %vm938 = vcmp.lt.s32.totalorder %v384, 0
        %v939 = vand.u32 %v384, 2139095040
        %v940 = vshrl.u32 %v939, 23
        %v941 = vsub.s32 %v940, 127
        %v942 = vand.u32 2147483647, %v384
        %v943 = vand.u32 %v942, 8388607
        %v944 = vor.u32 %v943, 8388608
        %v945 = vsub.s32 0, %v944
        %v946 = vadd.s32 %v941, 1
        %vm947 = vcmp.gt.s32.totalorder %v946, 0
        %v948 = vsel %vm947, %v946, 0
        %v949 = vshrl.u32 %v948, 5
        %v950 = vand.u32 %v948, 31
        %v951 = vsub.s32 32, %v950
        %v952 = vshrl.u32 683565275, %v951
        %v953 = vshll.u32 683565275, %v950
        %v954 = vshrl.u32 2475754826, %v951
        %v955 = vor.u32 %v953, %v954
        %v956 = vshll.u32 2475754826, %v950
        %v957 = vshrl.u32 2131351028, %v951
        %v958 = vor.u32 %v956, %v957
        %v959 = vshll.u32 2131351028, %v950
        %v960 = vshrl.u32 2102212464, %v951
        %v961 = vor.u32 %v959, %v960
        %v962 = vshll.u32 2102212464, %v950
        %v963 = vshrl.u32 920167782, %v951
        %v964 = vor.u32 %v962, %v963
        %v965 = vshll.u32 920167782, %v950
        %v966 = vshrl.u32 1326507024, %v951
        %v967 = vor.u32 %v965, %v966
        %vm968 = vcmp.lt.s32.totalorder %v949, 1
        %vm969 = vcmp.lt.s32.totalorder %v949, 2
        %vm970 = vcmp.lt.s32.totalorder %v949, 3
        %vm971 = vcmp.lt.s32.totalorder %v949, 4
        %v972 = vsel %vm968, %v952, %v955
        %v973 = vsel %vm971, %v961, 2102212464
        %v974 = vsel %vm970, %v958, %v973
        %v975 = vsel %vm969, %v972, %v974
        %v976 = vsel %vm968, %v955, %v958
        %v977 = vsel %vm971, %v964, 920167782
        %v978 = vsel %vm970, %v961, %v977
        %v979 = vsel %vm969, %v976, %v978
        %v980 = vsel %vm968, %v958, %v961
        %v981 = vsel %vm971, %v967, 1326507024
        %v982 = vsel %vm970, %v964, %v981
        %v983 = vsel %vm969, %v980, %v982
        %v984 = vshll.u32 %v944, 8
        %v985 = vmul.u32.u64.compose %v984, %v983
        %v986 = vextract.low.u32 %v985
        %v987 = vextract.high.u32 %v985
        %v988 = vmul.u32.u64.compose %v984, %v979
        %v989 = vextract.low.u32 %v988
        %v990 = vextract.high.u32 %v988
        %v991 = vmul.u32 %v984, %v975
        %v992 = vadd.s32 %v987, %v989
        %vm993 = vc.u32 %v987, %v989
        %v994 = vadd.s32 %v990, 1
        %v995 = vsel %vm993, %v994, %v990
        %v996 = vadd.s32 %v991, %v995
        %v997 = vadd.s32 %v996, 536870912
        %v998 = vshrl.u32 %v997, 30
        %v999 = vshll.u32 %v998, 30
        %v1000 = vsub.s32 %v996, %v999
        %vm1001 = vcmp.lt.s32.totalorder %v1000, 0
        %v1002 = vsub.s32 0, %v1000
        %v1003 = vsel %vm1001, %v1002, %v1000
        %v1004 = vclz %v1003
        %v1005 = vsub.s32 %v1004, 2
        %vm1006 = vcmp.gt.s32.totalorder 0, %v1005
        %v1007 = vsel %vm1006, 0, %v1005
        %v1008 = vsub.s32 32, %v1007
        %v1009 = vshll.u32 %v1000, %v1007
        %v1010 = vshrl.u32 %v992, %v1008
        %v1011 = vor.u32 %v1009, %v1010
        %v1012 = vsub.s32 4294967266, %v1007
        %v1013 = vadd.s32 %v1012, 127
        %v1014 = vshll.u32 %v1013, 23
        %v1015 = vor.u32 4788187, %v1014
        %v1016 = vand.u32 2147483647, %v1015
        %v1018 = vcvt.s32.f32 %v1011
        %v1019 = vmul.f32 %v1018, %v1016
        %v1020 = vxor.u32 %v1019, 2147483648
        %v1021 = vsel %vm938, %v1020, %v1019
        %v1022 = vsub.s32 4, %v998
        %v1023 = vsel %vm938, %v1022, %v998
        %v1024 = vsel %vm937, %v384, %v1021
        %v1025 = vsel %vm937, 0, %v1023
        %v1026 = vcosq.f32.pop %v1024
        %v1027 = vsinq.f32.pop %v1024
        %vm1028 = vweird.f32 %v384
        %v1029 = vadd.s32 %v1025, 3
        %v1030 = vand.u32 %v1029, 3
        %vm1031 = vcmp.lt.s32.totalorder %v1030, 2
        %vm1032 = vcmp.eq.s32.totalorder %v1030, 0
        %v1033 = vxor.u32 %v1027, 2147483648
        %v1034 = vsel %vm1032, %v1026, %v1033
        %vm1035 = vcmp.eq.s32.totalorder %v1030, 2
        %v1036 = vxor.u32 %v1026, 2147483648
        %v1037 = vsel %vm1035, %v1036, %v1027
        %v1038 = vsel %vm1031, %v1034, %v1037
        %v1039 = vsel %vm1028, nan, %v1038
        %v1040 = vand.u32 2147483647, %v388
        %vm1041 = vcmp.le.f32.partialorder %v1040, 0.7853982
        %vm1042 = vcmp.lt.s32.totalorder %v388, 0
        %v1043 = vand.u32 %v388, 2139095040
        %v1044 = vshrl.u32 %v1043, 23
        %v1045 = vsub.s32 %v1044, 127
        %v1046 = vand.u32 2147483647, %v388
        %v1047 = vand.u32 %v1046, 8388607
        %v1048 = vor.u32 %v1047, 8388608
        %v1049 = vsub.s32 0, %v1048
        %v1050 = vadd.s32 %v1045, 1
        %vm1051 = vcmp.gt.s32.totalorder %v1050, 0
        %v1052 = vsel %vm1051, %v1050, 0
        %v1053 = vshrl.u32 %v1052, 5
        %v1054 = vand.u32 %v1052, 31
        %v1055 = vsub.s32 32, %v1054
        %v1056 = vshrl.u32 683565275, %v1055
        %v1057 = vshll.u32 683565275, %v1054
        %v1058 = vshrl.u32 2475754826, %v1055
        %v1059 = vor.u32 %v1057, %v1058
        %v1060 = vshll.u32 2475754826, %v1054
        %v1061 = vshrl.u32 2131351028, %v1055
        %v1062 = vor.u32 %v1060, %v1061
        %v1063 = vshll.u32 2131351028, %v1054
        %v1064 = vshrl.u32 2102212464, %v1055
        %v1065 = vor.u32 %v1063, %v1064
        %v1066 = vshll.u32 2102212464, %v1054
        %v1067 = vshrl.u32 920167782, %v1055
        %v1068 = vor.u32 %v1066, %v1067
        %v1069 = vshll.u32 920167782, %v1054
        %v1070 = vshrl.u32 1326507024, %v1055
        %v1071 = vor.u32 %v1069, %v1070
        %vm1072 = vcmp.lt.s32.totalorder %v1053, 1
        %vm1073 = vcmp.lt.s32.totalorder %v1053, 2
        %vm1074 = vcmp.lt.s32.totalorder %v1053, 3
        %vm1075 = vcmp.lt.s32.totalorder %v1053, 4
        %v1076 = vsel %vm1072, %v1056, %v1059
        %v1077 = vsel %vm1075, %v1065, 2102212464
        %v1078 = vsel %vm1074, %v1062, %v1077
        %v1079 = vsel %vm1073, %v1076, %v1078
        %v1080 = vsel %vm1072, %v1059, %v1062
        %v1081 = vsel %vm1075, %v1068, 920167782
        %v1082 = vsel %vm1074, %v1065, %v1081
        %v1083 = vsel %vm1073, %v1080, %v1082
        %v1084 = vsel %vm1072, %v1062, %v1065
        %v1085 = vsel %vm1075, %v1071, 1326507024
        %v1086 = vsel %vm1074, %v1068, %v1085
        %v1087 = vsel %vm1073, %v1084, %v1086
        %v1088 = vshll.u32 %v1048, 8
        %v1089 = vmul.u32.u64.compose %v1088, %v1087
        %v1090 = vextract.low.u32 %v1089
        %v1091 = vextract.high.u32 %v1089
        %v1092 = vmul.u32.u64.compose %v1088, %v1083
        %v1093 = vextract.low.u32 %v1092
        %v1094 = vextract.high.u32 %v1092
        %v1095 = vmul.u32 %v1088, %v1079
        %v1096 = vadd.s32 %v1091, %v1093
        %vm1097 = vc.u32 %v1091, %v1093
        %v1098 = vadd.s32 %v1094, 1
        %v1099 = vsel %vm1097, %v1098, %v1094
        %v1100 = vadd.s32 %v1095, %v1099
        %v1101 = vadd.s32 %v1100, 536870912
        %v1102 = vshrl.u32 %v1101, 30
        %v1103 = vshll.u32 %v1102, 30
        %v1104 = vsub.s32 %v1100, %v1103
        %vm1105 = vcmp.lt.s32.totalorder %v1104, 0
        %v1106 = vsub.s32 0, %v1104
        %v1107 = vsel %vm1105, %v1106, %v1104
        %v1108 = vclz %v1107
        %v1109 = vsub.s32 %v1108, 2
        %vm1110 = vcmp.gt.s32.totalorder 0, %v1109
        %v1111 = vsel %vm1110, 0, %v1109
        %v1112 = vsub.s32 32, %v1111
        %v1113 = vshll.u32 %v1104, %v1111
        %v1114 = vshrl.u32 %v1096, %v1112
        %v1115 = vor.u32 %v1113, %v1114
        %v1116 = vsub.s32 4294967266, %v1111
        %v1117 = vadd.s32 %v1116, 127
        %v1118 = vshll.u32 %v1117, 23
        %v1119 = vor.u32 4788187, %v1118
        %v1120 = vand.u32 2147483647, %v1119
        %v1122 = vcvt.s32.f32 %v1115
        %v1123 = vmul.f32 %v1122, %v1120
        %v1124 = vxor.u32 %v1123, 2147483648
        %v1125 = vsel %vm1042, %v1124, %v1123
        %v1126 = vsub.s32 4, %v1102
        %v1127 = vsel %vm1042, %v1126, %v1102
        %v1128 = vsel %vm1041, %v388, %v1125
        %v1129 = vsel %vm1041, 0, %v1127
        %v1130 = vcosq.f32.pop %v1128
        %v1131 = vsinq.f32.pop %v1128
        %vm1132 = vweird.f32 %v388
        %v1133 = vadd.s32 %v1129, 3
        %v1134 = vand.u32 %v1133, 3
        %vm1135 = vcmp.lt.s32.totalorder %v1134, 2
        %vm1136 = vcmp.eq.s32.totalorder %v1134, 0
        %v1137 = vxor.u32 %v1131, 2147483648
        %v1138 = vsel %vm1136, %v1130, %v1137
        %vm1139 = vcmp.eq.s32.totalorder %v1134, 2
        %v1140 = vxor.u32 %v1130, 2147483648
        %v1141 = vsel %vm1139, %v1140, %v1131
        %v1142 = vsel %vm1135, %v1138, %v1141
        %v1143 = vsel %vm1132, nan, %v1142
        %v1144 = vand.u32 2147483647, %v390
        %vm1145 = vcmp.le.f32.partialorder %v1144, 0.7853982
        %vm1146 = vcmp.lt.s32.totalorder %v390, 0
        %v1147 = vand.u32 %v390, 2139095040
        %v1148 = vshrl.u32 %v1147, 23
        %v1149 = vsub.s32 %v1148, 127
        %v1150 = vand.u32 2147483647, %v390
        %v1151 = vand.u32 %v1150, 8388607
        %v1152 = vor.u32 %v1151, 8388608
        %v1153 = vsub.s32 0, %v1152
        %v1154 = vadd.s32 %v1149, 1
        %vm1155 = vcmp.gt.s32.totalorder %v1154, 0
        %v1156 = vsel %vm1155, %v1154, 0
        %v1157 = vshrl.u32 %v1156, 5
        %v1158 = vand.u32 %v1156, 31
        %v1159 = vsub.s32 32, %v1158
        %v1160 = vshrl.u32 683565275, %v1159
        %v1161 = vshll.u32 683565275, %v1158
        %v1162 = vshrl.u32 2475754826, %v1159
        %v1163 = vor.u32 %v1161, %v1162
        %v1164 = vshll.u32 2475754826, %v1158
        %v1165 = vshrl.u32 2131351028, %v1159
        %v1166 = vor.u32 %v1164, %v1165
        %v1167 = vshll.u32 2131351028, %v1158
        %v1168 = vshrl.u32 2102212464, %v1159
        %v1169 = vor.u32 %v1167, %v1168
        %v1170 = vshll.u32 2102212464, %v1158
        %v1171 = vshrl.u32 920167782, %v1159
        %v1172 = vor.u32 %v1170, %v1171
        %v1173 = vshll.u32 920167782, %v1158
        %v1174 = vshrl.u32 1326507024, %v1159
        %v1175 = vor.u32 %v1173, %v1174
        %vm1176 = vcmp.lt.s32.totalorder %v1157, 1
        %vm1177 = vcmp.lt.s32.totalorder %v1157, 2
        %vm1178 = vcmp.lt.s32.totalorder %v1157, 3
        %vm1179 = vcmp.lt.s32.totalorder %v1157, 4
        %v1180 = vsel %vm1176, %v1160, %v1163
        %v1181 = vsel %vm1179, %v1169, 2102212464
        %v1182 = vsel %vm1178, %v1166, %v1181
        %v1183 = vsel %vm1177, %v1180, %v1182
        %v1184 = vsel %vm1176, %v1163, %v1166
        %v1185 = vsel %vm1179, %v1172, 920167782
        %v1186 = vsel %vm1178, %v1169, %v1185
        %v1187 = vsel %vm1177, %v1184, %v1186
        %v1188 = vsel %vm1176, %v1166, %v1169
        %v1189 = vsel %vm1179, %v1175, 1326507024
        %v1190 = vsel %vm1178, %v1172, %v1189
        %v1191 = vsel %vm1177, %v1188, %v1190
        %v1192 = vshll.u32 %v1152, 8
        %v1193 = vmul.u32.u64.compose %v1192, %v1191
        %v1194 = vextract.low.u32 %v1193
        %v1195 = vextract.high.u32 %v1193
        %v1196 = vmul.u32.u64.compose %v1192, %v1187
        %v1197 = vextract.low.u32 %v1196
        %v1198 = vextract.high.u32 %v1196
        %v1199 = vmul.u32 %v1192, %v1183
        %v1200 = vadd.s32 %v1195, %v1197
        %vm1201 = vc.u32 %v1195, %v1197
        %v1202 = vadd.s32 %v1198, 1
        %v1203 = vsel %vm1201, %v1202, %v1198
        %v1204 = vadd.s32 %v1199, %v1203
        %v1205 = vadd.s32 %v1204, 536870912
        %v1206 = vshrl.u32 %v1205, 30
        %v1207 = vshll.u32 %v1206, 30
        %v1208 = vsub.s32 %v1204, %v1207
        %vm1209 = vcmp.lt.s32.totalorder %v1208, 0
        %v1210 = vsub.s32 0, %v1208
        %v1211 = vsel %vm1209, %v1210, %v1208
        %v1212 = vclz %v1211
        %v1213 = vsub.s32 %v1212, 2
        %vm1214 = vcmp.gt.s32.totalorder 0, %v1213
        %v1215 = vsel %vm1214, 0, %v1213
        %v1216 = vsub.s32 32, %v1215
        %v1217 = vshll.u32 %v1208, %v1215
        %v1218 = vshrl.u32 %v1200, %v1216
        %v1219 = vor.u32 %v1217, %v1218
        %v1220 = vsub.s32 4294967266, %v1215
        %v1221 = vadd.s32 %v1220, 127
        %v1222 = vshll.u32 %v1221, 23
        %v1223 = vor.u32 4788187, %v1222
        %v1224 = vand.u32 2147483647, %v1223
        %v1226 = vcvt.s32.f32 %v1219
        %v1227 = vmul.f32 %v1226, %v1224
        %v1228 = vxor.u32 %v1227, 2147483648
        %v1229 = vsel %vm1146, %v1228, %v1227
        %v1230 = vsub.s32 4, %v1206
        %v1231 = vsel %vm1146, %v1230, %v1206
        %v1232 = vsel %vm1145, %v390, %v1229
        %v1233 = vsel %vm1145, 0, %v1231
        %v1234 = vcosq.f32.pop %v1232
        %v1235 = vsinq.f32.pop %v1232
        %vm1236 = vweird.f32 %v390
        %v1237 = vadd.s32 %v1233, 3
        %v1238 = vand.u32 %v1237, 3
        %vm1239 = vcmp.lt.s32.totalorder %v1238, 2
        %vm1240 = vcmp.eq.s32.totalorder %v1238, 0
        %v1241 = vxor.u32 %v1235, 2147483648
        %v1242 = vsel %vm1240, %v1234, %v1241
        %vm1243 = vcmp.eq.s32.totalorder %v1238, 2
        %v1244 = vxor.u32 %v1234, 2147483648
        %v1245 = vsel %vm1243, %v1244, %v1235
        %v1246 = vsel %vm1239, %v1242, %v1245
        %v1247 = vsel %vm1236, nan, %v1246
        %v1248 = vand.u32 2147483647, %v394
        %vm1249 = vcmp.le.f32.partialorder %v1248, 0.7853982
        %vm1250 = vcmp.lt.s32.totalorder %v394, 0
        %v1251 = vand.u32 %v394, 2139095040
        %v1252 = vshrl.u32 %v1251, 23
        %v1253 = vsub.s32 %v1252, 127
        %v1254 = vand.u32 2147483647, %v394
        %v1255 = vand.u32 %v1254, 8388607
        %v1256 = vor.u32 %v1255, 8388608
        %v1257 = vsub.s32 0, %v1256
        %v1258 = vadd.s32 %v1253, 1
        %vm1259 = vcmp.gt.s32.totalorder %v1258, 0
        %v1260 = vsel %vm1259, %v1258, 0
        %v1261 = vshrl.u32 %v1260, 5
        %v1262 = vand.u32 %v1260, 31
        %v1263 = vsub.s32 32, %v1262
        %v1264 = vshrl.u32 683565275, %v1263
        %v1265 = vshll.u32 683565275, %v1262
        %v1266 = vshrl.u32 2475754826, %v1263
        %v1267 = vor.u32 %v1265, %v1266
        %v1268 = vshll.u32 2475754826, %v1262
        %v1269 = vshrl.u32 2131351028, %v1263
        %v1270 = vor.u32 %v1268, %v1269
        %v1271 = vshll.u32 2131351028, %v1262
        %v1272 = vshrl.u32 2102212464, %v1263
        %v1273 = vor.u32 %v1271, %v1272
        %v1274 = vshll.u32 2102212464, %v1262
        %v1275 = vshrl.u32 920167782, %v1263
        %v1276 = vor.u32 %v1274, %v1275
        %v1277 = vshll.u32 920167782, %v1262
        %v1278 = vshrl.u32 1326507024, %v1263
        %v1279 = vor.u32 %v1277, %v1278
        %vm1280 = vcmp.lt.s32.totalorder %v1261, 1
        %vm1281 = vcmp.lt.s32.totalorder %v1261, 2
        %vm1282 = vcmp.lt.s32.totalorder %v1261, 3
        %vm1283 = vcmp.lt.s32.totalorder %v1261, 4
        %v1284 = vsel %vm1280, %v1264, %v1267
        %v1285 = vsel %vm1283, %v1273, 2102212464
        %v1286 = vsel %vm1282, %v1270, %v1285
        %v1287 = vsel %vm1281, %v1284, %v1286
        %v1288 = vsel %vm1280, %v1267, %v1270
        %v1289 = vsel %vm1283, %v1276, 920167782
        %v1290 = vsel %vm1282, %v1273, %v1289
        %v1291 = vsel %vm1281, %v1288, %v1290
        %v1292 = vsel %vm1280, %v1270, %v1273
        %v1293 = vsel %vm1283, %v1279, 1326507024
        %v1294 = vsel %vm1282, %v1276, %v1293
        %v1295 = vsel %vm1281, %v1292, %v1294
        %v1296 = vshll.u32 %v1256, 8
        %v1297 = vmul.u32.u64.compose %v1296, %v1295
        %v1298 = vextract.low.u32 %v1297
        %v1299 = vextract.high.u32 %v1297
        %v1300 = vmul.u32.u64.compose %v1296, %v1291
        %v1301 = vextract.low.u32 %v1300
        %v1302 = vextract.high.u32 %v1300
        %v1303 = vmul.u32 %v1296, %v1287
        %v1304 = vadd.s32 %v1299, %v1301
        %vm1305 = vc.u32 %v1299, %v1301
        %v1306 = vadd.s32 %v1302, 1
        %v1307 = vsel %vm1305, %v1306, %v1302
        %v1308 = vadd.s32 %v1303, %v1307
        %v1309 = vadd.s32 %v1308, 536870912
        %v1310 = vshrl.u32 %v1309, 30
        %v1311 = vshll.u32 %v1310, 30
        %v1312 = vsub.s32 %v1308, %v1311
        %vm1313 = vcmp.lt.s32.totalorder %v1312, 0
        %v1314 = vsub.s32 0, %v1312
        %v1315 = vsel %vm1313, %v1314, %v1312
        %v1316 = vclz %v1315
        %v1317 = vsub.s32 %v1316, 2
        %vm1318 = vcmp.gt.s32.totalorder 0, %v1317
        %v1319 = vsel %vm1318, 0, %v1317
        %v1320 = vsub.s32 32, %v1319
        %v1321 = vshll.u32 %v1312, %v1319
        %v1322 = vshrl.u32 %v1304, %v1320
        %v1323 = vor.u32 %v1321, %v1322
        %v1324 = vsub.s32 4294967266, %v1319
        %v1325 = vadd.s32 %v1324, 127
        %v1326 = vshll.u32 %v1325, 23
        %v1327 = vor.u32 4788187, %v1326
        %v1328 = vand.u32 2147483647, %v1327
        %v1330 = vcvt.s32.f32 %v1323
        %v1331 = vmul.f32 %v1330, %v1328
        %v1332 = vxor.u32 %v1331, 2147483648
        %v1333 = vsel %vm1250, %v1332, %v1331
        %v1334 = vsub.s32 4, %v1310
        %v1335 = vsel %vm1250, %v1334, %v1310
        %v1336 = vsel %vm1249, %v394, %v1333
        %v1337 = vsel %vm1249, 0, %v1335
        %v1338 = vcosq.f32.pop %v1336
        %v1339 = vsinq.f32.pop %v1336
        %vm1340 = vweird.f32 %v394
        %v1341 = vadd.s32 %v1337, 3
        %v1342 = vand.u32 %v1341, 3
        %vm1343 = vcmp.lt.s32.totalorder %v1342, 2
        %vm1344 = vcmp.eq.s32.totalorder %v1342, 0
        %v1345 = vxor.u32 %v1339, 2147483648
        %v1346 = vsel %vm1344, %v1338, %v1345
        %vm1347 = vcmp.eq.s32.totalorder %v1342, 2
        %v1348 = vxor.u32 %v1338, 2147483648
        %v1349 = vsel %vm1347, %v1348, %v1339
        %v1350 = vsel %vm1343, %v1346, %v1349
        %v1351 = vsel %vm1340, nan, %v1350
        %v1352 = vand.u32 2147483647, %v396
        %vm1353 = vcmp.le.f32.partialorder %v1352, 0.7853982
        %vm1354 = vcmp.lt.s32.totalorder %v396, 0
        %v1355 = vand.u32 %v396, 2139095040
        %v1356 = vshrl.u32 %v1355, 23
        %v1357 = vsub.s32 %v1356, 127
        %v1358 = vand.u32 2147483647, %v396
        %v1359 = vand.u32 %v1358, 8388607
        %v1360 = vor.u32 %v1359, 8388608
        %v1361 = vsub.s32 0, %v1360
        %v1362 = vadd.s32 %v1357, 1
        %vm1363 = vcmp.gt.s32.totalorder %v1362, 0
        %v1364 = vsel %vm1363, %v1362, 0
        %v1365 = vshrl.u32 %v1364, 5
        %v1366 = vand.u32 %v1364, 31
        %v1367 = vsub.s32 32, %v1366
        %v1368 = vshrl.u32 683565275, %v1367
        %v1369 = vshll.u32 683565275, %v1366
        %v1370 = vshrl.u32 2475754826, %v1367
        %v1371 = vor.u32 %v1369, %v1370
        %v1372 = vshll.u32 2475754826, %v1366
        %v1373 = vshrl.u32 2131351028, %v1367
        %v1374 = vor.u32 %v1372, %v1373
        %v1375 = vshll.u32 2131351028, %v1366
        %v1376 = vshrl.u32 2102212464, %v1367
        %v1377 = vor.u32 %v1375, %v1376
        %v1378 = vshll.u32 2102212464, %v1366
        %v1379 = vshrl.u32 920167782, %v1367
        %v1380 = vor.u32 %v1378, %v1379
        %v1381 = vshll.u32 920167782, %v1366
        %v1382 = vshrl.u32 1326507024, %v1367
        %v1383 = vor.u32 %v1381, %v1382
        %vm1384 = vcmp.lt.s32.totalorder %v1365, 1
        %vm1385 = vcmp.lt.s32.totalorder %v1365, 2
        %vm1386 = vcmp.lt.s32.totalorder %v1365, 3
        %vm1387 = vcmp.lt.s32.totalorder %v1365, 4
        %v1388 = vsel %vm1384, %v1368, %v1371
        %v1389 = vsel %vm1387, %v1377, 2102212464
        %v1390 = vsel %vm1386, %v1374, %v1389
        %v1391 = vsel %vm1385, %v1388, %v1390
        %v1392 = vsel %vm1384, %v1371, %v1374
        %v1393 = vsel %vm1387, %v1380, 920167782
        %v1394 = vsel %vm1386, %v1377, %v1393
        %v1395 = vsel %vm1385, %v1392, %v1394
        %v1396 = vsel %vm1384, %v1374, %v1377
        %v1397 = vsel %vm1387, %v1383, 1326507024
        %v1398 = vsel %vm1386, %v1380, %v1397
        %v1399 = vsel %vm1385, %v1396, %v1398
        %v1400 = vshll.u32 %v1360, 8
        %v1401 = vmul.u32.u64.compose %v1400, %v1399
        %v1402 = vextract.low.u32 %v1401
        %v1403 = vextract.high.u32 %v1401
        %v1404 = vmul.u32.u64.compose %v1400, %v1395
        %v1405 = vextract.low.u32 %v1404
        %v1406 = vextract.high.u32 %v1404
        %v1407 = vmul.u32 %v1400, %v1391
        %v1408 = vadd.s32 %v1403, %v1405
        %vm1409 = vc.u32 %v1403, %v1405
        %v1410 = vadd.s32 %v1406, 1
        %v1411 = vsel %vm1409, %v1410, %v1406
        %v1412 = vadd.s32 %v1407, %v1411
        %v1413 = vadd.s32 %v1412, 536870912
        %v1414 = vshrl.u32 %v1413, 30
        %v1415 = vshll.u32 %v1414, 30
        %v1416 = vsub.s32 %v1412, %v1415
        %vm1417 = vcmp.lt.s32.totalorder %v1416, 0
        %v1418 = vsub.s32 0, %v1416
        %v1419 = vsel %vm1417, %v1418, %v1416
        %v1420 = vclz %v1419
        %v1421 = vsub.s32 %v1420, 2
        %vm1422 = vcmp.gt.s32.totalorder 0, %v1421
        %v1423 = vsel %vm1422, 0, %v1421
        %v1424 = vsub.s32 32, %v1423
        %v1425 = vshll.u32 %v1416, %v1423
        %v1426 = vshrl.u32 %v1408, %v1424
        %v1427 = vor.u32 %v1425, %v1426
        %v1428 = vsub.s32 4294967266, %v1423
        %v1429 = vadd.s32 %v1428, 127
        %v1430 = vshll.u32 %v1429, 23
        %v1431 = vor.u32 4788187, %v1430
        %v1432 = vand.u32 2147483647, %v1431
        %v1434 = vcvt.s32.f32 %v1427
        %v1435 = vmul.f32 %v1434, %v1432
        %v1436 = vxor.u32 %v1435, 2147483648
        %v1437 = vsel %vm1354, %v1436, %v1435
        %v1438 = vsub.s32 4, %v1414
        %v1439 = vsel %vm1354, %v1438, %v1414
        %v1440 = vsel %vm1353, %v396, %v1437
        %v1441 = vsel %vm1353, 0, %v1439
        %v1442 = vcosq.f32.pop %v1440
        %v1443 = vsinq.f32.pop %v1440
        %vm1444 = vweird.f32 %v396
        %v1445 = vadd.s32 %v1441, 3
        %v1446 = vand.u32 %v1445, 3
        %vm1447 = vcmp.lt.s32.totalorder %v1446, 2
        %vm1448 = vcmp.eq.s32.totalorder %v1446, 0
        %v1449 = vxor.u32 %v1443, 2147483648
        %v1450 = vsel %vm1448, %v1442, %v1449
        %vm1451 = vcmp.eq.s32.totalorder %v1446, 2
        %v1452 = vxor.u32 %v1442, 2147483648
        %v1453 = vsel %vm1451, %v1452, %v1443
        %v1454 = vsel %vm1447, %v1450, %v1453
        %v1455 = vsel %vm1444, nan, %v1454
        %v1456 = vand.u32 2147483647, %v400
        %vm1457 = vcmp.le.f32.partialorder %v1456, 0.7853982
        %vm1458 = vcmp.lt.s32.totalorder %v400, 0
        %v1459 = vand.u32 %v400, 2139095040
        %v1460 = vshrl.u32 %v1459, 23
        %v1461 = vsub.s32 %v1460, 127
        %v1462 = vand.u32 2147483647, %v400
        %v1463 = vand.u32 %v1462, 8388607
        %v1464 = vor.u32 %v1463, 8388608
        %v1465 = vsub.s32 0, %v1464
        %v1466 = vadd.s32 %v1461, 1
        %vm1467 = vcmp.gt.s32.totalorder %v1466, 0
        %v1468 = vsel %vm1467, %v1466, 0
        %v1469 = vshrl.u32 %v1468, 5
        %v1470 = vand.u32 %v1468, 31
        %v1471 = vsub.s32 32, %v1470
        %v1472 = vshrl.u32 683565275, %v1471
        %v1473 = vshll.u32 683565275, %v1470
        %v1474 = vshrl.u32 2475754826, %v1471
        %v1475 = vor.u32 %v1473, %v1474
        %v1476 = vshll.u32 2475754826, %v1470
        %v1477 = vshrl.u32 2131351028, %v1471
        %v1478 = vor.u32 %v1476, %v1477
        %v1479 = vshll.u32 2131351028, %v1470
        %v1480 = vshrl.u32 2102212464, %v1471
        %v1481 = vor.u32 %v1479, %v1480
        %v1482 = vshll.u32 2102212464, %v1470
        %v1483 = vshrl.u32 920167782, %v1471
        %v1484 = vor.u32 %v1482, %v1483
        %v1485 = vshll.u32 920167782, %v1470
        %v1486 = vshrl.u32 1326507024, %v1471
        %v1487 = vor.u32 %v1485, %v1486
        %vm1488 = vcmp.lt.s32.totalorder %v1469, 1
        %vm1489 = vcmp.lt.s32.totalorder %v1469, 2
        %vm1490 = vcmp.lt.s32.totalorder %v1469, 3
        %vm1491 = vcmp.lt.s32.totalorder %v1469, 4
        %v1492 = vsel %vm1488, %v1472, %v1475
        %v1493 = vsel %vm1491, %v1481, 2102212464
        %v1494 = vsel %vm1490, %v1478, %v1493
        %v1495 = vsel %vm1489, %v1492, %v1494
        %v1496 = vsel %vm1488, %v1475, %v1478
        %v1497 = vsel %vm1491, %v1484, 920167782
        %v1498 = vsel %vm1490, %v1481, %v1497
        %v1499 = vsel %vm1489, %v1496, %v1498
        %v1500 = vsel %vm1488, %v1478, %v1481
        %v1501 = vsel %vm1491, %v1487, 1326507024
        %v1502 = vsel %vm1490, %v1484, %v1501
        %v1503 = vsel %vm1489, %v1500, %v1502
        %v1504 = vshll.u32 %v1464, 8
        %v1505 = vmul.u32.u64.compose %v1504, %v1503
        %v1506 = vextract.low.u32 %v1505
        %v1507 = vextract.high.u32 %v1505
        %v1508 = vmul.u32.u64.compose %v1504, %v1499
        %v1509 = vextract.low.u32 %v1508
        %v1510 = vextract.high.u32 %v1508
        %v1511 = vmul.u32 %v1504, %v1495
        %v1512 = vadd.s32 %v1507, %v1509
        %vm1513 = vc.u32 %v1507, %v1509
        %v1514 = vadd.s32 %v1510, 1
        %v1515 = vsel %vm1513, %v1514, %v1510
        %v1516 = vadd.s32 %v1511, %v1515
        %v1517 = vadd.s32 %v1516, 536870912
        %v1518 = vshrl.u32 %v1517, 30
        %v1519 = vshll.u32 %v1518, 30
        %v1520 = vsub.s32 %v1516, %v1519
        %vm1521 = vcmp.lt.s32.totalorder %v1520, 0
        %v1522 = vsub.s32 0, %v1520
        %v1523 = vsel %vm1521, %v1522, %v1520
        %v1524 = vclz %v1523
        %v1525 = vsub.s32 %v1524, 2
        %vm1526 = vcmp.gt.s32.totalorder 0, %v1525
        %v1527 = vsel %vm1526, 0, %v1525
        %v1528 = vsub.s32 32, %v1527
        %v1529 = vshll.u32 %v1520, %v1527
        %v1530 = vshrl.u32 %v1512, %v1528
        %v1531 = vor.u32 %v1529, %v1530
        %v1532 = vsub.s32 4294967266, %v1527
        %v1533 = vadd.s32 %v1532, 127
        %v1534 = vshll.u32 %v1533, 23
        %v1535 = vor.u32 4788187, %v1534
        %v1536 = vand.u32 2147483647, %v1535
        %v1538 = vcvt.s32.f32 %v1531
        %v1539 = vmul.f32 %v1538, %v1536
        %v1540 = vxor.u32 %v1539, 2147483648
        %v1541 = vsel %vm1458, %v1540, %v1539
        %v1542 = vsub.s32 4, %v1518
        %v1543 = vsel %vm1458, %v1542, %v1518
        %v1544 = vsel %vm1457, %v400, %v1541
        %v1545 = vsel %vm1457, 0, %v1543
        %v1546 = vcosq.f32.pop %v1544
        %v1547 = vsinq.f32.pop %v1544
        %vm1548 = vweird.f32 %v400
        %v1549 = vadd.s32 %v1545, 3
        %v1550 = vand.u32 %v1549, 3
        %vm1551 = vcmp.lt.s32.totalorder %v1550, 2
        %vm1552 = vcmp.eq.s32.totalorder %v1550, 0
        %v1553 = vxor.u32 %v1547, 2147483648
        %v1554 = vsel %vm1552, %v1546, %v1553
        %vm1555 = vcmp.eq.s32.totalorder %v1550, 2
        %v1556 = vxor.u32 %v1546, 2147483648
        %v1557 = vsel %vm1555, %v1556, %v1547
        %v1558 = vsel %vm1551, %v1554, %v1557
        %v1559 = vsel %vm1548, nan, %v1558
        %v1560 = vand.u32 2147483647, %v402
        %vm1561 = vcmp.le.f32.partialorder %v1560, 0.7853982
        %vm1562 = vcmp.lt.s32.totalorder %v402, 0
        %v1563 = vand.u32 %v402, 2139095040
        %v1564 = vshrl.u32 %v1563, 23
        %v1565 = vsub.s32 %v1564, 127
        %v1566 = vand.u32 2147483647, %v402
        %v1567 = vand.u32 %v1566, 8388607
        %v1568 = vor.u32 %v1567, 8388608
        %v1569 = vsub.s32 0, %v1568
        %v1570 = vadd.s32 %v1565, 1
        %vm1571 = vcmp.gt.s32.totalorder %v1570, 0
        %v1572 = vsel %vm1571, %v1570, 0
        %v1573 = vshrl.u32 %v1572, 5
        %v1574 = vand.u32 %v1572, 31
        %v1575 = vsub.s32 32, %v1574
        %v1576 = vshrl.u32 683565275, %v1575
        %v1577 = vshll.u32 683565275, %v1574
        %v1578 = vshrl.u32 2475754826, %v1575
        %v1579 = vor.u32 %v1577, %v1578
        %v1580 = vshll.u32 2475754826, %v1574
        %v1581 = vshrl.u32 2131351028, %v1575
        %v1582 = vor.u32 %v1580, %v1581
        %v1583 = vshll.u32 2131351028, %v1574
        %v1584 = vshrl.u32 2102212464, %v1575
        %v1585 = vor.u32 %v1583, %v1584
        %v1586 = vshll.u32 2102212464, %v1574
        %v1587 = vshrl.u32 920167782, %v1575
        %v1588 = vor.u32 %v1586, %v1587
        %v1589 = vshll.u32 920167782, %v1574
        %v1590 = vshrl.u32 1326507024, %v1575
        %v1591 = vor.u32 %v1589, %v1590
        %vm1592 = vcmp.lt.s32.totalorder %v1573, 1
        %vm1593 = vcmp.lt.s32.totalorder %v1573, 2
        %vm1594 = vcmp.lt.s32.totalorder %v1573, 3
        %vm1595 = vcmp.lt.s32.totalorder %v1573, 4
        %v1596 = vsel %vm1592, %v1576, %v1579
        %v1597 = vsel %vm1595, %v1585, 2102212464
        %v1598 = vsel %vm1594, %v1582, %v1597
        %v1599 = vsel %vm1593, %v1596, %v1598
        %v1600 = vsel %vm1592, %v1579, %v1582
        %v1601 = vsel %vm1595, %v1588, 920167782
        %v1602 = vsel %vm1594, %v1585, %v1601
        %v1603 = vsel %vm1593, %v1600, %v1602
        %v1604 = vsel %vm1592, %v1582, %v1585
        %v1605 = vsel %vm1595, %v1591, 1326507024
        %v1606 = vsel %vm1594, %v1588, %v1605
        %v1607 = vsel %vm1593, %v1604, %v1606
        %v1608 = vshll.u32 %v1568, 8
        %v1609 = vmul.u32.u64.compose %v1608, %v1607
        %v1610 = vextract.low.u32 %v1609
        %v1611 = vextract.high.u32 %v1609
        %v1612 = vmul.u32.u64.compose %v1608, %v1603
        %v1613 = vextract.low.u32 %v1612
        %v1614 = vextract.high.u32 %v1612
        %v1615 = vmul.u32 %v1608, %v1599
        %v1616 = vadd.s32 %v1611, %v1613
        %vm1617 = vc.u32 %v1611, %v1613
        %v1618 = vadd.s32 %v1614, 1
        %v1619 = vsel %vm1617, %v1618, %v1614
        %v1620 = vadd.s32 %v1615, %v1619
        %v1621 = vadd.s32 %v1620, 536870912
        %v1622 = vshrl.u32 %v1621, 30
        %v1623 = vshll.u32 %v1622, 30
        %v1624 = vsub.s32 %v1620, %v1623
        %vm1625 = vcmp.lt.s32.totalorder %v1624, 0
        %v1626 = vsub.s32 0, %v1624
        %v1627 = vsel %vm1625, %v1626, %v1624
        %v1628 = vclz %v1627
        %v1629 = vsub.s32 %v1628, 2
        %vm1630 = vcmp.gt.s32.totalorder 0, %v1629
        %v1631 = vsel %vm1630, 0, %v1629
        %v1632 = vsub.s32 32, %v1631
        %v1633 = vshll.u32 %v1624, %v1631
        %v1634 = vshrl.u32 %v1616, %v1632
        %v1635 = vor.u32 %v1633, %v1634
        %v1636 = vsub.s32 4294967266, %v1631
        %v1637 = vadd.s32 %v1636, 127
        %v1638 = vshll.u32 %v1637, 23
        %v1639 = vor.u32 4788187, %v1638
        %v1640 = vand.u32 2147483647, %v1639
        %v1642 = vcvt.s32.f32 %v1635
        %v1643 = vmul.f32 %v1642, %v1640
        %v1644 = vxor.u32 %v1643, 2147483648
        %v1645 = vsel %vm1562, %v1644, %v1643
        %v1646 = vsub.s32 4, %v1622
        %v1647 = vsel %vm1562, %v1646, %v1622
        %v1648 = vsel %vm1561, %v402, %v1645
        %v1649 = vsel %vm1561, 0, %v1647
        %v1650 = vcosq.f32.pop %v1648
        %v1651 = vsinq.f32.pop %v1648
        %vm1652 = vweird.f32 %v402
        %v1653 = vadd.s32 %v1649, 3
        %v1654 = vand.u32 %v1653, 3
        %vm1655 = vcmp.lt.s32.totalorder %v1654, 2
        %vm1656 = vcmp.eq.s32.totalorder %v1654, 0
        %v1657 = vxor.u32 %v1651, 2147483648
        %v1658 = vsel %vm1656, %v1650, %v1657
        %vm1659 = vcmp.eq.s32.totalorder %v1654, 2
        %v1660 = vxor.u32 %v1650, 2147483648
        %v1661 = vsel %vm1659, %v1660, %v1651
        %v1662 = vsel %vm1655, %v1658, %v1661
        %v1663 = vsel %vm1652, nan, %v1662
        %v1664 = vand.u32 2147483647, %v406
        %vm1665 = vcmp.le.f32.partialorder %v1664, 0.7853982
        %vm1666 = vcmp.lt.s32.totalorder %v406, 0
        %v1667 = vand.u32 %v406, 2139095040
        %v1668 = vshrl.u32 %v1667, 23
        %v1669 = vsub.s32 %v1668, 127
        %v1670 = vand.u32 2147483647, %v406
        %v1671 = vand.u32 %v1670, 8388607
        %v1672 = vor.u32 %v1671, 8388608
        %v1673 = vsub.s32 0, %v1672
        %v1674 = vadd.s32 %v1669, 1
        %vm1675 = vcmp.gt.s32.totalorder %v1674, 0
        %v1676 = vsel %vm1675, %v1674, 0
        %v1677 = vshrl.u32 %v1676, 5
        %v1678 = vand.u32 %v1676, 31
        %v1679 = vsub.s32 32, %v1678
        %v1680 = vshrl.u32 683565275, %v1679
        %v1681 = vshll.u32 683565275, %v1678
        %v1682 = vshrl.u32 2475754826, %v1679
        %v1683 = vor.u32 %v1681, %v1682
        %v1684 = vshll.u32 2475754826, %v1678
        %v1685 = vshrl.u32 2131351028, %v1679
        %v1686 = vor.u32 %v1684, %v1685
        %v1687 = vshll.u32 2131351028, %v1678
        %v1688 = vshrl.u32 2102212464, %v1679
        %v1689 = vor.u32 %v1687, %v1688
        %v1690 = vshll.u32 2102212464, %v1678
        %v1691 = vshrl.u32 920167782, %v1679
        %v1692 = vor.u32 %v1690, %v1691
        %v1693 = vshll.u32 920167782, %v1678
        %v1694 = vshrl.u32 1326507024, %v1679
        %v1695 = vor.u32 %v1693, %v1694
        %vm1696 = vcmp.lt.s32.totalorder %v1677, 1
        %vm1697 = vcmp.lt.s32.totalorder %v1677, 2
        %vm1698 = vcmp.lt.s32.totalorder %v1677, 3
        %vm1699 = vcmp.lt.s32.totalorder %v1677, 4
        %v1700 = vsel %vm1696, %v1680, %v1683
        %v1701 = vsel %vm1699, %v1689, 2102212464
        %v1702 = vsel %vm1698, %v1686, %v1701
        %v1703 = vsel %vm1697, %v1700, %v1702
        %v1704 = vsel %vm1696, %v1683, %v1686
        %v1705 = vsel %vm1699, %v1692, 920167782
        %v1706 = vsel %vm1698, %v1689, %v1705
        %v1707 = vsel %vm1697, %v1704, %v1706
        %v1708 = vsel %vm1696, %v1686, %v1689
        %v1709 = vsel %vm1699, %v1695, 1326507024
        %v1710 = vsel %vm1698, %v1692, %v1709
        %v1711 = vsel %vm1697, %v1708, %v1710
        %v1712 = vshll.u32 %v1672, 8
        %v1713 = vmul.u32.u64.compose %v1712, %v1711
        %v1714 = vextract.low.u32 %v1713
        %v1715 = vextract.high.u32 %v1713
        %v1716 = vmul.u32.u64.compose %v1712, %v1707
        %v1717 = vextract.low.u32 %v1716
        %v1718 = vextract.high.u32 %v1716
        %v1719 = vmul.u32 %v1712, %v1703
        %v1720 = vadd.s32 %v1715, %v1717
        %vm1721 = vc.u32 %v1715, %v1717
        %v1722 = vadd.s32 %v1718, 1
        %v1723 = vsel %vm1721, %v1722, %v1718
        %v1724 = vadd.s32 %v1719, %v1723
        %v1725 = vadd.s32 %v1724, 536870912
        %v1726 = vshrl.u32 %v1725, 30
        %v1727 = vshll.u32 %v1726, 30
        %v1728 = vsub.s32 %v1724, %v1727
        %vm1729 = vcmp.lt.s32.totalorder %v1728, 0
        %v1730 = vsub.s32 0, %v1728
        %v1731 = vsel %vm1729, %v1730, %v1728
        %v1732 = vclz %v1731
        %v1733 = vsub.s32 %v1732, 2
        %vm1734 = vcmp.gt.s32.totalorder 0, %v1733
        %v1735 = vsel %vm1734, 0, %v1733
        %v1736 = vsub.s32 32, %v1735
        %v1737 = vshll.u32 %v1728, %v1735
        %v1738 = vshrl.u32 %v1720, %v1736
        %v1739 = vor.u32 %v1737, %v1738
        %v1740 = vsub.s32 4294967266, %v1735
        %v1741 = vadd.s32 %v1740, 127
        %v1742 = vshll.u32 %v1741, 23
        %v1743 = vor.u32 4788187, %v1742
        %v1744 = vand.u32 2147483647, %v1743
        %v1746 = vcvt.s32.f32 %v1739
        %v1747 = vmul.f32 %v1746, %v1744
        %v1748 = vxor.u32 %v1747, 2147483648
        %v1749 = vsel %vm1666, %v1748, %v1747
        %v1750 = vsub.s32 4, %v1726
        %v1751 = vsel %vm1666, %v1750, %v1726
        %v1752 = vsel %vm1665, %v406, %v1749
        %v1753 = vsel %vm1665, 0, %v1751
        %v1754 = vcosq.f32.pop %v1752
        %v1755 = vsinq.f32.pop %v1752
        %vm1756 = vweird.f32 %v406
        %v1757 = vadd.s32 %v1753, 3
        %v1758 = vand.u32 %v1757, 3
        %vm1759 = vcmp.lt.s32.totalorder %v1758, 2
        %vm1760 = vcmp.eq.s32.totalorder %v1758, 0
        %v1761 = vxor.u32 %v1755, 2147483648
        %v1762 = vsel %vm1760, %v1754, %v1761
        %vm1763 = vcmp.eq.s32.totalorder %v1758, 2
        %v1764 = vxor.u32 %v1754, 2147483648
        %v1765 = vsel %vm1763, %v1764, %v1755
        %v1766 = vsel %vm1759, %v1762, %v1765
        %v1767 = vsel %vm1756, nan, %v1766
        %v1768 = vand.u32 2147483647, %v408
        %vm1769 = vcmp.le.f32.partialorder %v1768, 0.7853982
        %vm1770 = vcmp.lt.s32.totalorder %v408, 0
        %v1771 = vand.u32 %v408, 2139095040
        %v1772 = vshrl.u32 %v1771, 23
        %v1773 = vsub.s32 %v1772, 127
        %v1774 = vand.u32 2147483647, %v408
        %v1775 = vand.u32 %v1774, 8388607
        %v1776 = vor.u32 %v1775, 8388608
        %v1777 = vsub.s32 0, %v1776
        %v1778 = vadd.s32 %v1773, 1
        %vm1779 = vcmp.gt.s32.totalorder %v1778, 0
        %v1780 = vsel %vm1779, %v1778, 0
        %v1781 = vshrl.u32 %v1780, 5
        %v1782 = vand.u32 %v1780, 31
        %v1783 = vsub.s32 32, %v1782
        %v1784 = vshrl.u32 683565275, %v1783
        %v1785 = vshll.u32 683565275, %v1782
        %v1786 = vshrl.u32 2475754826, %v1783
        %v1787 = vor.u32 %v1785, %v1786
        %v1788 = vshll.u32 2475754826, %v1782
        %v1789 = vshrl.u32 2131351028, %v1783
        %v1790 = vor.u32 %v1788, %v1789
        %v1791 = vshll.u32 2131351028, %v1782
        %v1792 = vshrl.u32 2102212464, %v1783
        %v1793 = vor.u32 %v1791, %v1792
        %v1794 = vshll.u32 2102212464, %v1782
        %v1795 = vshrl.u32 920167782, %v1783
        %v1796 = vor.u32 %v1794, %v1795
        %v1797 = vshll.u32 920167782, %v1782
        %v1798 = vshrl.u32 1326507024, %v1783
        %v1799 = vor.u32 %v1797, %v1798
        %vm1800 = vcmp.lt.s32.totalorder %v1781, 1
        %vm1801 = vcmp.lt.s32.totalorder %v1781, 2
        %vm1802 = vcmp.lt.s32.totalorder %v1781, 3
        %vm1803 = vcmp.lt.s32.totalorder %v1781, 4
        %v1804 = vsel %vm1800, %v1784, %v1787
        %v1805 = vsel %vm1803, %v1793, 2102212464
        %v1806 = vsel %vm1802, %v1790, %v1805
        %v1807 = vsel %vm1801, %v1804, %v1806
        %v1808 = vsel %vm1800, %v1787, %v1790
        %v1809 = vsel %vm1803, %v1796, 920167782
        %v1810 = vsel %vm1802, %v1793, %v1809
        %v1811 = vsel %vm1801, %v1808, %v1810
        %v1812 = vsel %vm1800, %v1790, %v1793
        %v1813 = vsel %vm1803, %v1799, 1326507024
        %v1814 = vsel %vm1802, %v1796, %v1813
        %v1815 = vsel %vm1801, %v1812, %v1814
        %v1816 = vshll.u32 %v1776, 8
        %v1817 = vmul.u32.u64.compose %v1816, %v1815
        %v1818 = vextract.low.u32 %v1817
        %v1819 = vextract.high.u32 %v1817
        %v1820 = vmul.u32.u64.compose %v1816, %v1811
        %v1821 = vextract.low.u32 %v1820
        %v1822 = vextract.high.u32 %v1820
        %v1823 = vmul.u32 %v1816, %v1807
        %v1824 = vadd.s32 %v1819, %v1821
        %vm1825 = vc.u32 %v1819, %v1821
        %v1826 = vadd.s32 %v1822, 1
        %v1827 = vsel %vm1825, %v1826, %v1822
        %v1828 = vadd.s32 %v1823, %v1827
        %v1829 = vadd.s32 %v1828, 536870912
        %v1830 = vshrl.u32 %v1829, 30
        %v1831 = vshll.u32 %v1830, 30
        %v1832 = vsub.s32 %v1828, %v1831
        %vm1833 = vcmp.lt.s32.totalorder %v1832, 0
        %v1834 = vsub.s32 0, %v1832
        %v1835 = vsel %vm1833, %v1834, %v1832
        %v1836 = vclz %v1835
        %v1837 = vsub.s32 %v1836, 2
        %vm1838 = vcmp.gt.s32.totalorder 0, %v1837
        %v1839 = vsel %vm1838, 0, %v1837
        %v1840 = vsub.s32 32, %v1839
        %v1841 = vshll.u32 %v1832, %v1839
        %v1842 = vshrl.u32 %v1824, %v1840
        %v1843 = vor.u32 %v1841, %v1842
        %v1844 = vsub.s32 4294967266, %v1839
        %v1845 = vadd.s32 %v1844, 127
        %v1846 = vshll.u32 %v1845, 23
        %v1847 = vor.u32 4788187, %v1846
        %v1848 = vand.u32 2147483647, %v1847
        %v1850 = vcvt.s32.f32 %v1843
        %v1851 = vmul.f32 %v1850, %v1848
        %v1852 = vxor.u32 %v1851, 2147483648
        %v1853 = vsel %vm1770, %v1852, %v1851
        %v1854 = vsub.s32 4, %v1830
        %v1855 = vsel %vm1770, %v1854, %v1830
        %v1856 = vsel %vm1769, %v408, %v1853
        %v1857 = vsel %vm1769, 0, %v1855
        %v1858 = vcosq.f32.pop %v1856
        %v1859 = vsinq.f32.pop %v1856
        %vm1860 = vweird.f32 %v408
        %v1861 = vadd.s32 %v1857, 3
        %v1862 = vand.u32 %v1861, 3
        %vm1863 = vcmp.lt.s32.totalorder %v1862, 2
        %vm1864 = vcmp.eq.s32.totalorder %v1862, 0
        %v1865 = vxor.u32 %v1859, 2147483648
        %v1866 = vsel %vm1864, %v1858, %v1865
        %vm1867 = vcmp.eq.s32.totalorder %v1862, 2
        %v1868 = vxor.u32 %v1858, 2147483648
        %v1869 = vsel %vm1867, %v1868, %v1859
        %v1870 = vsel %vm1863, %v1866, %v1869
        %v1871 = vsel %vm1860, nan, %v1870
        %v1872 = vand.u32 2147483647, %v412
        %vm1873 = vcmp.le.f32.partialorder %v1872, 0.7853982
        %vm1874 = vcmp.lt.s32.totalorder %v412, 0
        %v1875 = vand.u32 %v412, 2139095040
        %v1876 = vshrl.u32 %v1875, 23
        %v1877 = vsub.s32 %v1876, 127
        %v1878 = vand.u32 2147483647, %v412
        %v1879 = vand.u32 %v1878, 8388607
        %v1880 = vor.u32 %v1879, 8388608
        %v1881 = vsub.s32 0, %v1880
        %v1882 = vadd.s32 %v1877, 1
        %vm1883 = vcmp.gt.s32.totalorder %v1882, 0
        %v1884 = vsel %vm1883, %v1882, 0
        %v1885 = vshrl.u32 %v1884, 5
        %v1886 = vand.u32 %v1884, 31
        %v1887 = vsub.s32 32, %v1886
        %v1888 = vshrl.u32 683565275, %v1887
        %v1889 = vshll.u32 683565275, %v1886
        %v1890 = vshrl.u32 2475754826, %v1887
        %v1891 = vor.u32 %v1889, %v1890
        %v1892 = vshll.u32 2475754826, %v1886
        %v1893 = vshrl.u32 2131351028, %v1887
        %v1894 = vor.u32 %v1892, %v1893
        %v1895 = vshll.u32 2131351028, %v1886
        %v1896 = vshrl.u32 2102212464, %v1887
        %v1897 = vor.u32 %v1895, %v1896
        %v1898 = vshll.u32 2102212464, %v1886
        %v1899 = vshrl.u32 920167782, %v1887
        %v1900 = vor.u32 %v1898, %v1899
        %v1901 = vshll.u32 920167782, %v1886
        %v1902 = vshrl.u32 1326507024, %v1887
        %v1903 = vor.u32 %v1901, %v1902
        %vm1904 = vcmp.lt.s32.totalorder %v1885, 1
        %vm1905 = vcmp.lt.s32.totalorder %v1885, 2
        %vm1906 = vcmp.lt.s32.totalorder %v1885, 3
        %vm1907 = vcmp.lt.s32.totalorder %v1885, 4
        %v1908 = vsel %vm1904, %v1888, %v1891
        %v1909 = vsel %vm1907, %v1897, 2102212464
        %v1910 = vsel %vm1906, %v1894, %v1909
        %v1911 = vsel %vm1905, %v1908, %v1910
        %v1912 = vsel %vm1904, %v1891, %v1894
        %v1913 = vsel %vm1907, %v1900, 920167782
        %v1914 = vsel %vm1906, %v1897, %v1913
        %v1915 = vsel %vm1905, %v1912, %v1914
        %v1916 = vsel %vm1904, %v1894, %v1897
        %v1917 = vsel %vm1907, %v1903, 1326507024
        %v1918 = vsel %vm1906, %v1900, %v1917
        %v1919 = vsel %vm1905, %v1916, %v1918
        %v1920 = vshll.u32 %v1880, 8
        %v1921 = vmul.u32.u64.compose %v1920, %v1919
        %v1922 = vextract.low.u32 %v1921
        %v1923 = vextract.high.u32 %v1921
        %v1924 = vmul.u32.u64.compose %v1920, %v1915
        %v1925 = vextract.low.u32 %v1924
        %v1926 = vextract.high.u32 %v1924
        %v1927 = vmul.u32 %v1920, %v1911
        %v1928 = vadd.s32 %v1923, %v1925
        %vm1929 = vc.u32 %v1923, %v1925
        %v1930 = vadd.s32 %v1926, 1
        %v1931 = vsel %vm1929, %v1930, %v1926
        %v1932 = vadd.s32 %v1927, %v1931
        %v1933 = vadd.s32 %v1932, 536870912
        %v1934 = vshrl.u32 %v1933, 30
        %v1935 = vshll.u32 %v1934, 30
        %v1936 = vsub.s32 %v1932, %v1935
        %vm1937 = vcmp.lt.s32.totalorder %v1936, 0
        %v1938 = vsub.s32 0, %v1936
        %v1939 = vsel %vm1937, %v1938, %v1936
        %v1940 = vclz %v1939
        %v1941 = vsub.s32 %v1940, 2
        %vm1942 = vcmp.gt.s32.totalorder 0, %v1941
        %v1943 = vsel %vm1942, 0, %v1941
        %v1944 = vsub.s32 32, %v1943
        %v1945 = vshll.u32 %v1936, %v1943
        %v1946 = vshrl.u32 %v1928, %v1944
        %v1947 = vor.u32 %v1945, %v1946
        %v1948 = vsub.s32 4294967266, %v1943
        %v1949 = vadd.s32 %v1948, 127
        %v1950 = vshll.u32 %v1949, 23
        %v1951 = vor.u32 4788187, %v1950
        %v1952 = vand.u32 2147483647, %v1951
        %v1954 = vcvt.s32.f32 %v1947
        %v1955 = vmul.f32 %v1954, %v1952
        %v1956 = vxor.u32 %v1955, 2147483648
        %v1957 = vsel %vm1874, %v1956, %v1955
        %v1958 = vsub.s32 4, %v1934
        %v1959 = vsel %vm1874, %v1958, %v1934
        %v1960 = vsel %vm1873, %v412, %v1957
        %v1961 = vsel %vm1873, 0, %v1959
        %v1962 = vcosq.f32.pop %v1960
        %v1963 = vsinq.f32.pop %v1960
        %vm1964 = vweird.f32 %v412
        %v1965 = vadd.s32 %v1961, 3
        %v1966 = vand.u32 %v1965, 3
        %vm1967 = vcmp.lt.s32.totalorder %v1966, 2
        %vm1968 = vcmp.eq.s32.totalorder %v1966, 0
        %v1969 = vxor.u32 %v1963, 2147483648
        %v1970 = vsel %vm1968, %v1962, %v1969
        %vm1971 = vcmp.eq.s32.totalorder %v1966, 2
        %v1972 = vxor.u32 %v1962, 2147483648
        %v1973 = vsel %vm1971, %v1972, %v1963
        %v1974 = vsel %vm1967, %v1970, %v1973
        %v1975 = vsel %vm1964, nan, %v1974
        %v1976 = vand.u32 2147483647, %v414
        %vm1977 = vcmp.le.f32.partialorder %v1976, 0.7853982
        %vm1978 = vcmp.lt.s32.totalorder %v414, 0
        %v1979 = vand.u32 %v414, 2139095040
        %v1980 = vshrl.u32 %v1979, 23
        %v1981 = vsub.s32 %v1980, 127
        %v1982 = vand.u32 2147483647, %v414
        %v1983 = vand.u32 %v1982, 8388607
        %v1984 = vor.u32 %v1983, 8388608
        %v1985 = vsub.s32 0, %v1984
        %v1986 = vadd.s32 %v1981, 1
        %vm1987 = vcmp.gt.s32.totalorder %v1986, 0
        %v1988 = vsel %vm1987, %v1986, 0
        %v1989 = vshrl.u32 %v1988, 5
        %v1990 = vand.u32 %v1988, 31
        %v1991 = vsub.s32 32, %v1990
        %v1992 = vshrl.u32 683565275, %v1991
        %v1993 = vshll.u32 683565275, %v1990
        %v1994 = vshrl.u32 2475754826, %v1991
        %v1995 = vor.u32 %v1993, %v1994
        %v1996 = vshll.u32 2475754826, %v1990
        %v1997 = vshrl.u32 2131351028, %v1991
        %v1998 = vor.u32 %v1996, %v1997
        %v1999 = vshll.u32 2131351028, %v1990
        %v2000 = vshrl.u32 2102212464, %v1991
        %v2001 = vor.u32 %v1999, %v2000
        %v2002 = vshll.u32 2102212464, %v1990
        %v2003 = vshrl.u32 920167782, %v1991
        %v2004 = vor.u32 %v2002, %v2003
        %v2005 = vshll.u32 920167782, %v1990
        %v2006 = vshrl.u32 1326507024, %v1991
        %v2007 = vor.u32 %v2005, %v2006
        %vm2008 = vcmp.lt.s32.totalorder %v1989, 1
        %vm2009 = vcmp.lt.s32.totalorder %v1989, 2
        %vm2010 = vcmp.lt.s32.totalorder %v1989, 3
        %vm2011 = vcmp.lt.s32.totalorder %v1989, 4
        %v2012 = vsel %vm2008, %v1992, %v1995
        %v2013 = vsel %vm2011, %v2001, 2102212464
        %v2014 = vsel %vm2010, %v1998, %v2013
        %v2015 = vsel %vm2009, %v2012, %v2014
        %v2016 = vsel %vm2008, %v1995, %v1998
        %v2017 = vsel %vm2011, %v2004, 920167782
        %v2018 = vsel %vm2010, %v2001, %v2017
        %v2019 = vsel %vm2009, %v2016, %v2018
        %v2020 = vsel %vm2008, %v1998, %v2001
        %v2021 = vsel %vm2011, %v2007, 1326507024
        %v2022 = vsel %vm2010, %v2004, %v2021
        %v2023 = vsel %vm2009, %v2020, %v2022
        %v2024 = vshll.u32 %v1984, 8
        %v2025 = vmul.u32.u64.compose %v2024, %v2023
        %v2026 = vextract.low.u32 %v2025
        %v2027 = vextract.high.u32 %v2025
        %v2028 = vmul.u32.u64.compose %v2024, %v2019
        %v2029 = vextract.low.u32 %v2028
        %v2030 = vextract.high.u32 %v2028
        %v2031 = vmul.u32 %v2024, %v2015
        %v2032 = vadd.s32 %v2027, %v2029
        %vm2033 = vc.u32 %v2027, %v2029
        %v2034 = vadd.s32 %v2030, 1
        %v2035 = vsel %vm2033, %v2034, %v2030
        %v2036 = vadd.s32 %v2031, %v2035
        %v2037 = vadd.s32 %v2036, 536870912
        %v2038 = vshrl.u32 %v2037, 30
        %v2039 = vshll.u32 %v2038, 30
        %v2040 = vsub.s32 %v2036, %v2039
        %vm2041 = vcmp.lt.s32.totalorder %v2040, 0
        %v2042 = vsub.s32 0, %v2040
        %v2043 = vsel %vm2041, %v2042, %v2040
        %v2044 = vclz %v2043
        %v2045 = vsub.s32 %v2044, 2
        %vm2046 = vcmp.gt.s32.totalorder 0, %v2045
        %v2047 = vsel %vm2046, 0, %v2045
        %v2048 = vsub.s32 32, %v2047
        %v2049 = vshll.u32 %v2040, %v2047
        %v2050 = vshrl.u32 %v2032, %v2048
        %v2051 = vor.u32 %v2049, %v2050
        %v2052 = vsub.s32 4294967266, %v2047
        %v2053 = vadd.s32 %v2052, 127
        %v2054 = vshll.u32 %v2053, 23
        %v2055 = vor.u32 4788187, %v2054
        %v2056 = vand.u32 2147483647, %v2055
        %v2058 = vcvt.s32.f32 %v2051
        %v2059 = vmul.f32 %v2058, %v2056
        %v2060 = vxor.u32 %v2059, 2147483648
        %v2061 = vsel %vm1978, %v2060, %v2059
        %v2062 = vsub.s32 4, %v2038
        %v2063 = vsel %vm1978, %v2062, %v2038
        %v2064 = vsel %vm1977, %v414, %v2061
        %v2065 = vsel %vm1977, 0, %v2063
        %v2066 = vcosq.f32.pop %v2064
        %v2067 = vsinq.f32.pop %v2064
        %vm2068 = vweird.f32 %v414
        %v2069 = vadd.s32 %v2065, 3
        %v2070 = vand.u32 %v2069, 3
        %vm2071 = vcmp.lt.s32.totalorder %v2070, 2
        %vm2072 = vcmp.eq.s32.totalorder %v2070, 0
        %v2073 = vxor.u32 %v2067, 2147483648
        %v2074 = vsel %vm2072, %v2066, %v2073
        %vm2075 = vcmp.eq.s32.totalorder %v2070, 2
        %v2076 = vxor.u32 %v2066, 2147483648
        %v2077 = vsel %vm2075, %v2076, %v2067
        %v2078 = vsel %vm2071, %v2074, %v2077
        %v2079 = vsel %vm2068, nan, %v2078
        %s2080 = scalar_lea.vmem [#allocation2], 64
        %v2081 = vld [vmem:[%s2080] sm:$0xff]
        %v2082 = vld [vmem:[%s2080 + $0x8] sm:$0xff]
        %v2083 = vld [vmem:[%s2080 + $0x10] sm:$0xff]
        %v2084 = vld [vmem:[%s2080 + $0x18] sm:$0xff]
        %v2085 = vld [vmem:[%s2080 + $0x20] sm:$0xff]
        %v2086 = vld [vmem:[%s2080 + $0x28] sm:$0xff]
        %v2087 = vld [vmem:[%s2080 + $0x30] sm:$0xff]
        %v2088 = vld [vmem:[%s2080 + $0x38] sm:$0xff]
        %2089 = vset.pattern.permute.xlu0 1
        %2090 = vperm.xlu0 %2089, %v214
        %v2091 = vpop.permute.xlu0 %2090
        %2093 = vset.pattern.permute.xlu0 1
        %2094 = vperm.xlu0 %2093, %v215
        %v2095 = vpop.permute.xlu0 %2094
        %2097 = vset.pattern.permute.xlu0 1
        %2098 = vperm.xlu0 %2097, %v216
        %v2099 = vpop.permute.xlu0 %2098
        %2101 = vset.pattern.permute.xlu0 1
        %2102 = vperm.xlu0 %2101, %v217
        %v2103 = vpop.permute.xlu0 %2102
        %2105 = vset.pattern.permute.xlu0 1
        %2106 = vperm.xlu0 %2105, %v218
        %v2107 = vpop.permute.xlu0 %2106
        %2109 = vset.pattern.permute.xlu0 1
        %2110 = vperm.xlu0 %2109, %v219
        %v2111 = vpop.permute.xlu0 %2110
        %2113 = vset.pattern.permute.xlu0 1
        %2114 = vperm.xlu0 %2113, %v220
        %v2115 = vpop.permute.xlu0 %2114
        %2117 = vset.pattern.permute.xlu0 1
        %2118 = vperm.xlu0 %2117, %v221
        %v2119 = vpop.permute.xlu0 %2118
        %vm2121 = vcmask 523264
        %v2123 = vsel %vm2121, %v2081, 0
        %v2126 = vsel %vm2121, %v2082, 0
        %v2129 = vsel %vm2121, %v2083, 0
        %v2132 = vsel %vm2121, %v2084, 0
        %v2135 = vsel %vm2121, %v2085, 0
        %v2138 = vsel %vm2121, %v2086, 0
        %v2141 = vsel %vm2121, %v2087, 0
        %v2144 = vsel %vm2121, %v2088, 0
        %2146 = vmatprep.subr.mxu0 0.0
        %2147 = vmatpush1.msra.mxu0 0.0
        %2148 = vmatprep.subr.mxu0 0.0
        %2149 = vmatpush1.msra.mxu0 0.0
        %2150 = vmatprep.subr.mxu0 0.0
        %2151 = vmatpush1.msra.mxu0 0.0
        %2152 = vmatprep.subr.mxu0 0.0
        %2153 = vmatpush1.msra.mxu0 0.0
        %2154 = vmatprep.subr.mxu0 0.0
        %2155 = vmatpush1.msra.mxu0 0.0
        %2156 = vmatprep.subr.mxu0 0.0
        %2157 = vmatpush1.msra.mxu0 0.0
        %2158 = vmatprep.subr.mxu0 0.0
        %2159 = vmatpush1.msra.mxu0 0.0
        %2160 = vmatprep.subr.mxu0 0.0
        %2161 = vmatpush1.msra.mxu0 0.0
        %2162 = vmatprep.subr.mxu0 %v2079
        %2163 = vmatpush1.msra.mxu0 %v1975
        %2164 = vmatprep.subr.mxu0 %v1871
        %2165 = vmatpush1.msra.mxu0 %v1767
        %2166 = vmatprep.subr.mxu0 %v1663
        %2167 = vmatpush1.msra.mxu0 %v1559
        %2168 = vmatprep.subr.mxu0 %v1455
        %2169 = vmatpush1.msra.mxu0 %v1351
        %2170 = vmatprep.subr.mxu0 %v1247
        %2171 = vmatpush1.msra.mxu0 %v1143
        %2172 = vmatprep.subr.mxu0 %v1039
        %2173 = vmatpush1.msra.mxu0 %v935
        %2174 = vmatprep.subr.mxu0 %v831
        %2175 = vmatpush1.msra.mxu0 %v727
        %2176 = vmatprep.subr.mxu0 %v623
        %2177 = vmatpush1.msra.mxu0 %v519
        %2178 = vmatprep.subr.mxu0 0.0
        %2179 = vmatpush2.msra.mxu0 0.0
        %2180 = vmatprep.subr.mxu0 0.0
        %2181 = vmatpush2.msra.mxu0 0.0
        %2182 = vmatprep.subr.mxu0 0.0
        %2183 = vmatpush2.msra.mxu0 0.0
        %2184 = vmatprep.subr.mxu0 0.0
        %2185 = vmatpush2.msra.mxu0 0.0
        %2186 = vmatprep.subr.mxu0 0.0
        %2187 = vmatpush2.msra.mxu0 0.0
        %2188 = vmatprep.subr.mxu0 0.0
        %2189 = vmatpush2.msra.mxu0 0.0
        %2190 = vmatprep.subr.mxu0 0.0
        %2191 = vmatpush2.msra.mxu0 0.0
        %2192 = vmatprep.subr.mxu0 0.0
        %2193 = vmatpush2.msra.mxu0 0.0
        %2194 = vmatprep.subr.mxu0 0.0
        %2195 = vmatpush2.msra.mxu0 0.0
        %2196 = vmatprep.subr.mxu0 0.0
        %2197 = vmatpush2.msra.mxu0 0.0
        %2198 = vmatprep.subr.mxu0 0.0
        %2199 = vmatpush2.msra.mxu0 0.0
        %2200 = vmatprep.subr.mxu0 0.0
        %2201 = vmatpush2.msra.mxu0 0.0
        %2202 = vmatprep.subr.mxu0 0.0
        %2203 = vmatpush2.msra.mxu0 0.0
        %2204 = vmatprep.subr.mxu0 0.0
        %2205 = vmatpush2.msra.mxu0 0.0
        %2206 = vmatprep.subr.mxu0 0.0
        %2207 = vmatpush2.msra.mxu0 0.0
        %2208 = vmatprep.subr.mxu0 0.0
        %2209 = vmatpush2.msra.mxu0 0.0
        %2210 = vmatprep.mubr.f32.mxu0 0.0
        %2211 = vmatmul.mubr.f32.gmra.mxu0 %v2123
        %v2212 = vpop.f32.mrf.mxu0
        %v2213 = vadd.f32 %v2091, %v2212
        %v2214 = vpop.f32.mrf.mxu0
        %v2215 = vadd.f32 %v2091, %v2214
        %2216 = vmatprep.mubr.f32.mxu0 0.0
        %2217 = vmatmul.mubr.f32.gmra.mxu0 %v2126
        %v2218 = vpop.f32.mrf.mxu0
        %v2219 = vadd.f32 %v2095, %v2218
        %v2220 = vpop.f32.mrf.mxu0
        %v2221 = vadd.f32 %v2095, %v2220
        %2222 = vmatprep.mubr.f32.mxu0 0.0
        %2223 = vmatmul.mubr.f32.gmra.mxu0 %v2129
        %v2224 = vpop.f32.mrf.mxu0
        %v2225 = vadd.f32 %v2099, %v2224
        %v2226 = vpop.f32.mrf.mxu0
        %v2227 = vadd.f32 %v2099, %v2226
        %2228 = vmatprep.mubr.f32.mxu0 0.0
        %2229 = vmatmul.mubr.f32.gmra.mxu0 %v2132
        %v2230 = vpop.f32.mrf.mxu0
        %v2231 = vadd.f32 %v2103, %v2230
        %v2232 = vpop.f32.mrf.mxu0
        %v2233 = vadd.f32 %v2103, %v2232
        %2234 = vmatprep.mubr.f32.mxu0 0.0
        %2235 = vmatmul.mubr.f32.gmra.mxu0 %v2135
        %v2236 = vpop.f32.mrf.mxu0
        %v2237 = vadd.f32 %v2107, %v2236
        %v2238 = vpop.f32.mrf.mxu0
        %v2239 = vadd.f32 %v2107, %v2238
        %2240 = vmatprep.mubr.f32.mxu0 0.0
        %2241 = vmatmul.mubr.f32.gmra.mxu0 %v2138
        %v2242 = vpop.f32.mrf.mxu0
        %v2243 = vadd.f32 %v2111, %v2242
        %v2244 = vpop.f32.mrf.mxu0
        %v2245 = vadd.f32 %v2111, %v2244
        %2246 = vmatprep.mubr.f32.mxu0 0.0
        %2247 = vmatmul.mubr.f32.gmra.mxu0 %v2141
        %v2248 = vpop.f32.mrf.mxu0
        %v2249 = vadd.f32 %v2115, %v2248
        %v2250 = vpop.f32.mrf.mxu0
        %v2251 = vadd.f32 %v2115, %v2250
        %2252 = vmatprep.mubr.f32.mxu0 0.0
        %2253 = vmatmul.mubr.f32.gmra.mxu0 %v2144
        %v2254 = vpop.f32.mrf.mxu0
        %v2255 = vadd.f32 %v2119, %v2254
        %v2256 = vpop.f32.mrf.mxu0
        %v2257 = vadd.f32 %v2119, %v2256
        %2258 = vdwg.mxu0
        %v2259 = vand.u32 2147483647, %v2213
        %vm2260 = vcmp.le.f32.partialorder %v2259, 0.7853982
        %vm2261 = vcmp.lt.s32.totalorder %v2213, 0
        %v2262 = vand.u32 %v2213, 2139095040
        %v2263 = vshrl.u32 %v2262, 23
        %v2264 = vsub.s32 %v2263, 127
        %v2265 = vand.u32 2147483647, %v2213
        %v2266 = vand.u32 %v2265, 8388607
        %v2267 = vor.u32 %v2266, 8388608
        %v2268 = vsub.s32 0, %v2267
        %v2269 = vadd.s32 %v2264, 1
        %vm2270 = vcmp.gt.s32.totalorder %v2269, 0
        %v2271 = vsel %vm2270, %v2269, 0
        %v2272 = vshrl.u32 %v2271, 5
        %v2273 = vand.u32 %v2271, 31
        %v2274 = vsub.s32 32, %v2273
        %v2275 = vshrl.u32 683565275, %v2274
        %v2276 = vshll.u32 683565275, %v2273
        %v2277 = vshrl.u32 2475754826, %v2274
        %v2278 = vor.u32 %v2276, %v2277
        %v2279 = vshll.u32 2475754826, %v2273
        %v2280 = vshrl.u32 2131351028, %v2274
        %v2281 = vor.u32 %v2279, %v2280
        %v2282 = vshll.u32 2131351028, %v2273
        %v2283 = vshrl.u32 2102212464, %v2274
        %v2284 = vor.u32 %v2282, %v2283
        %v2285 = vshll.u32 2102212464, %v2273
        %v2286 = vshrl.u32 920167782, %v2274
        %v2287 = vor.u32 %v2285, %v2286
        %v2288 = vshll.u32 920167782, %v2273
        %v2289 = vshrl.u32 1326507024, %v2274
        %v2290 = vor.u32 %v2288, %v2289
        %vm2291 = vcmp.lt.s32.totalorder %v2272, 1
        %vm2292 = vcmp.lt.s32.totalorder %v2272, 2
        %vm2293 = vcmp.lt.s32.totalorder %v2272, 3
        %vm2294 = vcmp.lt.s32.totalorder %v2272, 4
        %v2295 = vsel %vm2291, %v2275, %v2278
        %v2296 = vsel %vm2294, %v2284, 2102212464
        %v2297 = vsel %vm2293, %v2281, %v2296
        %v2298 = vsel %vm2292, %v2295, %v2297
        %v2299 = vsel %vm2291, %v2278, %v2281
        %v2300 = vsel %vm2294, %v2287, 920167782
        %v2301 = vsel %vm2293, %v2284, %v2300
        %v2302 = vsel %vm2292, %v2299, %v2301
        %v2303 = vsel %vm2291, %v2281, %v2284
        %v2304 = vsel %vm2294, %v2290, 1326507024
        %v2305 = vsel %vm2293, %v2287, %v2304
        %v2306 = vsel %vm2292, %v2303, %v2305
        %v2307 = vshll.u32 %v2267, 8
        %v2308 = vmul.u32.u64.compose %v2307, %v2306
        %v2309 = vextract.low.u32 %v2308
        %v2310 = vextract.high.u32 %v2308
        %v2311 = vmul.u32.u64.compose %v2307, %v2302
        %v2312 = vextract.low.u32 %v2311
        %v2313 = vextract.high.u32 %v2311
        %v2314 = vmul.u32 %v2307, %v2298
        %v2315 = vadd.s32 %v2310, %v2312
        %vm2316 = vc.u32 %v2310, %v2312
        %v2317 = vadd.s32 %v2313, 1
        %v2318 = vsel %vm2316, %v2317, %v2313
        %v2319 = vadd.s32 %v2314, %v2318
        %v2320 = vadd.s32 %v2319, 536870912
        %v2321 = vshrl.u32 %v2320, 30
        %v2322 = vshll.u32 %v2321, 30
        %v2323 = vsub.s32 %v2319, %v2322
        %vm2324 = vcmp.lt.s32.totalorder %v2323, 0
        %v2325 = vsub.s32 0, %v2323
        %v2326 = vsel %vm2324, %v2325, %v2323
        %v2327 = vclz %v2326
        %v2328 = vsub.s32 %v2327, 2
        %vm2329 = vcmp.gt.s32.totalorder 0, %v2328
        %v2330 = vsel %vm2329, 0, %v2328
        %v2331 = vsub.s32 32, %v2330
        %v2332 = vshll.u32 %v2323, %v2330
        %v2333 = vshrl.u32 %v2315, %v2331
        %v2334 = vor.u32 %v2332, %v2333
        %v2335 = vsub.s32 4294967266, %v2330
        %v2336 = vadd.s32 %v2335, 127
        %v2337 = vshll.u32 %v2336, 23
        %v2338 = vor.u32 4788187, %v2337
        %v2339 = vand.u32 2147483647, %v2338
        %v2341 = vcvt.s32.f32 %v2334
        %v2342 = vmul.f32 %v2341, %v2339
        %v2343 = vxor.u32 %v2342, 2147483648
        %v2344 = vsel %vm2261, %v2343, %v2342
        %v2345 = vsub.s32 4, %v2321
        %v2346 = vsel %vm2261, %v2345, %v2321
        %v2347 = vsel %vm2260, %v2213, %v2344
        %v2348 = vsel %vm2260, 0, %v2346
        %v2349 = vcosq.f32.pop %v2347
        %v2350 = vsinq.f32.pop %v2347
        %vm2351 = vweird.f32 %v2213
        %v2352 = vadd.s32 %v2348, 3
        %v2353 = vand.u32 %v2352, 3
        %vm2354 = vcmp.lt.s32.totalorder %v2353, 2
        %vm2355 = vcmp.eq.s32.totalorder %v2353, 0
        %v2356 = vxor.u32 %v2350, 2147483648
        %v2357 = vsel %vm2355, %v2349, %v2356
        %vm2358 = vcmp.eq.s32.totalorder %v2353, 2
        %v2359 = vxor.u32 %v2349, 2147483648
        %v2360 = vsel %vm2358, %v2359, %v2350
        %v2361 = vsel %vm2354, %v2357, %v2360
        %v2362 = vsel %vm2351, nan, %v2361
        %v2363 = vand.u32 2147483647, %v2215
        %vm2364 = vcmp.le.f32.partialorder %v2363, 0.7853982
        %vm2365 = vcmp.lt.s32.totalorder %v2215, 0
        %v2366 = vand.u32 %v2215, 2139095040
        %v2367 = vshrl.u32 %v2366, 23
        %v2368 = vsub.s32 %v2367, 127
        %v2369 = vand.u32 2147483647, %v2215
        %v2370 = vand.u32 %v2369, 8388607
        %v2371 = vor.u32 %v2370, 8388608
        %v2372 = vsub.s32 0, %v2371
        %v2373 = vadd.s32 %v2368, 1
        %vm2374 = vcmp.gt.s32.totalorder %v2373, 0
        %v2375 = vsel %vm2374, %v2373, 0
        %v2376 = vshrl.u32 %v2375, 5
        %v2377 = vand.u32 %v2375, 31
        %v2378 = vsub.s32 32, %v2377
        %v2379 = vshrl.u32 683565275, %v2378
        %v2380 = vshll.u32 683565275, %v2377
        %v2381 = vshrl.u32 2475754826, %v2378
        %v2382 = vor.u32 %v2380, %v2381
        %v2383 = vshll.u32 2475754826, %v2377
        %v2384 = vshrl.u32 2131351028, %v2378
        %v2385 = vor.u32 %v2383, %v2384
        %v2386 = vshll.u32 2131351028, %v2377
        %v2387 = vshrl.u32 2102212464, %v2378
        %v2388 = vor.u32 %v2386, %v2387
        %v2389 = vshll.u32 2102212464, %v2377
        %v2390 = vshrl.u32 920167782, %v2378
        %v2391 = vor.u32 %v2389, %v2390
        %v2392 = vshll.u32 920167782, %v2377
        %v2393 = vshrl.u32 1326507024, %v2378
        %v2394 = vor.u32 %v2392, %v2393
        %vm2395 = vcmp.lt.s32.totalorder %v2376, 1
        %vm2396 = vcmp.lt.s32.totalorder %v2376, 2
        %vm2397 = vcmp.lt.s32.totalorder %v2376, 3
        %vm2398 = vcmp.lt.s32.totalorder %v2376, 4
        %v2399 = vsel %vm2395, %v2379, %v2382
        %v2400 = vsel %vm2398, %v2388, 2102212464
        %v2401 = vsel %vm2397, %v2385, %v2400
        %v2402 = vsel %vm2396, %v2399, %v2401
        %v2403 = vsel %vm2395, %v2382, %v2385
        %v2404 = vsel %vm2398, %v2391, 920167782
        %v2405 = vsel %vm2397, %v2388, %v2404
        %v2406 = vsel %vm2396, %v2403, %v2405
        %v2407 = vsel %vm2395, %v2385, %v2388
        %v2408 = vsel %vm2398, %v2394, 1326507024
        %v2409 = vsel %vm2397, %v2391, %v2408
        %v2410 = vsel %vm2396, %v2407, %v2409
        %v2411 = vshll.u32 %v2371, 8
        %v2412 = vmul.u32.u64.compose %v2411, %v2410
        %v2413 = vextract.low.u32 %v2412
        %v2414 = vextract.high.u32 %v2412
        %v2415 = vmul.u32.u64.compose %v2411, %v2406
        %v2416 = vextract.low.u32 %v2415
        %v2417 = vextract.high.u32 %v2415
        %v2418 = vmul.u32 %v2411, %v2402
        %v2419 = vadd.s32 %v2414, %v2416
        %vm2420 = vc.u32 %v2414, %v2416
        %v2421 = vadd.s32 %v2417, 1
        %v2422 = vsel %vm2420, %v2421, %v2417
        %v2423 = vadd.s32 %v2418, %v2422
        %v2424 = vadd.s32 %v2423, 536870912
        %v2425 = vshrl.u32 %v2424, 30
        %v2426 = vshll.u32 %v2425, 30
        %v2427 = vsub.s32 %v2423, %v2426
        %vm2428 = vcmp.lt.s32.totalorder %v2427, 0
        %v2429 = vsub.s32 0, %v2427
        %v2430 = vsel %vm2428, %v2429, %v2427
        %v2431 = vclz %v2430
        %v2432 = vsub.s32 %v2431, 2
        %vm2433 = vcmp.gt.s32.totalorder 0, %v2432
        %v2434 = vsel %vm2433, 0, %v2432
        %v2435 = vsub.s32 32, %v2434
        %v2436 = vshll.u32 %v2427, %v2434
        %v2437 = vshrl.u32 %v2419, %v2435
        %v2438 = vor.u32 %v2436, %v2437
        %v2439 = vsub.s32 4294967266, %v2434
        %v2440 = vadd.s32 %v2439, 127
        %v2441 = vshll.u32 %v2440, 23
        %v2442 = vor.u32 4788187, %v2441
        %v2443 = vand.u32 2147483647, %v2442
        %v2445 = vcvt.s32.f32 %v2438
        %v2446 = vmul.f32 %v2445, %v2443
        %v2447 = vxor.u32 %v2446, 2147483648
        %v2448 = vsel %vm2365, %v2447, %v2446
        %v2449 = vsub.s32 4, %v2425
        %v2450 = vsel %vm2365, %v2449, %v2425
        %v2451 = vsel %vm2364, %v2215, %v2448
        %v2452 = vsel %vm2364, 0, %v2450
        %v2453 = vcosq.f32.pop %v2451
        %v2454 = vsinq.f32.pop %v2451
        %vm2455 = vweird.f32 %v2215
        %v2456 = vadd.s32 %v2452, 3
        %v2457 = vand.u32 %v2456, 3
        %vm2458 = vcmp.lt.s32.totalorder %v2457, 2
        %vm2459 = vcmp.eq.s32.totalorder %v2457, 0
        %v2460 = vxor.u32 %v2454, 2147483648
        %v2461 = vsel %vm2459, %v2453, %v2460
        %vm2462 = vcmp.eq.s32.totalorder %v2457, 2
        %v2463 = vxor.u32 %v2453, 2147483648
        %v2464 = vsel %vm2462, %v2463, %v2454
        %v2465 = vsel %vm2458, %v2461, %v2464
        %v2466 = vsel %vm2455, nan, %v2465
        %v2467 = vand.u32 2147483647, %v2219
        %vm2468 = vcmp.le.f32.partialorder %v2467, 0.7853982
        %vm2469 = vcmp.lt.s32.totalorder %v2219, 0
        %v2470 = vand.u32 %v2219, 2139095040
        %v2471 = vshrl.u32 %v2470, 23
        %v2472 = vsub.s32 %v2471, 127
        %v2473 = vand.u32 2147483647, %v2219
        %v2474 = vand.u32 %v2473, 8388607
        %v2475 = vor.u32 %v2474, 8388608
        %v2476 = vsub.s32 0, %v2475
        %v2477 = vadd.s32 %v2472, 1
        %vm2478 = vcmp.gt.s32.totalorder %v2477, 0
        %v2479 = vsel %vm2478, %v2477, 0
        %v2480 = vshrl.u32 %v2479, 5
        %v2481 = vand.u32 %v2479, 31
        %v2482 = vsub.s32 32, %v2481
        %v2483 = vshrl.u32 683565275, %v2482
        %v2484 = vshll.u32 683565275, %v2481
        %v2485 = vshrl.u32 2475754826, %v2482
        %v2486 = vor.u32 %v2484, %v2485
        %v2487 = vshll.u32 2475754826, %v2481
        %v2488 = vshrl.u32 2131351028, %v2482
        %v2489 = vor.u32 %v2487, %v2488
        %v2490 = vshll.u32 2131351028, %v2481
        %v2491 = vshrl.u32 2102212464, %v2482
        %v2492 = vor.u32 %v2490, %v2491
        %v2493 = vshll.u32 2102212464, %v2481
        %v2494 = vshrl.u32 920167782, %v2482
        %v2495 = vor.u32 %v2493, %v2494
        %v2496 = vshll.u32 920167782, %v2481
        %v2497 = vshrl.u32 1326507024, %v2482
        %v2498 = vor.u32 %v2496, %v2497
        %vm2499 = vcmp.lt.s32.totalorder %v2480, 1
        %vm2500 = vcmp.lt.s32.totalorder %v2480, 2
        %vm2501 = vcmp.lt.s32.totalorder %v2480, 3
        %vm2502 = vcmp.lt.s32.totalorder %v2480, 4
        %v2503 = vsel %vm2499, %v2483, %v2486
        %v2504 = vsel %vm2502, %v2492, 2102212464
        %v2505 = vsel %vm2501, %v2489, %v2504
        %v2506 = vsel %vm2500, %v2503, %v2505
        %v2507 = vsel %vm2499, %v2486, %v2489
        %v2508 = vsel %vm2502, %v2495, 920167782
        %v2509 = vsel %vm2501, %v2492, %v2508
        %v2510 = vsel %vm2500, %v2507, %v2509
        %v2511 = vsel %vm2499, %v2489, %v2492
        %v2512 = vsel %vm2502, %v2498, 1326507024
        %v2513 = vsel %vm2501, %v2495, %v2512
        %v2514 = vsel %vm2500, %v2511, %v2513
        %v2515 = vshll.u32 %v2475, 8
        %v2516 = vmul.u32.u64.compose %v2515, %v2514
        %v2517 = vextract.low.u32 %v2516
        %v2518 = vextract.high.u32 %v2516
        %v2519 = vmul.u32.u64.compose %v2515, %v2510
        %v2520 = vextract.low.u32 %v2519
        %v2521 = vextract.high.u32 %v2519
        %v2522 = vmul.u32 %v2515, %v2506
        %v2523 = vadd.s32 %v2518, %v2520
        %vm2524 = vc.u32 %v2518, %v2520
        %v2525 = vadd.s32 %v2521, 1
        %v2526 = vsel %vm2524, %v2525, %v2521
        %v2527 = vadd.s32 %v2522, %v2526
        %v2528 = vadd.s32 %v2527, 536870912
        %v2529 = vshrl.u32 %v2528, 30
        %v2530 = vshll.u32 %v2529, 30
        %v2531 = vsub.s32 %v2527, %v2530
        %vm2532 = vcmp.lt.s32.totalorder %v2531, 0
        %v2533 = vsub.s32 0, %v2531
        %v2534 = vsel %vm2532, %v2533, %v2531
        %v2535 = vclz %v2534
        %v2536 = vsub.s32 %v2535, 2
        %vm2537 = vcmp.gt.s32.totalorder 0, %v2536
        %v2538 = vsel %vm2537, 0, %v2536
        %v2539 = vsub.s32 32, %v2538
        %v2540 = vshll.u32 %v2531, %v2538
        %v2541 = vshrl.u32 %v2523, %v2539
        %v2542 = vor.u32 %v2540, %v2541
        %v2543 = vsub.s32 4294967266, %v2538
        %v2544 = vadd.s32 %v2543, 127
        %v2545 = vshll.u32 %v2544, 23
        %v2546 = vor.u32 4788187, %v2545
        %v2547 = vand.u32 2147483647, %v2546
        %v2549 = vcvt.s32.f32 %v2542
        %v2550 = vmul.f32 %v2549, %v2547
        %v2551 = vxor.u32 %v2550, 2147483648
        %v2552 = vsel %vm2469, %v2551, %v2550
        %v2553 = vsub.s32 4, %v2529
        %v2554 = vsel %vm2469, %v2553, %v2529
        %v2555 = vsel %vm2468, %v2219, %v2552
        %v2556 = vsel %vm2468, 0, %v2554
        %v2557 = vcosq.f32.pop %v2555
        %v2558 = vsinq.f32.pop %v2555
        %vm2559 = vweird.f32 %v2219
        %v2560 = vadd.s32 %v2556, 3
        %v2561 = vand.u32 %v2560, 3
        %vm2562 = vcmp.lt.s32.totalorder %v2561, 2
        %vm2563 = vcmp.eq.s32.totalorder %v2561, 0
        %v2564 = vxor.u32 %v2558, 2147483648
        %v2565 = vsel %vm2563, %v2557, %v2564
        %vm2566 = vcmp.eq.s32.totalorder %v2561, 2
        %v2567 = vxor.u32 %v2557, 2147483648
        %v2568 = vsel %vm2566, %v2567, %v2558
        %v2569 = vsel %vm2562, %v2565, %v2568
        %v2570 = vsel %vm2559, nan, %v2569
        %v2571 = vand.u32 2147483647, %v2221
        %vm2572 = vcmp.le.f32.partialorder %v2571, 0.7853982
        %vm2573 = vcmp.lt.s32.totalorder %v2221, 0
        %v2574 = vand.u32 %v2221, 2139095040
        %v2575 = vshrl.u32 %v2574, 23
        %v2576 = vsub.s32 %v2575, 127
        %v2577 = vand.u32 2147483647, %v2221
        %v2578 = vand.u32 %v2577, 8388607
        %v2579 = vor.u32 %v2578, 8388608
        %v2580 = vsub.s32 0, %v2579
        %v2581 = vadd.s32 %v2576, 1
        %vm2582 = vcmp.gt.s32.totalorder %v2581, 0
        %v2583 = vsel %vm2582, %v2581, 0
        %v2584 = vshrl.u32 %v2583, 5
        %v2585 = vand.u32 %v2583, 31
        %v2586 = vsub.s32 32, %v2585
        %v2587 = vshrl.u32 683565275, %v2586
        %v2588 = vshll.u32 683565275, %v2585
        %v2589 = vshrl.u32 2475754826, %v2586
        %v2590 = vor.u32 %v2588, %v2589
        %v2591 = vshll.u32 2475754826, %v2585
        %v2592 = vshrl.u32 2131351028, %v2586
        %v2593 = vor.u32 %v2591, %v2592
        %v2594 = vshll.u32 2131351028, %v2585
        %v2595 = vshrl.u32 2102212464, %v2586
        %v2596 = vor.u32 %v2594, %v2595
        %v2597 = vshll.u32 2102212464, %v2585
        %v2598 = vshrl.u32 920167782, %v2586
        %v2599 = vor.u32 %v2597, %v2598
        %v2600 = vshll.u32 920167782, %v2585
        %v2601 = vshrl.u32 1326507024, %v2586
        %v2602 = vor.u32 %v2600, %v2601
        %vm2603 = vcmp.lt.s32.totalorder %v2584, 1
        %vm2604 = vcmp.lt.s32.totalorder %v2584, 2
        %vm2605 = vcmp.lt.s32.totalorder %v2584, 3
        %vm2606 = vcmp.lt.s32.totalorder %v2584, 4
        %v2607 = vsel %vm2603, %v2587, %v2590
        %v2608 = vsel %vm2606, %v2596, 2102212464
        %v2609 = vsel %vm2605, %v2593, %v2608
        %v2610 = vsel %vm2604, %v2607, %v2609
        %v2611 = vsel %vm2603, %v2590, %v2593
        %v2612 = vsel %vm2606, %v2599, 920167782
        %v2613 = vsel %vm2605, %v2596, %v2612
        %v2614 = vsel %vm2604, %v2611, %v2613
        %v2615 = vsel %vm2603, %v2593, %v2596
        %v2616 = vsel %vm2606, %v2602, 1326507024
        %v2617 = vsel %vm2605, %v2599, %v2616
        %v2618 = vsel %vm2604, %v2615, %v2617
        %v2619 = vshll.u32 %v2579, 8
        %v2620 = vmul.u32.u64.compose %v2619, %v2618
        %v2621 = vextract.low.u32 %v2620
        %v2622 = vextract.high.u32 %v2620
        %v2623 = vmul.u32.u64.compose %v2619, %v2614
        %v2624 = vextract.low.u32 %v2623
        %v2625 = vextract.high.u32 %v2623
        %v2626 = vmul.u32 %v2619, %v2610
        %v2627 = vadd.s32 %v2622, %v2624
        %vm2628 = vc.u32 %v2622, %v2624
        %v2629 = vadd.s32 %v2625, 1
        %v2630 = vsel %vm2628, %v2629, %v2625
        %v2631 = vadd.s32 %v2626, %v2630
        %v2632 = vadd.s32 %v2631, 536870912
        %v2633 = vshrl.u32 %v2632, 30
        %v2634 = vshll.u32 %v2633, 30
        %v2635 = vsub.s32 %v2631, %v2634
        %vm2636 = vcmp.lt.s32.totalorder %v2635, 0
        %v2637 = vsub.s32 0, %v2635
        %v2638 = vsel %vm2636, %v2637, %v2635
        %v2639 = vclz %v2638
        %v2640 = vsub.s32 %v2639, 2
        %vm2641 = vcmp.gt.s32.totalorder 0, %v2640
        %v2642 = vsel %vm2641, 0, %v2640
        %v2643 = vsub.s32 32, %v2642
        %v2644 = vshll.u32 %v2635, %v2642
        %v2645 = vshrl.u32 %v2627, %v2643
        %v2646 = vor.u32 %v2644, %v2645
        %v2647 = vsub.s32 4294967266, %v2642
        %v2648 = vadd.s32 %v2647, 127
        %v2649 = vshll.u32 %v2648, 23
        %v2650 = vor.u32 4788187, %v2649
        %v2651 = vand.u32 2147483647, %v2650
        %v2653 = vcvt.s32.f32 %v2646
        %v2654 = vmul.f32 %v2653, %v2651
        %v2655 = vxor.u32 %v2654, 2147483648
        %v2656 = vsel %vm2573, %v2655, %v2654
        %v2657 = vsub.s32 4, %v2633
        %v2658 = vsel %vm2573, %v2657, %v2633
        %v2659 = vsel %vm2572, %v2221, %v2656
        %v2660 = vsel %vm2572, 0, %v2658
        %v2661 = vcosq.f32.pop %v2659
        %v2662 = vsinq.f32.pop %v2659
        %vm2663 = vweird.f32 %v2221
        %v2664 = vadd.s32 %v2660, 3
        %v2665 = vand.u32 %v2664, 3
        %vm2666 = vcmp.lt.s32.totalorder %v2665, 2
        %vm2667 = vcmp.eq.s32.totalorder %v2665, 0
        %v2668 = vxor.u32 %v2662, 2147483648
        %v2669 = vsel %vm2667, %v2661, %v2668
        %vm2670 = vcmp.eq.s32.totalorder %v2665, 2
        %v2671 = vxor.u32 %v2661, 2147483648
        %v2672 = vsel %vm2670, %v2671, %v2662
        %v2673 = vsel %vm2666, %v2669, %v2672
        %v2674 = vsel %vm2663, nan, %v2673
        %v2675 = vand.u32 2147483647, %v2225
        %vm2676 = vcmp.le.f32.partialorder %v2675, 0.7853982
        %vm2677 = vcmp.lt.s32.totalorder %v2225, 0
        %v2678 = vand.u32 %v2225, 2139095040
        %v2679 = vshrl.u32 %v2678, 23
        %v2680 = vsub.s32 %v2679, 127
        %v2681 = vand.u32 2147483647, %v2225
        %v2682 = vand.u32 %v2681, 8388607
        %v2683 = vor.u32 %v2682, 8388608
        %v2684 = vsub.s32 0, %v2683
        %v2685 = vadd.s32 %v2680, 1
        %vm2686 = vcmp.gt.s32.totalorder %v2685, 0
        %v2687 = vsel %vm2686, %v2685, 0
        %v2688 = vshrl.u32 %v2687, 5
        %v2689 = vand.u32 %v2687, 31
        %v2690 = vsub.s32 32, %v2689
        %v2691 = vshrl.u32 683565275, %v2690
        %v2692 = vshll.u32 683565275, %v2689
        %v2693 = vshrl.u32 2475754826, %v2690
        %v2694 = vor.u32 %v2692, %v2693
        %v2695 = vshll.u32 2475754826, %v2689
        %v2696 = vshrl.u32 2131351028, %v2690
        %v2697 = vor.u32 %v2695, %v2696
        %v2698 = vshll.u32 2131351028, %v2689
        %v2699 = vshrl.u32 2102212464, %v2690
        %v2700 = vor.u32 %v2698, %v2699
        %v2701 = vshll.u32 2102212464, %v2689
        %v2702 = vshrl.u32 920167782, %v2690
        %v2703 = vor.u32 %v2701, %v2702
        %v2704 = vshll.u32 920167782, %v2689
        %v2705 = vshrl.u32 1326507024, %v2690
        %v2706 = vor.u32 %v2704, %v2705
        %vm2707 = vcmp.lt.s32.totalorder %v2688, 1
        %vm2708 = vcmp.lt.s32.totalorder %v2688, 2
        %vm2709 = vcmp.lt.s32.totalorder %v2688, 3
        %vm2710 = vcmp.lt.s32.totalorder %v2688, 4
        %v2711 = vsel %vm2707, %v2691, %v2694
        %v2712 = vsel %vm2710, %v2700, 2102212464
        %v2713 = vsel %vm2709, %v2697, %v2712
        %v2714 = vsel %vm2708, %v2711, %v2713
        %v2715 = vsel %vm2707, %v2694, %v2697
        %v2716 = vsel %vm2710, %v2703, 920167782
        %v2717 = vsel %vm2709, %v2700, %v2716
        %v2718 = vsel %vm2708, %v2715, %v2717
        %v2719 = vsel %vm2707, %v2697, %v2700
        %v2720 = vsel %vm2710, %v2706, 1326507024
        %v2721 = vsel %vm2709, %v2703, %v2720
        %v2722 = vsel %vm2708, %v2719, %v2721
        %v2723 = vshll.u32 %v2683, 8
        %v2724 = vmul.u32.u64.compose %v2723, %v2722
        %v2725 = vextract.low.u32 %v2724
        %v2726 = vextract.high.u32 %v2724
        %v2727 = vmul.u32.u64.compose %v2723, %v2718
        %v2728 = vextract.low.u32 %v2727
        %v2729 = vextract.high.u32 %v2727
        %v2730 = vmul.u32 %v2723, %v2714
        %v2731 = vadd.s32 %v2726, %v2728
        %vm2732 = vc.u32 %v2726, %v2728
        %v2733 = vadd.s32 %v2729, 1
        %v2734 = vsel %vm2732, %v2733, %v2729
        %v2735 = vadd.s32 %v2730, %v2734
        %v2736 = vadd.s32 %v2735, 536870912
        %v2737 = vshrl.u32 %v2736, 30
        %v2738 = vshll.u32 %v2737, 30
        %v2739 = vsub.s32 %v2735, %v2738
        %vm2740 = vcmp.lt.s32.totalorder %v2739, 0
        %v2741 = vsub.s32 0, %v2739
        %v2742 = vsel %vm2740, %v2741, %v2739
        %v2743 = vclz %v2742
        %v2744 = vsub.s32 %v2743, 2
        %vm2745 = vcmp.gt.s32.totalorder 0, %v2744
        %v2746 = vsel %vm2745, 0, %v2744
        %v2747 = vsub.s32 32, %v2746
        %v2748 = vshll.u32 %v2739, %v2746
        %v2749 = vshrl.u32 %v2731, %v2747
        %v2750 = vor.u32 %v2748, %v2749
        %v2751 = vsub.s32 4294967266, %v2746
        %v2752 = vadd.s32 %v2751, 127
        %v2753 = vshll.u32 %v2752, 23
        %v2754 = vor.u32 4788187, %v2753
        %v2755 = vand.u32 2147483647, %v2754
        %v2757 = vcvt.s32.f32 %v2750
        %v2758 = vmul.f32 %v2757, %v2755
        %v2759 = vxor.u32 %v2758, 2147483648
        %v2760 = vsel %vm2677, %v2759, %v2758
        %v2761 = vsub.s32 4, %v2737
        %v2762 = vsel %vm2677, %v2761, %v2737
        %v2763 = vsel %vm2676, %v2225, %v2760
        %v2764 = vsel %vm2676, 0, %v2762
        %v2765 = vcosq.f32.pop %v2763
        %v2766 = vsinq.f32.pop %v2763
        %vm2767 = vweird.f32 %v2225
        %v2768 = vadd.s32 %v2764, 3
        %v2769 = vand.u32 %v2768, 3
        %vm2770 = vcmp.lt.s32.totalorder %v2769, 2
        %vm2771 = vcmp.eq.s32.totalorder %v2769, 0
        %v2772 = vxor.u32 %v2766, 2147483648
        %v2773 = vsel %vm2771, %v2765, %v2772
        %vm2774 = vcmp.eq.s32.totalorder %v2769, 2
        %v2775 = vxor.u32 %v2765, 2147483648
        %v2776 = vsel %vm2774, %v2775, %v2766
        %v2777 = vsel %vm2770, %v2773, %v2776
        %v2778 = vsel %vm2767, nan, %v2777
        %v2779 = vand.u32 2147483647, %v2227
        %vm2780 = vcmp.le.f32.partialorder %v2779, 0.7853982
        %vm2781 = vcmp.lt.s32.totalorder %v2227, 0
        %v2782 = vand.u32 %v2227, 2139095040
        %v2783 = vshrl.u32 %v2782, 23
        %v2784 = vsub.s32 %v2783, 127
        %v2785 = vand.u32 2147483647, %v2227
        %v2786 = vand.u32 %v2785, 8388607
        %v2787 = vor.u32 %v2786, 8388608
        %v2788 = vsub.s32 0, %v2787
        %v2789 = vadd.s32 %v2784, 1
        %vm2790 = vcmp.gt.s32.totalorder %v2789, 0
        %v2791 = vsel %vm2790, %v2789, 0
        %v2792 = vshrl.u32 %v2791, 5
        %v2793 = vand.u32 %v2791, 31
        %v2794 = vsub.s32 32, %v2793
        %v2795 = vshrl.u32 683565275, %v2794
        %v2796 = vshll.u32 683565275, %v2793
        %v2797 = vshrl.u32 2475754826, %v2794
        %v2798 = vor.u32 %v2796, %v2797
        %v2799 = vshll.u32 2475754826, %v2793
        %v2800 = vshrl.u32 2131351028, %v2794
        %v2801 = vor.u32 %v2799, %v2800
        %v2802 = vshll.u32 2131351028, %v2793
        %v2803 = vshrl.u32 2102212464, %v2794
        %v2804 = vor.u32 %v2802, %v2803
        %v2805 = vshll.u32 2102212464, %v2793
        %v2806 = vshrl.u32 920167782, %v2794
        %v2807 = vor.u32 %v2805, %v2806
        %v2808 = vshll.u32 920167782, %v2793
        %v2809 = vshrl.u32 1326507024, %v2794
        %v2810 = vor.u32 %v2808, %v2809
        %vm2811 = vcmp.lt.s32.totalorder %v2792, 1
        %vm2812 = vcmp.lt.s32.totalorder %v2792, 2
        %vm2813 = vcmp.lt.s32.totalorder %v2792, 3
        %vm2814 = vcmp.lt.s32.totalorder %v2792, 4
        %v2815 = vsel %vm2811, %v2795, %v2798
        %v2816 = vsel %vm2814, %v2804, 2102212464
        %v2817 = vsel %vm2813, %v2801, %v2816
        %v2818 = vsel %vm2812, %v2815, %v2817
        %v2819 = vsel %vm2811, %v2798, %v2801
        %v2820 = vsel %vm2814, %v2807, 920167782
        %v2821 = vsel %vm2813, %v2804, %v2820
        %v2822 = vsel %vm2812, %v2819, %v2821
        %v2823 = vsel %vm2811, %v2801, %v2804
        %v2824 = vsel %vm2814, %v2810, 1326507024
        %v2825 = vsel %vm2813, %v2807, %v2824
        %v2826 = vsel %vm2812, %v2823, %v2825
        %v2827 = vshll.u32 %v2787, 8
        %v2828 = vmul.u32.u64.compose %v2827, %v2826
        %v2829 = vextract.low.u32 %v2828
        %v2830 = vextract.high.u32 %v2828
        %v2831 = vmul.u32.u64.compose %v2827, %v2822
        %v2832 = vextract.low.u32 %v2831
        %v2833 = vextract.high.u32 %v2831
        %v2834 = vmul.u32 %v2827, %v2818
        %v2835 = vadd.s32 %v2830, %v2832
        %vm2836 = vc.u32 %v2830, %v2832
        %v2837 = vadd.s32 %v2833, 1
        %v2838 = vsel %vm2836, %v2837, %v2833
        %v2839 = vadd.s32 %v2834, %v2838
        %v2840 = vadd.s32 %v2839, 536870912
        %v2841 = vshrl.u32 %v2840, 30
        %v2842 = vshll.u32 %v2841, 30
        %v2843 = vsub.s32 %v2839, %v2842
        %vm2844 = vcmp.lt.s32.totalorder %v2843, 0
        %v2845 = vsub.s32 0, %v2843
        %v2846 = vsel %vm2844, %v2845, %v2843
        %v2847 = vclz %v2846
        %v2848 = vsub.s32 %v2847, 2
        %vm2849 = vcmp.gt.s32.totalorder 0, %v2848
        %v2850 = vsel %vm2849, 0, %v2848
        %v2851 = vsub.s32 32, %v2850
        %v2852 = vshll.u32 %v2843, %v2850
        %v2853 = vshrl.u32 %v2835, %v2851
        %v2854 = vor.u32 %v2852, %v2853
        %v2855 = vsub.s32 4294967266, %v2850
        %v2856 = vadd.s32 %v2855, 127
        %v2857 = vshll.u32 %v2856, 23
        %v2858 = vor.u32 4788187, %v2857
        %v2859 = vand.u32 2147483647, %v2858
        %v2861 = vcvt.s32.f32 %v2854
        %v2862 = vmul.f32 %v2861, %v2859
        %v2863 = vxor.u32 %v2862, 2147483648
        %v2864 = vsel %vm2781, %v2863, %v2862
        %v2865 = vsub.s32 4, %v2841
        %v2866 = vsel %vm2781, %v2865, %v2841
        %v2867 = vsel %vm2780, %v2227, %v2864
        %v2868 = vsel %vm2780, 0, %v2866
        %v2869 = vcosq.f32.pop %v2867
        %v2870 = vsinq.f32.pop %v2867
        %vm2871 = vweird.f32 %v2227
        %v2872 = vadd.s32 %v2868, 3
        %v2873 = vand.u32 %v2872, 3
        %vm2874 = vcmp.lt.s32.totalorder %v2873, 2
        %vm2875 = vcmp.eq.s32.totalorder %v2873, 0
        %v2876 = vxor.u32 %v2870, 2147483648
        %v2877 = vsel %vm2875, %v2869, %v2876
        %vm2878 = vcmp.eq.s32.totalorder %v2873, 2
        %v2879 = vxor.u32 %v2869, 2147483648
        %v2880 = vsel %vm2878, %v2879, %v2870
        %v2881 = vsel %vm2874, %v2877, %v2880
        %v2882 = vsel %vm2871, nan, %v2881
        %v2883 = vand.u32 2147483647, %v2231
        %vm2884 = vcmp.le.f32.partialorder %v2883, 0.7853982
        %vm2885 = vcmp.lt.s32.totalorder %v2231, 0
        %v2886 = vand.u32 %v2231, 2139095040
        %v2887 = vshrl.u32 %v2886, 23
        %v2888 = vsub.s32 %v2887, 127
        %v2889 = vand.u32 2147483647, %v2231
        %v2890 = vand.u32 %v2889, 8388607
        %v2891 = vor.u32 %v2890, 8388608
        %v2892 = vsub.s32 0, %v2891
        %v2893 = vadd.s32 %v2888, 1
        %vm2894 = vcmp.gt.s32.totalorder %v2893, 0
        %v2895 = vsel %vm2894, %v2893, 0
        %v2896 = vshrl.u32 %v2895, 5
        %v2897 = vand.u32 %v2895, 31
        %v2898 = vsub.s32 32, %v2897
        %v2899 = vshrl.u32 683565275, %v2898
        %v2900 = vshll.u32 683565275, %v2897
        %v2901 = vshrl.u32 2475754826, %v2898
        %v2902 = vor.u32 %v2900, %v2901
        %v2903 = vshll.u32 2475754826, %v2897
        %v2904 = vshrl.u32 2131351028, %v2898
        %v2905 = vor.u32 %v2903, %v2904
        %v2906 = vshll.u32 2131351028, %v2897
        %v2907 = vshrl.u32 2102212464, %v2898
        %v2908 = vor.u32 %v2906, %v2907
        %v2909 = vshll.u32 2102212464, %v2897
        %v2910 = vshrl.u32 920167782, %v2898
        %v2911 = vor.u32 %v2909, %v2910
        %v2912 = vshll.u32 920167782, %v2897
        %v2913 = vshrl.u32 1326507024, %v2898
        %v2914 = vor.u32 %v2912, %v2913
        %vm2915 = vcmp.lt.s32.totalorder %v2896, 1
        %vm2916 = vcmp.lt.s32.totalorder %v2896, 2
        %vm2917 = vcmp.lt.s32.totalorder %v2896, 3
        %vm2918 = vcmp.lt.s32.totalorder %v2896, 4
        %v2919 = vsel %vm2915, %v2899, %v2902
        %v2920 = vsel %vm2918, %v2908, 2102212464
        %v2921 = vsel %vm2917, %v2905, %v2920
        %v2922 = vsel %vm2916, %v2919, %v2921
        %v2923 = vsel %vm2915, %v2902, %v2905
        %v2924 = vsel %vm2918, %v2911, 920167782
        %v2925 = vsel %vm2917, %v2908, %v2924
        %v2926 = vsel %vm2916, %v2923, %v2925
        %v2927 = vsel %vm2915, %v2905, %v2908
        %v2928 = vsel %vm2918, %v2914, 1326507024
        %v2929 = vsel %vm2917, %v2911, %v2928
        %v2930 = vsel %vm2916, %v2927, %v2929
        %v2931 = vshll.u32 %v2891, 8
        %v2932 = vmul.u32.u64.compose %v2931, %v2930
        %v2933 = vextract.low.u32 %v2932
        %v2934 = vextract.high.u32 %v2932
        %v2935 = vmul.u32.u64.compose %v2931, %v2926
        %v2936 = vextract.low.u32 %v2935
        %v2937 = vextract.high.u32 %v2935
        %v2938 = vmul.u32 %v2931, %v2922
        %v2939 = vadd.s32 %v2934, %v2936
        %vm2940 = vc.u32 %v2934, %v2936
        %v2941 = vadd.s32 %v2937, 1
        %v2942 = vsel %vm2940, %v2941, %v2937
        %v2943 = vadd.s32 %v2938, %v2942
        %v2944 = vadd.s32 %v2943, 536870912
        %v2945 = vshrl.u32 %v2944, 30
        %v2946 = vshll.u32 %v2945, 30
        %v2947 = vsub.s32 %v2943, %v2946
        %vm2948 = vcmp.lt.s32.totalorder %v2947, 0
        %v2949 = vsub.s32 0, %v2947
        %v2950 = vsel %vm2948, %v2949, %v2947
        %v2951 = vclz %v2950
        %v2952 = vsub.s32 %v2951, 2
        %vm2953 = vcmp.gt.s32.totalorder 0, %v2952
        %v2954 = vsel %vm2953, 0, %v2952
        %v2955 = vsub.s32 32, %v2954
        %v2956 = vshll.u32 %v2947, %v2954
        %v2957 = vshrl.u32 %v2939, %v2955
        %v2958 = vor.u32 %v2956, %v2957
        %v2959 = vsub.s32 4294967266, %v2954
        %v2960 = vadd.s32 %v2959, 127
        %v2961 = vshll.u32 %v2960, 23
        %v2962 = vor.u32 4788187, %v2961
        %v2963 = vand.u32 2147483647, %v2962
        %v2965 = vcvt.s32.f32 %v2958
        %v2966 = vmul.f32 %v2965, %v2963
        %v2967 = vxor.u32 %v2966, 2147483648
        %v2968 = vsel %vm2885, %v2967, %v2966
        %v2969 = vsub.s32 4, %v2945
        %v2970 = vsel %vm2885, %v2969, %v2945
        %v2971 = vsel %vm2884, %v2231, %v2968
        %v2972 = vsel %vm2884, 0, %v2970
        %v2973 = vcosq.f32.pop %v2971
        %v2974 = vsinq.f32.pop %v2971
        %vm2975 = vweird.f32 %v2231
        %v2976 = vadd.s32 %v2972, 3
        %v2977 = vand.u32 %v2976, 3
        %vm2978 = vcmp.lt.s32.totalorder %v2977, 2
        %vm2979 = vcmp.eq.s32.totalorder %v2977, 0
        %v2980 = vxor.u32 %v2974, 2147483648
        %v2981 = vsel %vm2979, %v2973, %v2980
        %vm2982 = vcmp.eq.s32.totalorder %v2977, 2
        %v2983 = vxor.u32 %v2973, 2147483648
        %v2984 = vsel %vm2982, %v2983, %v2974
        %v2985 = vsel %vm2978, %v2981, %v2984
        %v2986 = vsel %vm2975, nan, %v2985
        %v2987 = vand.u32 2147483647, %v2233
        %vm2988 = vcmp.le.f32.partialorder %v2987, 0.7853982
        %vm2989 = vcmp.lt.s32.totalorder %v2233, 0
        %v2990 = vand.u32 %v2233, 2139095040
        %v2991 = vshrl.u32 %v2990, 23
        %v2992 = vsub.s32 %v2991, 127
        %v2993 = vand.u32 2147483647, %v2233
        %v2994 = vand.u32 %v2993, 8388607
        %v2995 = vor.u32 %v2994, 8388608
        %v2996 = vsub.s32 0, %v2995
        %v2997 = vadd.s32 %v2992, 1
        %vm2998 = vcmp.gt.s32.totalorder %v2997, 0
        %v2999 = vsel %vm2998, %v2997, 0
        %v3000 = vshrl.u32 %v2999, 5
        %v3001 = vand.u32 %v2999, 31
        %v3002 = vsub.s32 32, %v3001
        %v3003 = vshrl.u32 683565275, %v3002
        %v3004 = vshll.u32 683565275, %v3001
        %v3005 = vshrl.u32 2475754826, %v3002
        %v3006 = vor.u32 %v3004, %v3005
        %v3007 = vshll.u32 2475754826, %v3001
        %v3008 = vshrl.u32 2131351028, %v3002
        %v3009 = vor.u32 %v3007, %v3008
        %v3010 = vshll.u32 2131351028, %v3001
        %v3011 = vshrl.u32 2102212464, %v3002
        %v3012 = vor.u32 %v3010, %v3011
        %v3013 = vshll.u32 2102212464, %v3001
        %v3014 = vshrl.u32 920167782, %v3002
        %v3015 = vor.u32 %v3013, %v3014
        %v3016 = vshll.u32 920167782, %v3001
        %v3017 = vshrl.u32 1326507024, %v3002
        %v3018 = vor.u32 %v3016, %v3017
        %vm3019 = vcmp.lt.s32.totalorder %v3000, 1
        %vm3020 = vcmp.lt.s32.totalorder %v3000, 2
        %vm3021 = vcmp.lt.s32.totalorder %v3000, 3
        %vm3022 = vcmp.lt.s32.totalorder %v3000, 4
        %v3023 = vsel %vm3019, %v3003, %v3006
        %v3024 = vsel %vm3022, %v3012, 2102212464
        %v3025 = vsel %vm3021, %v3009, %v3024
        %v3026 = vsel %vm3020, %v3023, %v3025
        %v3027 = vsel %vm3019, %v3006, %v3009
        %v3028 = vsel %vm3022, %v3015, 920167782
        %v3029 = vsel %vm3021, %v3012, %v3028
        %v3030 = vsel %vm3020, %v3027, %v3029
        %v3031 = vsel %vm3019, %v3009, %v3012
        %v3032 = vsel %vm3022, %v3018, 1326507024
        %v3033 = vsel %vm3021, %v3015, %v3032
        %v3034 = vsel %vm3020, %v3031, %v3033
        %v3035 = vshll.u32 %v2995, 8
        %v3036 = vmul.u32.u64.compose %v3035, %v3034
        %v3037 = vextract.low.u32 %v3036
        %v3038 = vextract.high.u32 %v3036
        %v3039 = vmul.u32.u64.compose %v3035, %v3030
        %v3040 = vextract.low.u32 %v3039
        %v3041 = vextract.high.u32 %v3039
        %v3042 = vmul.u32 %v3035, %v3026
        %v3043 = vadd.s32 %v3038, %v3040
        %vm3044 = vc.u32 %v3038, %v3040
        %v3045 = vadd.s32 %v3041, 1
        %v3046 = vsel %vm3044, %v3045, %v3041
        %v3047 = vadd.s32 %v3042, %v3046
        %v3048 = vadd.s32 %v3047, 536870912
        %v3049 = vshrl.u32 %v3048, 30
        %v3050 = vshll.u32 %v3049, 30
        %v3051 = vsub.s32 %v3047, %v3050
        %vm3052 = vcmp.lt.s32.totalorder %v3051, 0
        %v3053 = vsub.s32 0, %v3051
        %v3054 = vsel %vm3052, %v3053, %v3051
        %v3055 = vclz %v3054
        %v3056 = vsub.s32 %v3055, 2
        %vm3057 = vcmp.gt.s32.totalorder 0, %v3056
        %v3058 = vsel %vm3057, 0, %v3056
        %v3059 = vsub.s32 32, %v3058
        %v3060 = vshll.u32 %v3051, %v3058
        %v3061 = vshrl.u32 %v3043, %v3059
        %v3062 = vor.u32 %v3060, %v3061
        %v3063 = vsub.s32 4294967266, %v3058
        %v3064 = vadd.s32 %v3063, 127
        %v3065 = vshll.u32 %v3064, 23
        %v3066 = vor.u32 4788187, %v3065
        %v3067 = vand.u32 2147483647, %v3066
        %v3069 = vcvt.s32.f32 %v3062
        %v3070 = vmul.f32 %v3069, %v3067
        %v3071 = vxor.u32 %v3070, 2147483648
        %v3072 = vsel %vm2989, %v3071, %v3070
        %v3073 = vsub.s32 4, %v3049
        %v3074 = vsel %vm2989, %v3073, %v3049
        %v3075 = vsel %vm2988, %v2233, %v3072
        %v3076 = vsel %vm2988, 0, %v3074
        %v3077 = vcosq.f32.pop %v3075
        %v3078 = vsinq.f32.pop %v3075
        %vm3079 = vweird.f32 %v2233
        %v3080 = vadd.s32 %v3076, 3
        %v3081 = vand.u32 %v3080, 3
        %vm3082 = vcmp.lt.s32.totalorder %v3081, 2
        %vm3083 = vcmp.eq.s32.totalorder %v3081, 0
        %v3084 = vxor.u32 %v3078, 2147483648
        %v3085 = vsel %vm3083, %v3077, %v3084
        %vm3086 = vcmp.eq.s32.totalorder %v3081, 2
        %v3087 = vxor.u32 %v3077, 2147483648
        %v3088 = vsel %vm3086, %v3087, %v3078
        %v3089 = vsel %vm3082, %v3085, %v3088
        %v3090 = vsel %vm3079, nan, %v3089
        %v3091 = vand.u32 2147483647, %v2237
        %vm3092 = vcmp.le.f32.partialorder %v3091, 0.7853982
        %vm3093 = vcmp.lt.s32.totalorder %v2237, 0
        %v3094 = vand.u32 %v2237, 2139095040
        %v3095 = vshrl.u32 %v3094, 23
        %v3096 = vsub.s32 %v3095, 127
        %v3097 = vand.u32 2147483647, %v2237
        %v3098 = vand.u32 %v3097, 8388607
        %v3099 = vor.u32 %v3098, 8388608
        %v3100 = vsub.s32 0, %v3099
        %v3101 = vadd.s32 %v3096, 1
        %vm3102 = vcmp.gt.s32.totalorder %v3101, 0
        %v3103 = vsel %vm3102, %v3101, 0
        %v3104 = vshrl.u32 %v3103, 5
        %v3105 = vand.u32 %v3103, 31
        %v3106 = vsub.s32 32, %v3105
        %v3107 = vshrl.u32 683565275, %v3106
        %v3108 = vshll.u32 683565275, %v3105
        %v3109 = vshrl.u32 2475754826, %v3106
        %v3110 = vor.u32 %v3108, %v3109
        %v3111 = vshll.u32 2475754826, %v3105
        %v3112 = vshrl.u32 2131351028, %v3106
        %v3113 = vor.u32 %v3111, %v3112
        %v3114 = vshll.u32 2131351028, %v3105
        %v3115 = vshrl.u32 2102212464, %v3106
        %v3116 = vor.u32 %v3114, %v3115
        %v3117 = vshll.u32 2102212464, %v3105
        %v3118 = vshrl.u32 920167782, %v3106
        %v3119 = vor.u32 %v3117, %v3118
        %v3120 = vshll.u32 920167782, %v3105
        %v3121 = vshrl.u32 1326507024, %v3106
        %v3122 = vor.u32 %v3120, %v3121
        %vm3123 = vcmp.lt.s32.totalorder %v3104, 1
        %vm3124 = vcmp.lt.s32.totalorder %v3104, 2
        %vm3125 = vcmp.lt.s32.totalorder %v3104, 3
        %vm3126 = vcmp.lt.s32.totalorder %v3104, 4
        %v3127 = vsel %vm3123, %v3107, %v3110
        %v3128 = vsel %vm3126, %v3116, 2102212464
        %v3129 = vsel %vm3125, %v3113, %v3128
        %v3130 = vsel %vm3124, %v3127, %v3129
        %v3131 = vsel %vm3123, %v3110, %v3113
        %v3132 = vsel %vm3126, %v3119, 920167782
        %v3133 = vsel %vm3125, %v3116, %v3132
        %v3134 = vsel %vm3124, %v3131, %v3133
        %v3135 = vsel %vm3123, %v3113, %v3116
        %v3136 = vsel %vm3126, %v3122, 1326507024
        %v3137 = vsel %vm3125, %v3119, %v3136
        %v3138 = vsel %vm3124, %v3135, %v3137
        %v3139 = vshll.u32 %v3099, 8
        %v3140 = vmul.u32.u64.compose %v3139, %v3138
        %v3141 = vextract.low.u32 %v3140
        %v3142 = vextract.high.u32 %v3140
        %v3143 = vmul.u32.u64.compose %v3139, %v3134
        %v3144 = vextract.low.u32 %v3143
        %v3145 = vextract.high.u32 %v3143
        %v3146 = vmul.u32 %v3139, %v3130
        %v3147 = vadd.s32 %v3142, %v3144
        %vm3148 = vc.u32 %v3142, %v3144
        %v3149 = vadd.s32 %v3145, 1
        %v3150 = vsel %vm3148, %v3149, %v3145
        %v3151 = vadd.s32 %v3146, %v3150
        %v3152 = vadd.s32 %v3151, 536870912
        %v3153 = vshrl.u32 %v3152, 30
        %v3154 = vshll.u32 %v3153, 30
        %v3155 = vsub.s32 %v3151, %v3154
        %vm3156 = vcmp.lt.s32.totalorder %v3155, 0
        %v3157 = vsub.s32 0, %v3155
        %v3158 = vsel %vm3156, %v3157, %v3155
        %v3159 = vclz %v3158
        %v3160 = vsub.s32 %v3159, 2
        %vm3161 = vcmp.gt.s32.totalorder 0, %v3160
        %v3162 = vsel %vm3161, 0, %v3160
        %v3163 = vsub.s32 32, %v3162
        %v3164 = vshll.u32 %v3155, %v3162
        %v3165 = vshrl.u32 %v3147, %v3163
        %v3166 = vor.u32 %v3164, %v3165
        %v3167 = vsub.s32 4294967266, %v3162
        %v3168 = vadd.s32 %v3167, 127
        %v3169 = vshll.u32 %v3168, 23
        %v3170 = vor.u32 4788187, %v3169
        %v3171 = vand.u32 2147483647, %v3170
        %v3173 = vcvt.s32.f32 %v3166
        %v3174 = vmul.f32 %v3173, %v3171
        %v3175 = vxor.u32 %v3174, 2147483648
        %v3176 = vsel %vm3093, %v3175, %v3174
        %v3177 = vsub.s32 4, %v3153
        %v3178 = vsel %vm3093, %v3177, %v3153
        %v3179 = vsel %vm3092, %v2237, %v3176
        %v3180 = vsel %vm3092, 0, %v3178
        %v3181 = vcosq.f32.pop %v3179
        %v3182 = vsinq.f32.pop %v3179
        %vm3183 = vweird.f32 %v2237
        %v3184 = vadd.s32 %v3180, 3
        %v3185 = vand.u32 %v3184, 3
        %vm3186 = vcmp.lt.s32.totalorder %v3185, 2
        %vm3187 = vcmp.eq.s32.totalorder %v3185, 0
        %v3188 = vxor.u32 %v3182, 2147483648
        %v3189 = vsel %vm3187, %v3181, %v3188
        %vm3190 = vcmp.eq.s32.totalorder %v3185, 2
        %v3191 = vxor.u32 %v3181, 2147483648
        %v3192 = vsel %vm3190, %v3191, %v3182
        %v3193 = vsel %vm3186, %v3189, %v3192
        %v3194 = vsel %vm3183, nan, %v3193
        %v3195 = vand.u32 2147483647, %v2239
        %vm3196 = vcmp.le.f32.partialorder %v3195, 0.7853982
        %vm3197 = vcmp.lt.s32.totalorder %v2239, 0
        %v3198 = vand.u32 %v2239, 2139095040
        %v3199 = vshrl.u32 %v3198, 23
        %v3200 = vsub.s32 %v3199, 127
        %v3201 = vand.u32 2147483647, %v2239
        %v3202 = vand.u32 %v3201, 8388607
        %v3203 = vor.u32 %v3202, 8388608
        %v3204 = vsub.s32 0, %v3203
        %v3205 = vadd.s32 %v3200, 1
        %vm3206 = vcmp.gt.s32.totalorder %v3205, 0
        %v3207 = vsel %vm3206, %v3205, 0
        %v3208 = vshrl.u32 %v3207, 5
        %v3209 = vand.u32 %v3207, 31
        %v3210 = vsub.s32 32, %v3209
        %v3211 = vshrl.u32 683565275, %v3210
        %v3212 = vshll.u32 683565275, %v3209
        %v3213 = vshrl.u32 2475754826, %v3210
        %v3214 = vor.u32 %v3212, %v3213
        %v3215 = vshll.u32 2475754826, %v3209
        %v3216 = vshrl.u32 2131351028, %v3210
        %v3217 = vor.u32 %v3215, %v3216
        %v3218 = vshll.u32 2131351028, %v3209
        %v3219 = vshrl.u32 2102212464, %v3210
        %v3220 = vor.u32 %v3218, %v3219
        %v3221 = vshll.u32 2102212464, %v3209
        %v3222 = vshrl.u32 920167782, %v3210
        %v3223 = vor.u32 %v3221, %v3222
        %v3224 = vshll.u32 920167782, %v3209
        %v3225 = vshrl.u32 1326507024, %v3210
        %v3226 = vor.u32 %v3224, %v3225
        %vm3227 = vcmp.lt.s32.totalorder %v3208, 1
        %vm3228 = vcmp.lt.s32.totalorder %v3208, 2
        %vm3229 = vcmp.lt.s32.totalorder %v3208, 3
        %vm3230 = vcmp.lt.s32.totalorder %v3208, 4
        %v3231 = vsel %vm3227, %v3211, %v3214
        %v3232 = vsel %vm3230, %v3220, 2102212464
        %v3233 = vsel %vm3229, %v3217, %v3232
        %v3234 = vsel %vm3228, %v3231, %v3233
        %v3235 = vsel %vm3227, %v3214, %v3217
        %v3236 = vsel %vm3230, %v3223, 920167782
        %v3237 = vsel %vm3229, %v3220, %v3236
        %v3238 = vsel %vm3228, %v3235, %v3237
        %v3239 = vsel %vm3227, %v3217, %v3220
        %v3240 = vsel %vm3230, %v3226, 1326507024
        %v3241 = vsel %vm3229, %v3223, %v3240
        %v3242 = vsel %vm3228, %v3239, %v3241
        %v3243 = vshll.u32 %v3203, 8
        %v3244 = vmul.u32.u64.compose %v3243, %v3242
        %v3245 = vextract.low.u32 %v3244
        %v3246 = vextract.high.u32 %v3244
        %v3247 = vmul.u32.u64.compose %v3243, %v3238
        %v3248 = vextract.low.u32 %v3247
        %v3249 = vextract.high.u32 %v3247
        %v3250 = vmul.u32 %v3243, %v3234
        %v3251 = vadd.s32 %v3246, %v3248
        %vm3252 = vc.u32 %v3246, %v3248
        %v3253 = vadd.s32 %v3249, 1
        %v3254 = vsel %vm3252, %v3253, %v3249
        %v3255 = vadd.s32 %v3250, %v3254
        %v3256 = vadd.s32 %v3255, 536870912
        %v3257 = vshrl.u32 %v3256, 30
        %v3258 = vshll.u32 %v3257, 30
        %v3259 = vsub.s32 %v3255, %v3258
        %vm3260 = vcmp.lt.s32.totalorder %v3259, 0
        %v3261 = vsub.s32 0, %v3259
        %v3262 = vsel %vm3260, %v3261, %v3259
        %v3263 = vclz %v3262
        %v3264 = vsub.s32 %v3263, 2
        %vm3265 = vcmp.gt.s32.totalorder 0, %v3264
        %v3266 = vsel %vm3265, 0, %v3264
        %v3267 = vsub.s32 32, %v3266
        %v3268 = vshll.u32 %v3259, %v3266
        %v3269 = vshrl.u32 %v3251, %v3267
        %v3270 = vor.u32 %v3268, %v3269
        %v3271 = vsub.s32 4294967266, %v3266
        %v3272 = vadd.s32 %v3271, 127
        %v3273 = vshll.u32 %v3272, 23
        %v3274 = vor.u32 4788187, %v3273
        %v3275 = vand.u32 2147483647, %v3274
        %v3277 = vcvt.s32.f32 %v3270
        %v3278 = vmul.f32 %v3277, %v3275
        %v3279 = vxor.u32 %v3278, 2147483648
        %v3280 = vsel %vm3197, %v3279, %v3278
        %v3281 = vsub.s32 4, %v3257
        %v3282 = vsel %vm3197, %v3281, %v3257
        %v3283 = vsel %vm3196, %v2239, %v3280
        %v3284 = vsel %vm3196, 0, %v3282
        %v3285 = vcosq.f32.pop %v3283
        %v3286 = vsinq.f32.pop %v3283
        %vm3287 = vweird.f32 %v2239
        %v3288 = vadd.s32 %v3284, 3
        %v3289 = vand.u32 %v3288, 3
        %vm3290 = vcmp.lt.s32.totalorder %v3289, 2
        %vm3291 = vcmp.eq.s32.totalorder %v3289, 0
        %v3292 = vxor.u32 %v3286, 2147483648
        %v3293 = vsel %vm3291, %v3285, %v3292
        %vm3294 = vcmp.eq.s32.totalorder %v3289, 2
        %v3295 = vxor.u32 %v3285, 2147483648
        %v3296 = vsel %vm3294, %v3295, %v3286
        %v3297 = vsel %vm3290, %v3293, %v3296
        %v3298 = vsel %vm3287, nan, %v3297
        %v3299 = vand.u32 2147483647, %v2243
        %vm3300 = vcmp.le.f32.partialorder %v3299, 0.7853982
        %vm3301 = vcmp.lt.s32.totalorder %v2243, 0
        %v3302 = vand.u32 %v2243, 2139095040
        %v3303 = vshrl.u32 %v3302, 23
        %v3304 = vsub.s32 %v3303, 127
        %v3305 = vand.u32 2147483647, %v2243
        %v3306 = vand.u32 %v3305, 8388607
        %v3307 = vor.u32 %v3306, 8388608
        %v3308 = vsub.s32 0, %v3307
        %v3309 = vadd.s32 %v3304, 1
        %vm3310 = vcmp.gt.s32.totalorder %v3309, 0
        %v3311 = vsel %vm3310, %v3309, 0
        %v3312 = vshrl.u32 %v3311, 5
        %v3313 = vand.u32 %v3311, 31
        %v3314 = vsub.s32 32, %v3313
        %v3315 = vshrl.u32 683565275, %v3314
        %v3316 = vshll.u32 683565275, %v3313
        %v3317 = vshrl.u32 2475754826, %v3314
        %v3318 = vor.u32 %v3316, %v3317
        %v3319 = vshll.u32 2475754826, %v3313
        %v3320 = vshrl.u32 2131351028, %v3314
        %v3321 = vor.u32 %v3319, %v3320
        %v3322 = vshll.u32 2131351028, %v3313
        %v3323 = vshrl.u32 2102212464, %v3314
        %v3324 = vor.u32 %v3322, %v3323
        %v3325 = vshll.u32 2102212464, %v3313
        %v3326 = vshrl.u32 920167782, %v3314
        %v3327 = vor.u32 %v3325, %v3326
        %v3328 = vshll.u32 920167782, %v3313
        %v3329 = vshrl.u32 1326507024, %v3314
        %v3330 = vor.u32 %v3328, %v3329
        %vm3331 = vcmp.lt.s32.totalorder %v3312, 1
        %vm3332 = vcmp.lt.s32.totalorder %v3312, 2
        %vm3333 = vcmp.lt.s32.totalorder %v3312, 3
        %vm3334 = vcmp.lt.s32.totalorder %v3312, 4
        %v3335 = vsel %vm3331, %v3315, %v3318
        %v3336 = vsel %vm3334, %v3324, 2102212464
        %v3337 = vsel %vm3333, %v3321, %v3336
        %v3338 = vsel %vm3332, %v3335, %v3337
        %v3339 = vsel %vm3331, %v3318, %v3321
        %v3340 = vsel %vm3334, %v3327, 920167782
        %v3341 = vsel %vm3333, %v3324, %v3340
        %v3342 = vsel %vm3332, %v3339, %v3341
        %v3343 = vsel %vm3331, %v3321, %v3324
        %v3344 = vsel %vm3334, %v3330, 1326507024
        %v3345 = vsel %vm3333, %v3327, %v3344
        %v3346 = vsel %vm3332, %v3343, %v3345
        %v3347 = vshll.u32 %v3307, 8
        %v3348 = vmul.u32.u64.compose %v3347, %v3346
        %v3349 = vextract.low.u32 %v3348
        %v3350 = vextract.high.u32 %v3348
        %v3351 = vmul.u32.u64.compose %v3347, %v3342
        %v3352 = vextract.low.u32 %v3351
        %v3353 = vextract.high.u32 %v3351
        %v3354 = vmul.u32 %v3347, %v3338
        %v3355 = vadd.s32 %v3350, %v3352
        %vm3356 = vc.u32 %v3350, %v3352
        %v3357 = vadd.s32 %v3353, 1
        %v3358 = vsel %vm3356, %v3357, %v3353
        %v3359 = vadd.s32 %v3354, %v3358
        %v3360 = vadd.s32 %v3359, 536870912
        %v3361 = vshrl.u32 %v3360, 30
        %v3362 = vshll.u32 %v3361, 30
        %v3363 = vsub.s32 %v3359, %v3362
        %vm3364 = vcmp.lt.s32.totalorder %v3363, 0
        %v3365 = vsub.s32 0, %v3363
        %v3366 = vsel %vm3364, %v3365, %v3363
        %v3367 = vclz %v3366
        %v3368 = vsub.s32 %v3367, 2
        %vm3369 = vcmp.gt.s32.totalorder 0, %v3368
        %v3370 = vsel %vm3369, 0, %v3368
        %v3371 = vsub.s32 32, %v3370
        %v3372 = vshll.u32 %v3363, %v3370
        %v3373 = vshrl.u32 %v3355, %v3371
        %v3374 = vor.u32 %v3372, %v3373
        %v3375 = vsub.s32 4294967266, %v3370
        %v3376 = vadd.s32 %v3375, 127
        %v3377 = vshll.u32 %v3376, 23
        %v3378 = vor.u32 4788187, %v3377
        %v3379 = vand.u32 2147483647, %v3378
        %v3381 = vcvt.s32.f32 %v3374
        %v3382 = vmul.f32 %v3381, %v3379
        %v3383 = vxor.u32 %v3382, 2147483648
        %v3384 = vsel %vm3301, %v3383, %v3382
        %v3385 = vsub.s32 4, %v3361
        %v3386 = vsel %vm3301, %v3385, %v3361
        %v3387 = vsel %vm3300, %v2243, %v3384
        %v3388 = vsel %vm3300, 0, %v3386
        %v3389 = vcosq.f32.pop %v3387
        %v3390 = vsinq.f32.pop %v3387
        %vm3391 = vweird.f32 %v2243
        %v3392 = vadd.s32 %v3388, 3
        %v3393 = vand.u32 %v3392, 3
        %vm3394 = vcmp.lt.s32.totalorder %v3393, 2
        %vm3395 = vcmp.eq.s32.totalorder %v3393, 0
        %v3396 = vxor.u32 %v3390, 2147483648
        %v3397 = vsel %vm3395, %v3389, %v3396
        %vm3398 = vcmp.eq.s32.totalorder %v3393, 2
        %v3399 = vxor.u32 %v3389, 2147483648
        %v3400 = vsel %vm3398, %v3399, %v3390
        %v3401 = vsel %vm3394, %v3397, %v3400
        %v3402 = vsel %vm3391, nan, %v3401
        %v3403 = vand.u32 2147483647, %v2245
        %vm3404 = vcmp.le.f32.partialorder %v3403, 0.7853982
        %vm3405 = vcmp.lt.s32.totalorder %v2245, 0
        %v3406 = vand.u32 %v2245, 2139095040
        %v3407 = vshrl.u32 %v3406, 23
        %v3408 = vsub.s32 %v3407, 127
        %v3409 = vand.u32 2147483647, %v2245
        %v3410 = vand.u32 %v3409, 8388607
        %v3411 = vor.u32 %v3410, 8388608
        %v3412 = vsub.s32 0, %v3411
        %v3413 = vadd.s32 %v3408, 1
        %vm3414 = vcmp.gt.s32.totalorder %v3413, 0
        %v3415 = vsel %vm3414, %v3413, 0
        %v3416 = vshrl.u32 %v3415, 5
        %v3417 = vand.u32 %v3415, 31
        %v3418 = vsub.s32 32, %v3417
        %v3419 = vshrl.u32 683565275, %v3418
        %v3420 = vshll.u32 683565275, %v3417
        %v3421 = vshrl.u32 2475754826, %v3418
        %v3422 = vor.u32 %v3420, %v3421
        %v3423 = vshll.u32 2475754826, %v3417
        %v3424 = vshrl.u32 2131351028, %v3418
        %v3425 = vor.u32 %v3423, %v3424
        %v3426 = vshll.u32 2131351028, %v3417
        %v3427 = vshrl.u32 2102212464, %v3418
        %v3428 = vor.u32 %v3426, %v3427
        %v3429 = vshll.u32 2102212464, %v3417
        %v3430 = vshrl.u32 920167782, %v3418
        %v3431 = vor.u32 %v3429, %v3430
        %v3432 = vshll.u32 920167782, %v3417
        %v3433 = vshrl.u32 1326507024, %v3418
        %v3434 = vor.u32 %v3432, %v3433
        %vm3435 = vcmp.lt.s32.totalorder %v3416, 1
        %vm3436 = vcmp.lt.s32.totalorder %v3416, 2
        %vm3437 = vcmp.lt.s32.totalorder %v3416, 3
        %vm3438 = vcmp.lt.s32.totalorder %v3416, 4
        %v3439 = vsel %vm3435, %v3419, %v3422
        %v3440 = vsel %vm3438, %v3428, 2102212464
        %v3441 = vsel %vm3437, %v3425, %v3440
        %v3442 = vsel %vm3436, %v3439, %v3441
        %v3443 = vsel %vm3435, %v3422, %v3425
        %v3444 = vsel %vm3438, %v3431, 920167782
        %v3445 = vsel %vm3437, %v3428, %v3444
        %v3446 = vsel %vm3436, %v3443, %v3445
        %v3447 = vsel %vm3435, %v3425, %v3428
        %v3448 = vsel %vm3438, %v3434, 1326507024
        %v3449 = vsel %vm3437, %v3431, %v3448
        %v3450 = vsel %vm3436, %v3447, %v3449
        %v3451 = vshll.u32 %v3411, 8
        %v3452 = vmul.u32.u64.compose %v3451, %v3450
        %v3453 = vextract.low.u32 %v3452
        %v3454 = vextract.high.u32 %v3452
        %v3455 = vmul.u32.u64.compose %v3451, %v3446
        %v3456 = vextract.low.u32 %v3455
        %v3457 = vextract.high.u32 %v3455
        %v3458 = vmul.u32 %v3451, %v3442
        %v3459 = vadd.s32 %v3454, %v3456
        %vm3460 = vc.u32 %v3454, %v3456
        %v3461 = vadd.s32 %v3457, 1
        %v3462 = vsel %vm3460, %v3461, %v3457
        %v3463 = vadd.s32 %v3458, %v3462
        %v3464 = vadd.s32 %v3463, 536870912
        %v3465 = vshrl.u32 %v3464, 30
        %v3466 = vshll.u32 %v3465, 30
        %v3467 = vsub.s32 %v3463, %v3466
        %vm3468 = vcmp.lt.s32.totalorder %v3467, 0
        %v3469 = vsub.s32 0, %v3467
        %v3470 = vsel %vm3468, %v3469, %v3467
        %v3471 = vclz %v3470
        %v3472 = vsub.s32 %v3471, 2
        %vm3473 = vcmp.gt.s32.totalorder 0, %v3472
        %v3474 = vsel %vm3473, 0, %v3472
        %v3475 = vsub.s32 32, %v3474
        %v3476 = vshll.u32 %v3467, %v3474
        %v3477 = vshrl.u32 %v3459, %v3475
        %v3478 = vor.u32 %v3476, %v3477
        %v3479 = vsub.s32 4294967266, %v3474
        %v3480 = vadd.s32 %v3479, 127
        %v3481 = vshll.u32 %v3480, 23
        %v3482 = vor.u32 4788187, %v3481
        %v3483 = vand.u32 2147483647, %v3482
        %v3485 = vcvt.s32.f32 %v3478
        %v3486 = vmul.f32 %v3485, %v3483
        %v3487 = vxor.u32 %v3486, 2147483648
        %v3488 = vsel %vm3405, %v3487, %v3486
        %v3489 = vsub.s32 4, %v3465
        %v3490 = vsel %vm3405, %v3489, %v3465
        %v3491 = vsel %vm3404, %v2245, %v3488
        %v3492 = vsel %vm3404, 0, %v3490
        %v3493 = vcosq.f32.pop %v3491
        %v3494 = vsinq.f32.pop %v3491
        %vm3495 = vweird.f32 %v2245
        %v3496 = vadd.s32 %v3492, 3
        %v3497 = vand.u32 %v3496, 3
        %vm3498 = vcmp.lt.s32.totalorder %v3497, 2
        %vm3499 = vcmp.eq.s32.totalorder %v3497, 0
        %v3500 = vxor.u32 %v3494, 2147483648
        %v3501 = vsel %vm3499, %v3493, %v3500
        %vm3502 = vcmp.eq.s32.totalorder %v3497, 2
        %v3503 = vxor.u32 %v3493, 2147483648
        %v3504 = vsel %vm3502, %v3503, %v3494
        %v3505 = vsel %vm3498, %v3501, %v3504
        %v3506 = vsel %vm3495, nan, %v3505
        %v3507 = vand.u32 2147483647, %v2249
        %vm3508 = vcmp.le.f32.partialorder %v3507, 0.7853982
        %vm3509 = vcmp.lt.s32.totalorder %v2249, 0
        %v3510 = vand.u32 %v2249, 2139095040
        %v3511 = vshrl.u32 %v3510, 23
        %v3512 = vsub.s32 %v3511, 127
        %v3513 = vand.u32 2147483647, %v2249
        %v3514 = vand.u32 %v3513, 8388607
        %v3515 = vor.u32 %v3514, 8388608
        %v3516 = vsub.s32 0, %v3515
        %v3517 = vadd.s32 %v3512, 1
        %vm3518 = vcmp.gt.s32.totalorder %v3517, 0
        %v3519 = vsel %vm3518, %v3517, 0
        %v3520 = vshrl.u32 %v3519, 5
        %v3521 = vand.u32 %v3519, 31
        %v3522 = vsub.s32 32, %v3521
        %v3523 = vshrl.u32 683565275, %v3522
        %v3524 = vshll.u32 683565275, %v3521
        %v3525 = vshrl.u32 2475754826, %v3522
        %v3526 = vor.u32 %v3524, %v3525
        %v3527 = vshll.u32 2475754826, %v3521
        %v3528 = vshrl.u32 2131351028, %v3522
        %v3529 = vor.u32 %v3527, %v3528
        %v3530 = vshll.u32 2131351028, %v3521
        %v3531 = vshrl.u32 2102212464, %v3522
        %v3532 = vor.u32 %v3530, %v3531
        %v3533 = vshll.u32 2102212464, %v3521
        %v3534 = vshrl.u32 920167782, %v3522
        %v3535 = vor.u32 %v3533, %v3534
        %v3536 = vshll.u32 920167782, %v3521
        %v3537 = vshrl.u32 1326507024, %v3522
        %v3538 = vor.u32 %v3536, %v3537
        %vm3539 = vcmp.lt.s32.totalorder %v3520, 1
        %vm3540 = vcmp.lt.s32.totalorder %v3520, 2
        %vm3541 = vcmp.lt.s32.totalorder %v3520, 3
        %vm3542 = vcmp.lt.s32.totalorder %v3520, 4
        %v3543 = vsel %vm3539, %v3523, %v3526
        %v3544 = vsel %vm3542, %v3532, 2102212464
        %v3545 = vsel %vm3541, %v3529, %v3544
        %v3546 = vsel %vm3540, %v3543, %v3545
        %v3547 = vsel %vm3539, %v3526, %v3529
        %v3548 = vsel %vm3542, %v3535, 920167782
        %v3549 = vsel %vm3541, %v3532, %v3548
        %v3550 = vsel %vm3540, %v3547, %v3549
        %v3551 = vsel %vm3539, %v3529, %v3532
        %v3552 = vsel %vm3542, %v3538, 1326507024
        %v3553 = vsel %vm3541, %v3535, %v3552
        %v3554 = vsel %vm3540, %v3551, %v3553
        %v3555 = vshll.u32 %v3515, 8
        %v3556 = vmul.u32.u64.compose %v3555, %v3554
        %v3557 = vextract.low.u32 %v3556
        %v3558 = vextract.high.u32 %v3556
        %v3559 = vmul.u32.u64.compose %v3555, %v3550
        %v3560 = vextract.low.u32 %v3559
        %v3561 = vextract.high.u32 %v3559
        %v3562 = vmul.u32 %v3555, %v3546
        %v3563 = vadd.s32 %v3558, %v3560
        %vm3564 = vc.u32 %v3558, %v3560
        %v3565 = vadd.s32 %v3561, 1
        %v3566 = vsel %vm3564, %v3565, %v3561
        %v3567 = vadd.s32 %v3562, %v3566
        %v3568 = vadd.s32 %v3567, 536870912
        %v3569 = vshrl.u32 %v3568, 30
        %v3570 = vshll.u32 %v3569, 30
        %v3571 = vsub.s32 %v3567, %v3570
        %vm3572 = vcmp.lt.s32.totalorder %v3571, 0
        %v3573 = vsub.s32 0, %v3571
        %v3574 = vsel %vm3572, %v3573, %v3571
        %v3575 = vclz %v3574
        %v3576 = vsub.s32 %v3575, 2
        %vm3577 = vcmp.gt.s32.totalorder 0, %v3576
        %v3578 = vsel %vm3577, 0, %v3576
        %v3579 = vsub.s32 32, %v3578
        %v3580 = vshll.u32 %v3571, %v3578
        %v3581 = vshrl.u32 %v3563, %v3579
        %v3582 = vor.u32 %v3580, %v3581
        %v3583 = vsub.s32 4294967266, %v3578
        %v3584 = vadd.s32 %v3583, 127
        %v3585 = vshll.u32 %v3584, 23
        %v3586 = vor.u32 4788187, %v3585
        %v3587 = vand.u32 2147483647, %v3586
        %v3589 = vcvt.s32.f32 %v3582
        %v3590 = vmul.f32 %v3589, %v3587
        %v3591 = vxor.u32 %v3590, 2147483648
        %v3592 = vsel %vm3509, %v3591, %v3590
        %v3593 = vsub.s32 4, %v3569
        %v3594 = vsel %vm3509, %v3593, %v3569
        %v3595 = vsel %vm3508, %v2249, %v3592
        %v3596 = vsel %vm3508, 0, %v3594
        %v3597 = vcosq.f32.pop %v3595
        %v3598 = vsinq.f32.pop %v3595
        %vm3599 = vweird.f32 %v2249
        %v3600 = vadd.s32 %v3596, 3
        %v3601 = vand.u32 %v3600, 3
        %vm3602 = vcmp.lt.s32.totalorder %v3601, 2
        %vm3603 = vcmp.eq.s32.totalorder %v3601, 0
        %v3604 = vxor.u32 %v3598, 2147483648
        %v3605 = vsel %vm3603, %v3597, %v3604
        %vm3606 = vcmp.eq.s32.totalorder %v3601, 2
        %v3607 = vxor.u32 %v3597, 2147483648
        %v3608 = vsel %vm3606, %v3607, %v3598
        %v3609 = vsel %vm3602, %v3605, %v3608
        %v3610 = vsel %vm3599, nan, %v3609
        %v3611 = vand.u32 2147483647, %v2251
        %vm3612 = vcmp.le.f32.partialorder %v3611, 0.7853982
        %vm3613 = vcmp.lt.s32.totalorder %v2251, 0
        %v3614 = vand.u32 %v2251, 2139095040
        %v3615 = vshrl.u32 %v3614, 23
        %v3616 = vsub.s32 %v3615, 127
        %v3617 = vand.u32 2147483647, %v2251
        %v3618 = vand.u32 %v3617, 8388607
        %v3619 = vor.u32 %v3618, 8388608
        %v3620 = vsub.s32 0, %v3619
        %v3621 = vadd.s32 %v3616, 1
        %vm3622 = vcmp.gt.s32.totalorder %v3621, 0
        %v3623 = vsel %vm3622, %v3621, 0
        %v3624 = vshrl.u32 %v3623, 5
        %v3625 = vand.u32 %v3623, 31
        %v3626 = vsub.s32 32, %v3625
        %v3627 = vshrl.u32 683565275, %v3626
        %v3628 = vshll.u32 683565275, %v3625
        %v3629 = vshrl.u32 2475754826, %v3626
        %v3630 = vor.u32 %v3628, %v3629
        %v3631 = vshll.u32 2475754826, %v3625
        %v3632 = vshrl.u32 2131351028, %v3626
        %v3633 = vor.u32 %v3631, %v3632
        %v3634 = vshll.u32 2131351028, %v3625
        %v3635 = vshrl.u32 2102212464, %v3626
        %v3636 = vor.u32 %v3634, %v3635
        %v3637 = vshll.u32 2102212464, %v3625
        %v3638 = vshrl.u32 920167782, %v3626
        %v3639 = vor.u32 %v3637, %v3638
        %v3640 = vshll.u32 920167782, %v3625
        %v3641 = vshrl.u32 1326507024, %v3626
        %v3642 = vor.u32 %v3640, %v3641
        %vm3643 = vcmp.lt.s32.totalorder %v3624, 1
        %vm3644 = vcmp.lt.s32.totalorder %v3624, 2
        %vm3645 = vcmp.lt.s32.totalorder %v3624, 3
        %vm3646 = vcmp.lt.s32.totalorder %v3624, 4
        %v3647 = vsel %vm3643, %v3627, %v3630
        %v3648 = vsel %vm3646, %v3636, 2102212464
        %v3649 = vsel %vm3645, %v3633, %v3648
        %v3650 = vsel %vm3644, %v3647, %v3649
        %v3651 = vsel %vm3643, %v3630, %v3633
        %v3652 = vsel %vm3646, %v3639, 920167782
        %v3653 = vsel %vm3645, %v3636, %v3652
        %v3654 = vsel %vm3644, %v3651, %v3653
        %v3655 = vsel %vm3643, %v3633, %v3636
        %v3656 = vsel %vm3646, %v3642, 1326507024
        %v3657 = vsel %vm3645, %v3639, %v3656
        %v3658 = vsel %vm3644, %v3655, %v3657
        %v3659 = vshll.u32 %v3619, 8
        %v3660 = vmul.u32.u64.compose %v3659, %v3658
        %v3661 = vextract.low.u32 %v3660
        %v3662 = vextract.high.u32 %v3660
        %v3663 = vmul.u32.u64.compose %v3659, %v3654
        %v3664 = vextract.low.u32 %v3663
        %v3665 = vextract.high.u32 %v3663
        %v3666 = vmul.u32 %v3659, %v3650
        %v3667 = vadd.s32 %v3662, %v3664
        %vm3668 = vc.u32 %v3662, %v3664
        %v3669 = vadd.s32 %v3665, 1
        %v3670 = vsel %vm3668, %v3669, %v3665
        %v3671 = vadd.s32 %v3666, %v3670
        %v3672 = vadd.s32 %v3671, 536870912
        %v3673 = vshrl.u32 %v3672, 30
        %v3674 = vshll.u32 %v3673, 30
        %v3675 = vsub.s32 %v3671, %v3674
        %vm3676 = vcmp.lt.s32.totalorder %v3675, 0
        %v3677 = vsub.s32 0, %v3675
        %v3678 = vsel %vm3676, %v3677, %v3675
        %v3679 = vclz %v3678
        %v3680 = vsub.s32 %v3679, 2
        %vm3681 = vcmp.gt.s32.totalorder 0, %v3680
        %v3682 = vsel %vm3681, 0, %v3680
        %v3683 = vsub.s32 32, %v3682
        %v3684 = vshll.u32 %v3675, %v3682
        %v3685 = vshrl.u32 %v3667, %v3683
        %v3686 = vor.u32 %v3684, %v3685
        %v3687 = vsub.s32 4294967266, %v3682
        %v3688 = vadd.s32 %v3687, 127
        %v3689 = vshll.u32 %v3688, 23
        %v3690 = vor.u32 4788187, %v3689
        %v3691 = vand.u32 2147483647, %v3690
        %v3693 = vcvt.s32.f32 %v3686
        %v3694 = vmul.f32 %v3693, %v3691
        %v3695 = vxor.u32 %v3694, 2147483648
        %v3696 = vsel %vm3613, %v3695, %v3694
        %v3697 = vsub.s32 4, %v3673
        %v3698 = vsel %vm3613, %v3697, %v3673
        %v3699 = vsel %vm3612, %v2251, %v3696
        %v3700 = vsel %vm3612, 0, %v3698
        %v3701 = vcosq.f32.pop %v3699
        %v3702 = vsinq.f32.pop %v3699
        %vm3703 = vweird.f32 %v2251
        %v3704 = vadd.s32 %v3700, 3
        %v3705 = vand.u32 %v3704, 3
        %vm3706 = vcmp.lt.s32.totalorder %v3705, 2
        %vm3707 = vcmp.eq.s32.totalorder %v3705, 0
        %v3708 = vxor.u32 %v3702, 2147483648
        %v3709 = vsel %vm3707, %v3701, %v3708
        %vm3710 = vcmp.eq.s32.totalorder %v3705, 2
        %v3711 = vxor.u32 %v3701, 2147483648
        %v3712 = vsel %vm3710, %v3711, %v3702
        %v3713 = vsel %vm3706, %v3709, %v3712
        %v3714 = vsel %vm3703, nan, %v3713
        %v3715 = vand.u32 2147483647, %v2255
        %vm3716 = vcmp.le.f32.partialorder %v3715, 0.7853982
        %vm3717 = vcmp.lt.s32.totalorder %v2255, 0
        %v3718 = vand.u32 %v2255, 2139095040
        %v3719 = vshrl.u32 %v3718, 23
        %v3720 = vsub.s32 %v3719, 127
        %v3721 = vand.u32 2147483647, %v2255
        %v3722 = vand.u32 %v3721, 8388607
        %v3723 = vor.u32 %v3722, 8388608
        %v3724 = vsub.s32 0, %v3723
        %v3725 = vadd.s32 %v3720, 1
        %vm3726 = vcmp.gt.s32.totalorder %v3725, 0
        %v3727 = vsel %vm3726, %v3725, 0
        %v3728 = vshrl.u32 %v3727, 5
        %v3729 = vand.u32 %v3727, 31
        %v3730 = vsub.s32 32, %v3729
        %v3731 = vshrl.u32 683565275, %v3730
        %v3732 = vshll.u32 683565275, %v3729
        %v3733 = vshrl.u32 2475754826, %v3730
        %v3734 = vor.u32 %v3732, %v3733
        %v3735 = vshll.u32 2475754826, %v3729
        %v3736 = vshrl.u32 2131351028, %v3730
        %v3737 = vor.u32 %v3735, %v3736
        %v3738 = vshll.u32 2131351028, %v3729
        %v3739 = vshrl.u32 2102212464, %v3730
        %v3740 = vor.u32 %v3738, %v3739
        %v3741 = vshll.u32 2102212464, %v3729
        %v3742 = vshrl.u32 920167782, %v3730
        %v3743 = vor.u32 %v3741, %v3742
        %v3744 = vshll.u32 920167782, %v3729
        %v3745 = vshrl.u32 1326507024, %v3730
        %v3746 = vor.u32 %v3744, %v3745
        %vm3747 = vcmp.lt.s32.totalorder %v3728, 1
        %vm3748 = vcmp.lt.s32.totalorder %v3728, 2
        %vm3749 = vcmp.lt.s32.totalorder %v3728, 3
        %vm3750 = vcmp.lt.s32.totalorder %v3728, 4
        %v3751 = vsel %vm3747, %v3731, %v3734
        %v3752 = vsel %vm3750, %v3740, 2102212464
        %v3753 = vsel %vm3749, %v3737, %v3752
        %v3754 = vsel %vm3748, %v3751, %v3753
        %v3755 = vsel %vm3747, %v3734, %v3737
        %v3756 = vsel %vm3750, %v3743, 920167782
        %v3757 = vsel %vm3749, %v3740, %v3756
        %v3758 = vsel %vm3748, %v3755, %v3757
        %v3759 = vsel %vm3747, %v3737, %v3740
        %v3760 = vsel %vm3750, %v3746, 1326507024
        %v3761 = vsel %vm3749, %v3743, %v3760
        %v3762 = vsel %vm3748, %v3759, %v3761
        %v3763 = vshll.u32 %v3723, 8
        %v3764 = vmul.u32.u64.compose %v3763, %v3762
        %v3765 = vextract.low.u32 %v3764
        %v3766 = vextract.high.u32 %v3764
        %v3767 = vmul.u32.u64.compose %v3763, %v3758
        %v3768 = vextract.low.u32 %v3767
        %v3769 = vextract.high.u32 %v3767
        %v3770 = vmul.u32 %v3763, %v3754
        %v3771 = vadd.s32 %v3766, %v3768
        %vm3772 = vc.u32 %v3766, %v3768
        %v3773 = vadd.s32 %v3769, 1
        %v3774 = vsel %vm3772, %v3773, %v3769
        %v3775 = vadd.s32 %v3770, %v3774
        %v3776 = vadd.s32 %v3775, 536870912
        %v3777 = vshrl.u32 %v3776, 30
        %v3778 = vshll.u32 %v3777, 30
        %v3779 = vsub.s32 %v3775, %v3778
        %vm3780 = vcmp.lt.s32.totalorder %v3779, 0
        %v3781 = vsub.s32 0, %v3779
        %v3782 = vsel %vm3780, %v3781, %v3779
        %v3783 = vclz %v3782
        %v3784 = vsub.s32 %v3783, 2
        %vm3785 = vcmp.gt.s32.totalorder 0, %v3784
        %v3786 = vsel %vm3785, 0, %v3784
        %v3787 = vsub.s32 32, %v3786
        %v3788 = vshll.u32 %v3779, %v3786
        %v3789 = vshrl.u32 %v3771, %v3787
        %v3790 = vor.u32 %v3788, %v3789
        %v3791 = vsub.s32 4294967266, %v3786
        %v3792 = vadd.s32 %v3791, 127
        %v3793 = vshll.u32 %v3792, 23
        %v3794 = vor.u32 4788187, %v3793
        %v3795 = vand.u32 2147483647, %v3794
        %v3797 = vcvt.s32.f32 %v3790
        %v3798 = vmul.f32 %v3797, %v3795
        %v3799 = vxor.u32 %v3798, 2147483648
        %v3800 = vsel %vm3717, %v3799, %v3798
        %v3801 = vsub.s32 4, %v3777
        %v3802 = vsel %vm3717, %v3801, %v3777
        %v3803 = vsel %vm3716, %v2255, %v3800
        %v3804 = vsel %vm3716, 0, %v3802
        %v3805 = vcosq.f32.pop %v3803
        %v3806 = vsinq.f32.pop %v3803
        %vm3807 = vweird.f32 %v2255
        %v3808 = vadd.s32 %v3804, 3
        %v3809 = vand.u32 %v3808, 3
        %vm3810 = vcmp.lt.s32.totalorder %v3809, 2
        %vm3811 = vcmp.eq.s32.totalorder %v3809, 0
        %v3812 = vxor.u32 %v3806, 2147483648
        %v3813 = vsel %vm3811, %v3805, %v3812
        %vm3814 = vcmp.eq.s32.totalorder %v3809, 2
        %v3815 = vxor.u32 %v3805, 2147483648
        %v3816 = vsel %vm3814, %v3815, %v3806
        %v3817 = vsel %vm3810, %v3813, %v3816
        %v3818 = vsel %vm3807, nan, %v3817
        %v3819 = vand.u32 2147483647, %v2257
        %vm3820 = vcmp.le.f32.partialorder %v3819, 0.7853982
        %vm3821 = vcmp.lt.s32.totalorder %v2257, 0
        %v3822 = vand.u32 %v2257, 2139095040
        %v3823 = vshrl.u32 %v3822, 23
        %v3824 = vsub.s32 %v3823, 127
        %v3825 = vand.u32 2147483647, %v2257
        %v3826 = vand.u32 %v3825, 8388607
        %v3827 = vor.u32 %v3826, 8388608
        %v3828 = vsub.s32 0, %v3827
        %v3829 = vadd.s32 %v3824, 1
        %vm3830 = vcmp.gt.s32.totalorder %v3829, 0
        %v3831 = vsel %vm3830, %v3829, 0
        %v3832 = vshrl.u32 %v3831, 5
        %v3833 = vand.u32 %v3831, 31
        %v3834 = vsub.s32 32, %v3833
        %v3835 = vshrl.u32 683565275, %v3834
        %v3836 = vshll.u32 683565275, %v3833
        %v3837 = vshrl.u32 2475754826, %v3834
        %v3838 = vor.u32 %v3836, %v3837
        %v3839 = vshll.u32 2475754826, %v3833
        %v3840 = vshrl.u32 2131351028, %v3834
        %v3841 = vor.u32 %v3839, %v3840
        %v3842 = vshll.u32 2131351028, %v3833
        %v3843 = vshrl.u32 2102212464, %v3834
        %v3844 = vor.u32 %v3842, %v3843
        %v3845 = vshll.u32 2102212464, %v3833
        %v3846 = vshrl.u32 920167782, %v3834
        %v3847 = vor.u32 %v3845, %v3846
        %v3848 = vshll.u32 920167782, %v3833
        %v3849 = vshrl.u32 1326507024, %v3834
        %v3850 = vor.u32 %v3848, %v3849
        %vm3851 = vcmp.lt.s32.totalorder %v3832, 1
        %vm3852 = vcmp.lt.s32.totalorder %v3832, 2
        %vm3853 = vcmp.lt.s32.totalorder %v3832, 3
        %vm3854 = vcmp.lt.s32.totalorder %v3832, 4
        %v3855 = vsel %vm3851, %v3835, %v3838
        %v3856 = vsel %vm3854, %v3844, 2102212464
        %v3857 = vsel %vm3853, %v3841, %v3856
        %v3858 = vsel %vm3852, %v3855, %v3857
        %v3859 = vsel %vm3851, %v3838, %v3841
        %v3860 = vsel %vm3854, %v3847, 920167782
        %v3861 = vsel %vm3853, %v3844, %v3860
        %v3862 = vsel %vm3852, %v3859, %v3861
        %v3863 = vsel %vm3851, %v3841, %v3844
        %v3864 = vsel %vm3854, %v3850, 1326507024
        %v3865 = vsel %vm3853, %v3847, %v3864
        %v3866 = vsel %vm3852, %v3863, %v3865
        %v3867 = vshll.u32 %v3827, 8
        %v3868 = vmul.u32.u64.compose %v3867, %v3866
        %v3869 = vextract.low.u32 %v3868
        %v3870 = vextract.high.u32 %v3868
        %v3871 = vmul.u32.u64.compose %v3867, %v3862
        %v3872 = vextract.low.u32 %v3871
        %v3873 = vextract.high.u32 %v3871
        %v3874 = vmul.u32 %v3867, %v3858
        %v3875 = vadd.s32 %v3870, %v3872
        %vm3876 = vc.u32 %v3870, %v3872
        %v3877 = vadd.s32 %v3873, 1
        %v3878 = vsel %vm3876, %v3877, %v3873
        %v3879 = vadd.s32 %v3874, %v3878
        %v3880 = vadd.s32 %v3879, 536870912
        %v3881 = vshrl.u32 %v3880, 30
        %v3882 = vshll.u32 %v3881, 30
        %v3883 = vsub.s32 %v3879, %v3882
        %vm3884 = vcmp.lt.s32.totalorder %v3883, 0
        %v3885 = vsub.s32 0, %v3883
        %v3886 = vsel %vm3884, %v3885, %v3883
        %v3887 = vclz %v3886
        %v3888 = vsub.s32 %v3887, 2
        %vm3889 = vcmp.gt.s32.totalorder 0, %v3888
        %v3890 = vsel %vm3889, 0, %v3888
        %v3891 = vsub.s32 32, %v3890
        %v3892 = vshll.u32 %v3883, %v3890
        %v3893 = vshrl.u32 %v3875, %v3891
        %v3894 = vor.u32 %v3892, %v3893
        %v3895 = vsub.s32 4294967266, %v3890
        %v3896 = vadd.s32 %v3895, 127
        %v3897 = vshll.u32 %v3896, 23
        %v3898 = vor.u32 4788187, %v3897
        %v3899 = vand.u32 2147483647, %v3898
        %v3901 = vcvt.s32.f32 %v3894
        %v3902 = vmul.f32 %v3901, %v3899
        %v3903 = vxor.u32 %v3902, 2147483648
        %v3904 = vsel %vm3821, %v3903, %v3902
        %v3905 = vsub.s32 4, %v3881
        %v3906 = vsel %vm3821, %v3905, %v3881
        %v3907 = vsel %vm3820, %v2257, %v3904
        %v3908 = vsel %vm3820, 0, %v3906
        %v3909 = vcosq.f32.pop %v3907
        %v3910 = vsinq.f32.pop %v3907
        %vm3911 = vweird.f32 %v2257
        %v3912 = vadd.s32 %v3908, 3
        %v3913 = vand.u32 %v3912, 3
        %vm3914 = vcmp.lt.s32.totalorder %v3913, 2
        %vm3915 = vcmp.eq.s32.totalorder %v3913, 0
        %v3916 = vxor.u32 %v3910, 2147483648
        %v3917 = vsel %vm3915, %v3909, %v3916
        %vm3918 = vcmp.eq.s32.totalorder %v3913, 2
        %v3919 = vxor.u32 %v3909, 2147483648
        %v3920 = vsel %vm3918, %v3919, %v3910
        %v3921 = vsel %vm3914, %v3917, %v3920
        %v3922 = vsel %vm3911, nan, %v3921
        %s3923 = scalar_lea.vmem [#allocation2], 128
        %v3924 = vld [vmem:[%s3923] sm:$0xff]
        %v3925 = vld [vmem:[%s3923 + $0x8] sm:$0xff]
        %v3926 = vld [vmem:[%s3923 + $0x10] sm:$0xff]
        %v3927 = vld [vmem:[%s3923 + $0x18] sm:$0xff]
        %v3928 = vld [vmem:[%s3923 + $0x20] sm:$0xff]
        %v3929 = vld [vmem:[%s3923 + $0x28] sm:$0xff]
        %v3930 = vld [vmem:[%s3923 + $0x30] sm:$0xff]
        %v3931 = vld [vmem:[%s3923 + $0x38] sm:$0xff]
        %3932 = vset.pattern.permute.xlu0 2
        %3933 = vperm.xlu0 %3932, %v214
        %v3934 = vpop.permute.xlu0 %3933
        %3936 = vset.pattern.permute.xlu0 2
        %3937 = vperm.xlu0 %3936, %v215
        %v3938 = vpop.permute.xlu0 %3937
        %3940 = vset.pattern.permute.xlu0 2
        %3941 = vperm.xlu0 %3940, %v216
        %v3942 = vpop.permute.xlu0 %3941
        %3944 = vset.pattern.permute.xlu0 2
        %3945 = vperm.xlu0 %3944, %v217
        %v3946 = vpop.permute.xlu0 %3945
        %3948 = vset.pattern.permute.xlu0 2
        %3949 = vperm.xlu0 %3948, %v218
        %v3950 = vpop.permute.xlu0 %3949
        %3952 = vset.pattern.permute.xlu0 2
        %3953 = vperm.xlu0 %3952, %v219
        %v3954 = vpop.permute.xlu0 %3953
        %3956 = vset.pattern.permute.xlu0 2
        %3957 = vperm.xlu0 %3956, %v220
        %v3958 = vpop.permute.xlu0 %3957
        %3960 = vset.pattern.permute.xlu0 2
        %3961 = vperm.xlu0 %3960, %v221
        %v3962 = vpop.permute.xlu0 %3961
        %v3965 = vsel %vm2121, %v3924, 0
        %v3968 = vsel %vm2121, %v3925, 0
        %v3971 = vsel %vm2121, %v3926, 0
        %v3974 = vsel %vm2121, %v3927, 0
        %v3977 = vsel %vm2121, %v3928, 0
        %v3980 = vsel %vm2121, %v3929, 0
        %v3983 = vsel %vm2121, %v3930, 0
        %v3986 = vsel %vm2121, %v3931, 0
        %3988 = vmatprep.subr.mxu0 0.0
        %3989 = vmatpush1.msra.mxu0 0.0
        %3990 = vmatprep.subr.mxu0 0.0
        %3991 = vmatpush1.msra.mxu0 0.0
        %3992 = vmatprep.subr.mxu0 0.0
        %3993 = vmatpush1.msra.mxu0 0.0
        %3994 = vmatprep.subr.mxu0 0.0
        %3995 = vmatpush1.msra.mxu0 0.0
        %3996 = vmatprep.subr.mxu0 0.0
        %3997 = vmatpush1.msra.mxu0 0.0
        %3998 = vmatprep.subr.mxu0 0.0
        %3999 = vmatpush1.msra.mxu0 0.0
        %4000 = vmatprep.subr.mxu0 0.0
        %4001 = vmatpush1.msra.mxu0 0.0
        %4002 = vmatprep.subr.mxu0 0.0
        %4003 = vmatpush1.msra.mxu0 0.0
        %4004 = vmatprep.subr.mxu0 %v3922
        %4005 = vmatpush1.msra.mxu0 %v3818
        %4006 = vmatprep.subr.mxu0 %v3714
        %4007 = vmatpush1.msra.mxu0 %v3610
        %4008 = vmatprep.subr.mxu0 %v3506
        %4009 = vmatpush1.msra.mxu0 %v3402
        %4010 = vmatprep.subr.mxu0 %v3298
        %4011 = vmatpush1.msra.mxu0 %v3194
        %4012 = vmatprep.subr.mxu0 %v3090
        %4013 = vmatpush1.msra.mxu0 %v2986
        %4014 = vmatprep.subr.mxu0 %v2882
        %4015 = vmatpush1.msra.mxu0 %v2778
        %4016 = vmatprep.subr.mxu0 %v2674
        %4017 = vmatpush1.msra.mxu0 %v2570
        %4018 = vmatprep.subr.mxu0 %v2466
        %4019 = vmatpush1.msra.mxu0 %v2362
        %4020 = vmatprep.subr.mxu0 0.0
        %4021 = vmatpush2.msra.mxu0 0.0
        %4022 = vmatprep.subr.mxu0 0.0
        %4023 = vmatpush2.msra.mxu0 0.0
        %4024 = vmatprep.subr.mxu0 0.0
        %4025 = vmatpush2.msra.mxu0 0.0
        %4026 = vmatprep.subr.mxu0 0.0
        %4027 = vmatpush2.msra.mxu0 0.0
        %4028 = vmatprep.subr.mxu0 0.0
        %4029 = vmatpush2.msra.mxu0 0.0
        %4030 = vmatprep.subr.mxu0 0.0
        %4031 = vmatpush2.msra.mxu0 0.0
        %4032 = vmatprep.subr.mxu0 0.0
        %4033 = vmatpush2.msra.mxu0 0.0
        %4034 = vmatprep.subr.mxu0 0.0
        %4035 = vmatpush2.msra.mxu0 0.0
        %4036 = vmatprep.subr.mxu0 0.0
        %4037 = vmatpush2.msra.mxu0 0.0
        %4038 = vmatprep.subr.mxu0 0.0
        %4039 = vmatpush2.msra.mxu0 0.0
        %4040 = vmatprep.subr.mxu0 0.0
        %4041 = vmatpush2.msra.mxu0 0.0
        %4042 = vmatprep.subr.mxu0 0.0
        %4043 = vmatpush2.msra.mxu0 0.0
        %4044 = vmatprep.subr.mxu0 0.0
        %4045 = vmatpush2.msra.mxu0 0.0
        %4046 = vmatprep.subr.mxu0 0.0
        %4047 = vmatpush2.msra.mxu0 0.0
        %4048 = vmatprep.subr.mxu0 0.0
        %4049 = vmatpush2.msra.mxu0 0.0
        %4050 = vmatprep.subr.mxu0 0.0
        %4051 = vmatpush2.msra.mxu0 0.0
        %4052 = vmatprep.mubr.f32.mxu0 0.0
        %4053 = vmatmul.mubr.f32.gmra.mxu0 %v3965
        %v4054 = vpop.f32.mrf.mxu0
        %v4055 = vadd.f32 %v3934, %v4054
        %v4056 = vpop.f32.mrf.mxu0
        %v4057 = vadd.f32 %v3934, %v4056
        %4058 = vmatprep.mubr.f32.mxu0 0.0
        %4059 = vmatmul.mubr.f32.gmra.mxu0 %v3968
        %v4060 = vpop.f32.mrf.mxu0
        %v4061 = vadd.f32 %v3938, %v4060
        %v4062 = vpop.f32.mrf.mxu0
        %v4063 = vadd.f32 %v3938, %v4062
        %4064 = vmatprep.mubr.f32.mxu0 0.0
        %4065 = vmatmul.mubr.f32.gmra.mxu0 %v3971
        %v4066 = vpop.f32.mrf.mxu0
        %v4067 = vadd.f32 %v3942, %v4066
        %v4068 = vpop.f32.mrf.mxu0
        %v4069 = vadd.f32 %v3942, %v4068
        %4070 = vmatprep.mubr.f32.mxu0 0.0
        %4071 = vmatmul.mubr.f32.gmra.mxu0 %v3974
        %v4072 = vpop.f32.mrf.mxu0
        %v4073 = vadd.f32 %v3946, %v4072
        %v4074 = vpop.f32.mrf.mxu0
        %v4075 = vadd.f32 %v3946, %v4074
        %4076 = vmatprep.mubr.f32.mxu0 0.0
        %4077 = vmatmul.mubr.f32.gmra.mxu0 %v3977
        %v4078 = vpop.f32.mrf.mxu0
        %v4079 = vadd.f32 %v3950, %v4078
        %v4080 = vpop.f32.mrf.mxu0
        %v4081 = vadd.f32 %v3950, %v4080
        %4082 = vmatprep.mubr.f32.mxu0 0.0
        %4083 = vmatmul.mubr.f32.gmra.mxu0 %v3980
        %v4084 = vpop.f32.mrf.mxu0
        %v4085 = vadd.f32 %v3954, %v4084
        %v4086 = vpop.f32.mrf.mxu0
        %v4087 = vadd.f32 %v3954, %v4086
        %4088 = vmatprep.mubr.f32.mxu0 0.0
        %4089 = vmatmul.mubr.f32.gmra.mxu0 %v3983
        %v4090 = vpop.f32.mrf.mxu0
        %v4091 = vadd.f32 %v3958, %v4090
        %v4092 = vpop.f32.mrf.mxu0
        %v4093 = vadd.f32 %v3958, %v4092
        %4094 = vmatprep.mubr.f32.mxu0 0.0
        %4095 = vmatmul.mubr.f32.gmra.mxu0 %v3986
        %v4096 = vpop.f32.mrf.mxu0
        %v4097 = vadd.f32 %v3962, %v4096
        %v4098 = vpop.f32.mrf.mxu0
        %v4099 = vadd.f32 %v3962, %v4098
        %4100 = vdwg.mxu0
        %v4101 = vand.u32 2147483647, %v4055
        %vm4102 = vcmp.le.f32.partialorder %v4101, 0.7853982
        %vm4103 = vcmp.lt.s32.totalorder %v4055, 0
        %v4104 = vand.u32 %v4055, 2139095040
        %v4105 = vshrl.u32 %v4104, 23
        %v4106 = vsub.s32 %v4105, 127
        %v4107 = vand.u32 2147483647, %v4055
        %v4108 = vand.u32 %v4107, 8388607
        %v4109 = vor.u32 %v4108, 8388608
        %v4110 = vsub.s32 0, %v4109
        %v4111 = vadd.s32 %v4106, 1
        %vm4112 = vcmp.gt.s32.totalorder %v4111, 0
        %v4113 = vsel %vm4112, %v4111, 0
        %v4114 = vshrl.u32 %v4113, 5
        %v4115 = vand.u32 %v4113, 31
        %v4116 = vsub.s32 32, %v4115
        %v4117 = vshrl.u32 683565275, %v4116
        %v4118 = vshll.u32 683565275, %v4115
        %v4119 = vshrl.u32 2475754826, %v4116
        %v4120 = vor.u32 %v4118, %v4119
        %v4121 = vshll.u32 2475754826, %v4115
        %v4122 = vshrl.u32 2131351028, %v4116
        %v4123 = vor.u32 %v4121, %v4122
        %v4124 = vshll.u32 2131351028, %v4115
        %v4125 = vshrl.u32 2102212464, %v4116
        %v4126 = vor.u32 %v4124, %v4125
        %v4127 = vshll.u32 2102212464, %v4115
        %v4128 = vshrl.u32 920167782, %v4116
        %v4129 = vor.u32 %v4127, %v4128
        %v4130 = vshll.u32 920167782, %v4115
        %v4131 = vshrl.u32 1326507024, %v4116
        %v4132 = vor.u32 %v4130, %v4131
        %vm4133 = vcmp.lt.s32.totalorder %v4114, 1
        %vm4134 = vcmp.lt.s32.totalorder %v4114, 2
        %vm4135 = vcmp.lt.s32.totalorder %v4114, 3
        %vm4136 = vcmp.lt.s32.totalorder %v4114, 4
        %v4137 = vsel %vm4133, %v4117, %v4120
        %v4138 = vsel %vm4136, %v4126, 2102212464
        %v4139 = vsel %vm4135, %v4123, %v4138
        %v4140 = vsel %vm4134, %v4137, %v4139
        %v4141 = vsel %vm4133, %v4120, %v4123
        %v4142 = vsel %vm4136, %v4129, 920167782
        %v4143 = vsel %vm4135, %v4126, %v4142
        %v4144 = vsel %vm4134, %v4141, %v4143
        %v4145 = vsel %vm4133, %v4123, %v4126
        %v4146 = vsel %vm4136, %v4132, 1326507024
        %v4147 = vsel %vm4135, %v4129, %v4146
        %v4148 = vsel %vm4134, %v4145, %v4147
        %v4149 = vshll.u32 %v4109, 8
        %v4150 = vmul.u32.u64.compose %v4149, %v4148
        %v4151 = vextract.low.u32 %v4150
        %v4152 = vextract.high.u32 %v4150
        %v4153 = vmul.u32.u64.compose %v4149, %v4144
        %v4154 = vextract.low.u32 %v4153
        %v4155 = vextract.high.u32 %v4153
        %v4156 = vmul.u32 %v4149, %v4140
        %v4157 = vadd.s32 %v4152, %v4154
        %vm4158 = vc.u32 %v4152, %v4154
        %v4159 = vadd.s32 %v4155, 1
        %v4160 = vsel %vm4158, %v4159, %v4155
        %v4161 = vadd.s32 %v4156, %v4160
        %v4162 = vadd.s32 %v4161, 536870912
        %v4163 = vshrl.u32 %v4162, 30
        %v4164 = vshll.u32 %v4163, 30
        %v4165 = vsub.s32 %v4161, %v4164
        %vm4166 = vcmp.lt.s32.totalorder %v4165, 0
        %v4167 = vsub.s32 0, %v4165
        %v4168 = vsel %vm4166, %v4167, %v4165
        %v4169 = vclz %v4168
        %v4170 = vsub.s32 %v4169, 2
        %vm4171 = vcmp.gt.s32.totalorder 0, %v4170
        %v4172 = vsel %vm4171, 0, %v4170
        %v4173 = vsub.s32 32, %v4172
        %v4174 = vshll.u32 %v4165, %v4172
        %v4175 = vshrl.u32 %v4157, %v4173
        %v4176 = vor.u32 %v4174, %v4175
        %v4177 = vsub.s32 4294967266, %v4172
        %v4178 = vadd.s32 %v4177, 127
        %v4179 = vshll.u32 %v4178, 23
        %v4180 = vor.u32 4788187, %v4179
        %v4181 = vand.u32 2147483647, %v4180
        %v4183 = vcvt.s32.f32 %v4176
        %v4184 = vmul.f32 %v4183, %v4181
        %v4185 = vxor.u32 %v4184, 2147483648
        %v4186 = vsel %vm4103, %v4185, %v4184
        %v4187 = vsub.s32 4, %v4163
        %v4188 = vsel %vm4103, %v4187, %v4163
        %v4189 = vsel %vm4102, %v4055, %v4186
        %v4190 = vsel %vm4102, 0, %v4188
        %v4191 = vcosq.f32.pop %v4189
        %v4192 = vsinq.f32.pop %v4189
        %vm4193 = vweird.f32 %v4055
        %v4194 = vadd.s32 %v4190, 3
        %v4195 = vand.u32 %v4194, 3
        %vm4196 = vcmp.lt.s32.totalorder %v4195, 2
        %vm4197 = vcmp.eq.s32.totalorder %v4195, 0
        %v4198 = vxor.u32 %v4192, 2147483648
        %v4199 = vsel %vm4197, %v4191, %v4198
        %vm4200 = vcmp.eq.s32.totalorder %v4195, 2
        %v4201 = vxor.u32 %v4191, 2147483648
        %v4202 = vsel %vm4200, %v4201, %v4192
        %v4203 = vsel %vm4196, %v4199, %v4202
        %v4204 = vsel %vm4193, nan, %v4203
        %v4205 = vand.u32 2147483647, %v4057
        %vm4206 = vcmp.le.f32.partialorder %v4205, 0.7853982
        %vm4207 = vcmp.lt.s32.totalorder %v4057, 0
        %v4208 = vand.u32 %v4057, 2139095040
        %v4209 = vshrl.u32 %v4208, 23
        %v4210 = vsub.s32 %v4209, 127
        %v4211 = vand.u32 2147483647, %v4057
        %v4212 = vand.u32 %v4211, 8388607
        %v4213 = vor.u32 %v4212, 8388608
        %v4214 = vsub.s32 0, %v4213
        %v4215 = vadd.s32 %v4210, 1
        %vm4216 = vcmp.gt.s32.totalorder %v4215, 0
        %v4217 = vsel %vm4216, %v4215, 0
        %v4218 = vshrl.u32 %v4217, 5
        %v4219 = vand.u32 %v4217, 31
        %v4220 = vsub.s32 32, %v4219
        %v4221 = vshrl.u32 683565275, %v4220
        %v4222 = vshll.u32 683565275, %v4219
        %v4223 = vshrl.u32 2475754826, %v4220
        %v4224 = vor.u32 %v4222, %v4223
        %v4225 = vshll.u32 2475754826, %v4219
        %v4226 = vshrl.u32 2131351028, %v4220
        %v4227 = vor.u32 %v4225, %v4226
        %v4228 = vshll.u32 2131351028, %v4219
        %v4229 = vshrl.u32 2102212464, %v4220
        %v4230 = vor.u32 %v4228, %v4229
        %v4231 = vshll.u32 2102212464, %v4219
        %v4232 = vshrl.u32 920167782, %v4220
        %v4233 = vor.u32 %v4231, %v4232
        %v4234 = vshll.u32 920167782, %v4219
        %v4235 = vshrl.u32 1326507024, %v4220
        %v4236 = vor.u32 %v4234, %v4235
        %vm4237 = vcmp.lt.s32.totalorder %v4218, 1
        %vm4238 = vcmp.lt.s32.totalorder %v4218, 2
        %vm4239 = vcmp.lt.s32.totalorder %v4218, 3
        %vm4240 = vcmp.lt.s32.totalorder %v4218, 4
        %v4241 = vsel %vm4237, %v4221, %v4224
        %v4242 = vsel %vm4240, %v4230, 2102212464
        %v4243 = vsel %vm4239, %v4227, %v4242
        %v4244 = vsel %vm4238, %v4241, %v4243
        %v4245 = vsel %vm4237, %v4224, %v4227
        %v4246 = vsel %vm4240, %v4233, 920167782
        %v4247 = vsel %vm4239, %v4230, %v4246
        %v4248 = vsel %vm4238, %v4245, %v4247
        %v4249 = vsel %vm4237, %v4227, %v4230
        %v4250 = vsel %vm4240, %v4236, 1326507024
        %v4251 = vsel %vm4239, %v4233, %v4250
        %v4252 = vsel %vm4238, %v4249, %v4251
        %v4253 = vshll.u32 %v4213, 8
        %v4254 = vmul.u32.u64.compose %v4253, %v4252
        %v4255 = vextract.low.u32 %v4254
        %v4256 = vextract.high.u32 %v4254
        %v4257 = vmul.u32.u64.compose %v4253, %v4248
        %v4258 = vextract.low.u32 %v4257
        %v4259 = vextract.high.u32 %v4257
        %v4260 = vmul.u32 %v4253, %v4244
        %v4261 = vadd.s32 %v4256, %v4258
        %vm4262 = vc.u32 %v4256, %v4258
        %v4263 = vadd.s32 %v4259, 1
        %v4264 = vsel %vm4262, %v4263, %v4259
        %v4265 = vadd.s32 %v4260, %v4264
        %v4266 = vadd.s32 %v4265, 536870912
        %v4267 = vshrl.u32 %v4266, 30
        %v4268 = vshll.u32 %v4267, 30
        %v4269 = vsub.s32 %v4265, %v4268
        %vm4270 = vcmp.lt.s32.totalorder %v4269, 0
        %v4271 = vsub.s32 0, %v4269
        %v4272 = vsel %vm4270, %v4271, %v4269
        %v4273 = vclz %v4272
        %v4274 = vsub.s32 %v4273, 2
        %vm4275 = vcmp.gt.s32.totalorder 0, %v4274
        %v4276 = vsel %vm4275, 0, %v4274
        %v4277 = vsub.s32 32, %v4276
        %v4278 = vshll.u32 %v4269, %v4276
        %v4279 = vshrl.u32 %v4261, %v4277
        %v4280 = vor.u32 %v4278, %v4279
        %v4281 = vsub.s32 4294967266, %v4276
        %v4282 = vadd.s32 %v4281, 127
        %v4283 = vshll.u32 %v4282, 23
        %v4284 = vor.u32 4788187, %v4283
        %v4285 = vand.u32 2147483647, %v4284
        %v4287 = vcvt.s32.f32 %v4280
        %v4288 = vmul.f32 %v4287, %v4285
        %v4289 = vxor.u32 %v4288, 2147483648
        %v4290 = vsel %vm4207, %v4289, %v4288
        %v4291 = vsub.s32 4, %v4267
        %v4292 = vsel %vm4207, %v4291, %v4267
        %v4293 = vsel %vm4206, %v4057, %v4290
        %v4294 = vsel %vm4206, 0, %v4292
        %v4295 = vcosq.f32.pop %v4293
        %v4296 = vsinq.f32.pop %v4293
        %vm4297 = vweird.f32 %v4057
        %v4298 = vadd.s32 %v4294, 3
        %v4299 = vand.u32 %v4298, 3
        %vm4300 = vcmp.lt.s32.totalorder %v4299, 2
        %vm4301 = vcmp.eq.s32.totalorder %v4299, 0
        %v4302 = vxor.u32 %v4296, 2147483648
        %v4303 = vsel %vm4301, %v4295, %v4302
        %vm4304 = vcmp.eq.s32.totalorder %v4299, 2
        %v4305 = vxor.u32 %v4295, 2147483648
        %v4306 = vsel %vm4304, %v4305, %v4296
        %v4307 = vsel %vm4300, %v4303, %v4306
        %v4308 = vsel %vm4297, nan, %v4307
        %v4309 = vand.u32 2147483647, %v4061
        %vm4310 = vcmp.le.f32.partialorder %v4309, 0.7853982
        %vm4311 = vcmp.lt.s32.totalorder %v4061, 0
        %v4312 = vand.u32 %v4061, 2139095040
        %v4313 = vshrl.u32 %v4312, 23
        %v4314 = vsub.s32 %v4313, 127
        %v4315 = vand.u32 2147483647, %v4061
        %v4316 = vand.u32 %v4315, 8388607
        %v4317 = vor.u32 %v4316, 8388608
        %v4318 = vsub.s32 0, %v4317
        %v4319 = vadd.s32 %v4314, 1
        %vm4320 = vcmp.gt.s32.totalorder %v4319, 0
        %v4321 = vsel %vm4320, %v4319, 0
        %v4322 = vshrl.u32 %v4321, 5
        %v4323 = vand.u32 %v4321, 31
        %v4324 = vsub.s32 32, %v4323
        %v4325 = vshrl.u32 683565275, %v4324
        %v4326 = vshll.u32 683565275, %v4323
        %v4327 = vshrl.u32 2475754826, %v4324
        %v4328 = vor.u32 %v4326, %v4327
        %v4329 = vshll.u32 2475754826, %v4323
        %v4330 = vshrl.u32 2131351028, %v4324
        %v4331 = vor.u32 %v4329, %v4330
        %v4332 = vshll.u32 2131351028, %v4323
        %v4333 = vshrl.u32 2102212464, %v4324
        %v4334 = vor.u32 %v4332, %v4333
        %v4335 = vshll.u32 2102212464, %v4323
        %v4336 = vshrl.u32 920167782, %v4324
        %v4337 = vor.u32 %v4335, %v4336
        %v4338 = vshll.u32 920167782, %v4323
        %v4339 = vshrl.u32 1326507024, %v4324
        %v4340 = vor.u32 %v4338, %v4339
        %vm4341 = vcmp.lt.s32.totalorder %v4322, 1
        %vm4342 = vcmp.lt.s32.totalorder %v4322, 2
        %vm4343 = vcmp.lt.s32.totalorder %v4322, 3
        %vm4344 = vcmp.lt.s32.totalorder %v4322, 4
        %v4345 = vsel %vm4341, %v4325, %v4328
        %v4346 = vsel %vm4344, %v4334, 2102212464
        %v4347 = vsel %vm4343, %v4331, %v4346
        %v4348 = vsel %vm4342, %v4345, %v4347
        %v4349 = vsel %vm4341, %v4328, %v4331
        %v4350 = vsel %vm4344, %v4337, 920167782
        %v4351 = vsel %vm4343, %v4334, %v4350
        %v4352 = vsel %vm4342, %v4349, %v4351
        %v4353 = vsel %vm4341, %v4331, %v4334
        %v4354 = vsel %vm4344, %v4340, 1326507024
        %v4355 = vsel %vm4343, %v4337, %v4354
        %v4356 = vsel %vm4342, %v4353, %v4355
        %v4357 = vshll.u32 %v4317, 8
        %v4358 = vmul.u32.u64.compose %v4357, %v4356
        %v4359 = vextract.low.u32 %v4358
        %v4360 = vextract.high.u32 %v4358
        %v4361 = vmul.u32.u64.compose %v4357, %v4352
        %v4362 = vextract.low.u32 %v4361
        %v4363 = vextract.high.u32 %v4361
        %v4364 = vmul.u32 %v4357, %v4348
        %v4365 = vadd.s32 %v4360, %v4362
        %vm4366 = vc.u32 %v4360, %v4362
        %v4367 = vadd.s32 %v4363, 1
        %v4368 = vsel %vm4366, %v4367, %v4363
        %v4369 = vadd.s32 %v4364, %v4368
        %v4370 = vadd.s32 %v4369, 536870912
        %v4371 = vshrl.u32 %v4370, 30
        %v4372 = vshll.u32 %v4371, 30
        %v4373 = vsub.s32 %v4369, %v4372
        %vm4374 = vcmp.lt.s32.totalorder %v4373, 0
        %v4375 = vsub.s32 0, %v4373
        %v4376 = vsel %vm4374, %v4375, %v4373
        %v4377 = vclz %v4376
        %v4378 = vsub.s32 %v4377, 2
        %vm4379 = vcmp.gt.s32.totalorder 0, %v4378
        %v4380 = vsel %vm4379, 0, %v4378
        %v4381 = vsub.s32 32, %v4380
        %v4382 = vshll.u32 %v4373, %v4380
        %v4383 = vshrl.u32 %v4365, %v4381
        %v4384 = vor.u32 %v4382, %v4383
        %v4385 = vsub.s32 4294967266, %v4380
        %v4386 = vadd.s32 %v4385, 127
        %v4387 = vshll.u32 %v4386, 23
        %v4388 = vor.u32 4788187, %v4387
        %v4389 = vand.u32 2147483647, %v4388
        %v4391 = vcvt.s32.f32 %v4384
        %v4392 = vmul.f32 %v4391, %v4389
        %v4393 = vxor.u32 %v4392, 2147483648
        %v4394 = vsel %vm4311, %v4393, %v4392
        %v4395 = vsub.s32 4, %v4371
        %v4396 = vsel %vm4311, %v4395, %v4371
        %v4397 = vsel %vm4310, %v4061, %v4394
        %v4398 = vsel %vm4310, 0, %v4396
        %v4399 = vcosq.f32.pop %v4397
        %v4400 = vsinq.f32.pop %v4397
        %vm4401 = vweird.f32 %v4061
        %v4402 = vadd.s32 %v4398, 3
        %v4403 = vand.u32 %v4402, 3
        %vm4404 = vcmp.lt.s32.totalorder %v4403, 2
        %vm4405 = vcmp.eq.s32.totalorder %v4403, 0
        %v4406 = vxor.u32 %v4400, 2147483648
        %v4407 = vsel %vm4405, %v4399, %v4406
        %vm4408 = vcmp.eq.s32.totalorder %v4403, 2
        %v4409 = vxor.u32 %v4399, 2147483648
        %v4410 = vsel %vm4408, %v4409, %v4400
        %v4411 = vsel %vm4404, %v4407, %v4410
        %v4412 = vsel %vm4401, nan, %v4411
        %v4413 = vand.u32 2147483647, %v4063
        %vm4414 = vcmp.le.f32.partialorder %v4413, 0.7853982
        %vm4415 = vcmp.lt.s32.totalorder %v4063, 0
        %v4416 = vand.u32 %v4063, 2139095040
        %v4417 = vshrl.u32 %v4416, 23
        %v4418 = vsub.s32 %v4417, 127
        %v4419 = vand.u32 2147483647, %v4063
        %v4420 = vand.u32 %v4419, 8388607
        %v4421 = vor.u32 %v4420, 8388608
        %v4422 = vsub.s32 0, %v4421
        %v4423 = vadd.s32 %v4418, 1
        %vm4424 = vcmp.gt.s32.totalorder %v4423, 0
        %v4425 = vsel %vm4424, %v4423, 0
        %v4426 = vshrl.u32 %v4425, 5
        %v4427 = vand.u32 %v4425, 31
        %v4428 = vsub.s32 32, %v4427
        %v4429 = vshrl.u32 683565275, %v4428
        %v4430 = vshll.u32 683565275, %v4427
        %v4431 = vshrl.u32 2475754826, %v4428
        %v4432 = vor.u32 %v4430, %v4431
        %v4433 = vshll.u32 2475754826, %v4427
        %v4434 = vshrl.u32 2131351028, %v4428
        %v4435 = vor.u32 %v4433, %v4434
        %v4436 = vshll.u32 2131351028, %v4427
        %v4437 = vshrl.u32 2102212464, %v4428
        %v4438 = vor.u32 %v4436, %v4437
        %v4439 = vshll.u32 2102212464, %v4427
        %v4440 = vshrl.u32 920167782, %v4428
        %v4441 = vor.u32 %v4439, %v4440
        %v4442 = vshll.u32 920167782, %v4427
        %v4443 = vshrl.u32 1326507024, %v4428
        %v4444 = vor.u32 %v4442, %v4443
        %vm4445 = vcmp.lt.s32.totalorder %v4426, 1
        %vm4446 = vcmp.lt.s32.totalorder %v4426, 2
        %vm4447 = vcmp.lt.s32.totalorder %v4426, 3
        %vm4448 = vcmp.lt.s32.totalorder %v4426, 4
        %v4449 = vsel %vm4445, %v4429, %v4432
        %v4450 = vsel %vm4448, %v4438, 2102212464
        %v4451 = vsel %vm4447, %v4435, %v4450
        %v4452 = vsel %vm4446, %v4449, %v4451
        %v4453 = vsel %vm4445, %v4432, %v4435
        %v4454 = vsel %vm4448, %v4441, 920167782
        %v4455 = vsel %vm4447, %v4438, %v4454
        %v4456 = vsel %vm4446, %v4453, %v4455
        %v4457 = vsel %vm4445, %v4435, %v4438
        %v4458 = vsel %vm4448, %v4444, 1326507024
        %v4459 = vsel %vm4447, %v4441, %v4458
        %v4460 = vsel %vm4446, %v4457, %v4459
        %v4461 = vshll.u32 %v4421, 8
        %v4462 = vmul.u32.u64.compose %v4461, %v4460
        %v4463 = vextract.low.u32 %v4462
        %v4464 = vextract.high.u32 %v4462
        %v4465 = vmul.u32.u64.compose %v4461, %v4456
        %v4466 = vextract.low.u32 %v4465
        %v4467 = vextract.high.u32 %v4465
        %v4468 = vmul.u32 %v4461, %v4452
        %v4469 = vadd.s32 %v4464, %v4466
        %vm4470 = vc.u32 %v4464, %v4466
        %v4471 = vadd.s32 %v4467, 1
        %v4472 = vsel %vm4470, %v4471, %v4467
        %v4473 = vadd.s32 %v4468, %v4472
        %v4474 = vadd.s32 %v4473, 536870912
        %v4475 = vshrl.u32 %v4474, 30
        %v4476 = vshll.u32 %v4475, 30
        %v4477 = vsub.s32 %v4473, %v4476
        %vm4478 = vcmp.lt.s32.totalorder %v4477, 0
        %v4479 = vsub.s32 0, %v4477
        %v4480 = vsel %vm4478, %v4479, %v4477
        %v4481 = vclz %v4480
        %v4482 = vsub.s32 %v4481, 2
        %vm4483 = vcmp.gt.s32.totalorder 0, %v4482
        %v4484 = vsel %vm4483, 0, %v4482
        %v4485 = vsub.s32 32, %v4484
        %v4486 = vshll.u32 %v4477, %v4484
        %v4487 = vshrl.u32 %v4469, %v4485
        %v4488 = vor.u32 %v4486, %v4487
        %v4489 = vsub.s32 4294967266, %v4484
        %v4490 = vadd.s32 %v4489, 127
        %v4491 = vshll.u32 %v4490, 23
        %v4492 = vor.u32 4788187, %v4491
        %v4493 = vand.u32 2147483647, %v4492
        %v4495 = vcvt.s32.f32 %v4488
        %v4496 = vmul.f32 %v4495, %v4493
        %v4497 = vxor.u32 %v4496, 2147483648
        %v4498 = vsel %vm4415, %v4497, %v4496
        %v4499 = vsub.s32 4, %v4475
        %v4500 = vsel %vm4415, %v4499, %v4475
        %v4501 = vsel %vm4414, %v4063, %v4498
        %v4502 = vsel %vm4414, 0, %v4500
        %v4503 = vcosq.f32.pop %v4501
        %v4504 = vsinq.f32.pop %v4501
        %vm4505 = vweird.f32 %v4063
        %v4506 = vadd.s32 %v4502, 3
        %v4507 = vand.u32 %v4506, 3
        %vm4508 = vcmp.lt.s32.totalorder %v4507, 2
        %vm4509 = vcmp.eq.s32.totalorder %v4507, 0
        %v4510 = vxor.u32 %v4504, 2147483648
        %v4511 = vsel %vm4509, %v4503, %v4510
        %vm4512 = vcmp.eq.s32.totalorder %v4507, 2
        %v4513 = vxor.u32 %v4503, 2147483648
        %v4514 = vsel %vm4512, %v4513, %v4504
        %v4515 = vsel %vm4508, %v4511, %v4514
        %v4516 = vsel %vm4505, nan, %v4515
        %v4517 = vand.u32 2147483647, %v4067
        %vm4518 = vcmp.le.f32.partialorder %v4517, 0.7853982
        %vm4519 = vcmp.lt.s32.totalorder %v4067, 0
        %v4520 = vand.u32 %v4067, 2139095040
        %v4521 = vshrl.u32 %v4520, 23
        %v4522 = vsub.s32 %v4521, 127
        %v4523 = vand.u32 2147483647, %v4067
        %v4524 = vand.u32 %v4523, 8388607
        %v4525 = vor.u32 %v4524, 8388608
        %v4526 = vsub.s32 0, %v4525
        %v4527 = vadd.s32 %v4522, 1
        %vm4528 = vcmp.gt.s32.totalorder %v4527, 0
        %v4529 = vsel %vm4528, %v4527, 0
        %v4530 = vshrl.u32 %v4529, 5
        %v4531 = vand.u32 %v4529, 31
        %v4532 = vsub.s32 32, %v4531
        %v4533 = vshrl.u32 683565275, %v4532
        %v4534 = vshll.u32 683565275, %v4531
        %v4535 = vshrl.u32 2475754826, %v4532
        %v4536 = vor.u32 %v4534, %v4535
        %v4537 = vshll.u32 2475754826, %v4531
        %v4538 = vshrl.u32 2131351028, %v4532
        %v4539 = vor.u32 %v4537, %v4538
        %v4540 = vshll.u32 2131351028, %v4531
        %v4541 = vshrl.u32 2102212464, %v4532
        %v4542 = vor.u32 %v4540, %v4541
        %v4543 = vshll.u32 2102212464, %v4531
        %v4544 = vshrl.u32 920167782, %v4532
        %v4545 = vor.u32 %v4543, %v4544
        %v4546 = vshll.u32 920167782, %v4531
        %v4547 = vshrl.u32 1326507024, %v4532
        %v4548 = vor.u32 %v4546, %v4547
        %vm4549 = vcmp.lt.s32.totalorder %v4530, 1
        %vm4550 = vcmp.lt.s32.totalorder %v4530, 2
        %vm4551 = vcmp.lt.s32.totalorder %v4530, 3
        %vm4552 = vcmp.lt.s32.totalorder %v4530, 4
        %v4553 = vsel %vm4549, %v4533, %v4536
        %v4554 = vsel %vm4552, %v4542, 2102212464
        %v4555 = vsel %vm4551, %v4539, %v4554
        %v4556 = vsel %vm4550, %v4553, %v4555
        %v4557 = vsel %vm4549, %v4536, %v4539
        %v4558 = vsel %vm4552, %v4545, 920167782
        %v4559 = vsel %vm4551, %v4542, %v4558
        %v4560 = vsel %vm4550, %v4557, %v4559
        %v4561 = vsel %vm4549, %v4539, %v4542
        %v4562 = vsel %vm4552, %v4548, 1326507024
        %v4563 = vsel %vm4551, %v4545, %v4562
        %v4564 = vsel %vm4550, %v4561, %v4563
        %v4565 = vshll.u32 %v4525, 8
        %v4566 = vmul.u32.u64.compose %v4565, %v4564
        %v4567 = vextract.low.u32 %v4566
        %v4568 = vextract.high.u32 %v4566
        %v4569 = vmul.u32.u64.compose %v4565, %v4560
        %v4570 = vextract.low.u32 %v4569
        %v4571 = vextract.high.u32 %v4569
        %v4572 = vmul.u32 %v4565, %v4556
        %v4573 = vadd.s32 %v4568, %v4570
        %vm4574 = vc.u32 %v4568, %v4570
        %v4575 = vadd.s32 %v4571, 1
        %v4576 = vsel %vm4574, %v4575, %v4571
        %v4577 = vadd.s32 %v4572, %v4576
        %v4578 = vadd.s32 %v4577, 536870912
        %v4579 = vshrl.u32 %v4578, 30
        %v4580 = vshll.u32 %v4579, 30
        %v4581 = vsub.s32 %v4577, %v4580
        %vm4582 = vcmp.lt.s32.totalorder %v4581, 0
        %v4583 = vsub.s32 0, %v4581
        %v4584 = vsel %vm4582, %v4583, %v4581
        %v4585 = vclz %v4584
        %v4586 = vsub.s32 %v4585, 2
        %vm4587 = vcmp.gt.s32.totalorder 0, %v4586
        %v4588 = vsel %vm4587, 0, %v4586
        %v4589 = vsub.s32 32, %v4588
        %v4590 = vshll.u32 %v4581, %v4588
        %v4591 = vshrl.u32 %v4573, %v4589
        %v4592 = vor.u32 %v4590, %v4591
        %v4593 = vsub.s32 4294967266, %v4588
        %v4594 = vadd.s32 %v4593, 127
        %v4595 = vshll.u32 %v4594, 23
        %v4596 = vor.u32 4788187, %v4595
        %v4597 = vand.u32 2147483647, %v4596
        %v4599 = vcvt.s32.f32 %v4592
        %v4600 = vmul.f32 %v4599, %v4597
        %v4601 = vxor.u32 %v4600, 2147483648
        %v4602 = vsel %vm4519, %v4601, %v4600
        %v4603 = vsub.s32 4, %v4579
        %v4604 = vsel %vm4519, %v4603, %v4579
        %v4605 = vsel %vm4518, %v4067, %v4602
        %v4606 = vsel %vm4518, 0, %v4604
        %v4607 = vcosq.f32.pop %v4605
        %v4608 = vsinq.f32.pop %v4605
        %vm4609 = vweird.f32 %v4067
        %v4610 = vadd.s32 %v4606, 3
        %v4611 = vand.u32 %v4610, 3
        %vm4612 = vcmp.lt.s32.totalorder %v4611, 2
        %vm4613 = vcmp.eq.s32.totalorder %v4611, 0
        %v4614 = vxor.u32 %v4608, 2147483648
        %v4615 = vsel %vm4613, %v4607, %v4614
        %vm4616 = vcmp.eq.s32.totalorder %v4611, 2
        %v4617 = vxor.u32 %v4607, 2147483648
        %v4618 = vsel %vm4616, %v4617, %v4608
        %v4619 = vsel %vm4612, %v4615, %v4618
        %v4620 = vsel %vm4609, nan, %v4619
        %v4621 = vand.u32 2147483647, %v4069
        %vm4622 = vcmp.le.f32.partialorder %v4621, 0.7853982
        %vm4623 = vcmp.lt.s32.totalorder %v4069, 0
        %v4624 = vand.u32 %v4069, 2139095040
        %v4625 = vshrl.u32 %v4624, 23
        %v4626 = vsub.s32 %v4625, 127
        %v4627 = vand.u32 2147483647, %v4069
        %v4628 = vand.u32 %v4627, 8388607
        %v4629 = vor.u32 %v4628, 8388608
        %v4630 = vsub.s32 0, %v4629
        %v4631 = vadd.s32 %v4626, 1
        %vm4632 = vcmp.gt.s32.totalorder %v4631, 0
        %v4633 = vsel %vm4632, %v4631, 0
        %v4634 = vshrl.u32 %v4633, 5
        %v4635 = vand.u32 %v4633, 31
        %v4636 = vsub.s32 32, %v4635
        %v4637 = vshrl.u32 683565275, %v4636
        %v4638 = vshll.u32 683565275, %v4635
        %v4639 = vshrl.u32 2475754826, %v4636
        %v4640 = vor.u32 %v4638, %v4639
        %v4641 = vshll.u32 2475754826, %v4635
        %v4642 = vshrl.u32 2131351028, %v4636
        %v4643 = vor.u32 %v4641, %v4642
        %v4644 = vshll.u32 2131351028, %v4635
        %v4645 = vshrl.u32 2102212464, %v4636
        %v4646 = vor.u32 %v4644, %v4645
        %v4647 = vshll.u32 2102212464, %v4635
        %v4648 = vshrl.u32 920167782, %v4636
        %v4649 = vor.u32 %v4647, %v4648
        %v4650 = vshll.u32 920167782, %v4635
        %v4651 = vshrl.u32 1326507024, %v4636
        %v4652 = vor.u32 %v4650, %v4651
        %vm4653 = vcmp.lt.s32.totalorder %v4634, 1
        %vm4654 = vcmp.lt.s32.totalorder %v4634, 2
        %vm4655 = vcmp.lt.s32.totalorder %v4634, 3
        %vm4656 = vcmp.lt.s32.totalorder %v4634, 4
        %v4657 = vsel %vm4653, %v4637, %v4640
        %v4658 = vsel %vm4656, %v4646, 2102212464
        %v4659 = vsel %vm4655, %v4643, %v4658
        %v4660 = vsel %vm4654, %v4657, %v4659
        %v4661 = vsel %vm4653, %v4640, %v4643
        %v4662 = vsel %vm4656, %v4649, 920167782
        %v4663 = vsel %vm4655, %v4646, %v4662
        %v4664 = vsel %vm4654, %v4661, %v4663
        %v4665 = vsel %vm4653, %v4643, %v4646
        %v4666 = vsel %vm4656, %v4652, 1326507024
        %v4667 = vsel %vm4655, %v4649, %v4666
        %v4668 = vsel %vm4654, %v4665, %v4667
        %v4669 = vshll.u32 %v4629, 8
        %v4670 = vmul.u32.u64.compose %v4669, %v4668
        %v4671 = vextract.low.u32 %v4670
        %v4672 = vextract.high.u32 %v4670
        %v4673 = vmul.u32.u64.compose %v4669, %v4664
        %v4674 = vextract.low.u32 %v4673
        %v4675 = vextract.high.u32 %v4673
        %v4676 = vmul.u32 %v4669, %v4660
        %v4677 = vadd.s32 %v4672, %v4674
        %vm4678 = vc.u32 %v4672, %v4674
        %v4679 = vadd.s32 %v4675, 1
        %v4680 = vsel %vm4678, %v4679, %v4675
        %v4681 = vadd.s32 %v4676, %v4680
        %v4682 = vadd.s32 %v4681, 536870912
        %v4683 = vshrl.u32 %v4682, 30
        %v4684 = vshll.u32 %v4683, 30
        %v4685 = vsub.s32 %v4681, %v4684
        %vm4686 = vcmp.lt.s32.totalorder %v4685, 0
        %v4687 = vsub.s32 0, %v4685
        %v4688 = vsel %vm4686, %v4687, %v4685
        %v4689 = vclz %v4688
        %v4690 = vsub.s32 %v4689, 2
        %vm4691 = vcmp.gt.s32.totalorder 0, %v4690
        %v4692 = vsel %vm4691, 0, %v4690
        %v4693 = vsub.s32 32, %v4692
        %v4694 = vshll.u32 %v4685, %v4692
        %v4695 = vshrl.u32 %v4677, %v4693
        %v4696 = vor.u32 %v4694, %v4695
        %v4697 = vsub.s32 4294967266, %v4692
        %v4698 = vadd.s32 %v4697, 127
        %v4699 = vshll.u32 %v4698, 23
        %v4700 = vor.u32 4788187, %v4699
        %v4701 = vand.u32 2147483647, %v4700
        %v4703 = vcvt.s32.f32 %v4696
        %v4704 = vmul.f32 %v4703, %v4701
        %v4705 = vxor.u32 %v4704, 2147483648
        %v4706 = vsel %vm4623, %v4705, %v4704
        %v4707 = vsub.s32 4, %v4683
        %v4708 = vsel %vm4623, %v4707, %v4683
        %v4709 = vsel %vm4622, %v4069, %v4706
        %v4710 = vsel %vm4622, 0, %v4708
        %v4711 = vcosq.f32.pop %v4709
        %v4712 = vsinq.f32.pop %v4709
        %vm4713 = vweird.f32 %v4069
        %v4714 = vadd.s32 %v4710, 3
        %v4715 = vand.u32 %v4714, 3
        %vm4716 = vcmp.lt.s32.totalorder %v4715, 2
        %vm4717 = vcmp.eq.s32.totalorder %v4715, 0
        %v4718 = vxor.u32 %v4712, 2147483648
        %v4719 = vsel %vm4717, %v4711, %v4718
        %vm4720 = vcmp.eq.s32.totalorder %v4715, 2
        %v4721 = vxor.u32 %v4711, 2147483648
        %v4722 = vsel %vm4720, %v4721, %v4712
        %v4723 = vsel %vm4716, %v4719, %v4722
        %v4724 = vsel %vm4713, nan, %v4723
        %v4725 = vand.u32 2147483647, %v4073
        %vm4726 = vcmp.le.f32.partialorder %v4725, 0.7853982
        %vm4727 = vcmp.lt.s32.totalorder %v4073, 0
        %v4728 = vand.u32 %v4073, 2139095040
        %v4729 = vshrl.u32 %v4728, 23
        %v4730 = vsub.s32 %v4729, 127
        %v4731 = vand.u32 2147483647, %v4073
        %v4732 = vand.u32 %v4731, 8388607
        %v4733 = vor.u32 %v4732, 8388608
        %v4734 = vsub.s32 0, %v4733
        %v4735 = vadd.s32 %v4730, 1
        %vm4736 = vcmp.gt.s32.totalorder %v4735, 0
        %v4737 = vsel %vm4736, %v4735, 0
        %v4738 = vshrl.u32 %v4737, 5
        %v4739 = vand.u32 %v4737, 31
        %v4740 = vsub.s32 32, %v4739
        %v4741 = vshrl.u32 683565275, %v4740
        %v4742 = vshll.u32 683565275, %v4739
        %v4743 = vshrl.u32 2475754826, %v4740
        %v4744 = vor.u32 %v4742, %v4743
        %v4745 = vshll.u32 2475754826, %v4739
        %v4746 = vshrl.u32 2131351028, %v4740
        %v4747 = vor.u32 %v4745, %v4746
        %v4748 = vshll.u32 2131351028, %v4739
        %v4749 = vshrl.u32 2102212464, %v4740
        %v4750 = vor.u32 %v4748, %v4749
        %v4751 = vshll.u32 2102212464, %v4739
        %v4752 = vshrl.u32 920167782, %v4740
        %v4753 = vor.u32 %v4751, %v4752
        %v4754 = vshll.u32 920167782, %v4739
        %v4755 = vshrl.u32 1326507024, %v4740
        %v4756 = vor.u32 %v4754, %v4755
        %vm4757 = vcmp.lt.s32.totalorder %v4738, 1
        %vm4758 = vcmp.lt.s32.totalorder %v4738, 2
        %vm4759 = vcmp.lt.s32.totalorder %v4738, 3
        %vm4760 = vcmp.lt.s32.totalorder %v4738, 4
        %v4761 = vsel %vm4757, %v4741, %v4744
        %v4762 = vsel %vm4760, %v4750, 2102212464
        %v4763 = vsel %vm4759, %v4747, %v4762
        %v4764 = vsel %vm4758, %v4761, %v4763
        %v4765 = vsel %vm4757, %v4744, %v4747
        %v4766 = vsel %vm4760, %v4753, 920167782
        %v4767 = vsel %vm4759, %v4750, %v4766
        %v4768 = vsel %vm4758, %v4765, %v4767
        %v4769 = vsel %vm4757, %v4747, %v4750
        %v4770 = vsel %vm4760, %v4756, 1326507024
        %v4771 = vsel %vm4759, %v4753, %v4770
        %v4772 = vsel %vm4758, %v4769, %v4771
        %v4773 = vshll.u32 %v4733, 8
        %v4774 = vmul.u32.u64.compose %v4773, %v4772
        %v4775 = vextract.low.u32 %v4774
        %v4776 = vextract.high.u32 %v4774
        %v4777 = vmul.u32.u64.compose %v4773, %v4768
        %v4778 = vextract.low.u32 %v4777
        %v4779 = vextract.high.u32 %v4777
        %v4780 = vmul.u32 %v4773, %v4764
        %v4781 = vadd.s32 %v4776, %v4778
        %vm4782 = vc.u32 %v4776, %v4778
        %v4783 = vadd.s32 %v4779, 1
        %v4784 = vsel %vm4782, %v4783, %v4779
        %v4785 = vadd.s32 %v4780, %v4784
        %v4786 = vadd.s32 %v4785, 536870912
        %v4787 = vshrl.u32 %v4786, 30
        %v4788 = vshll.u32 %v4787, 30
        %v4789 = vsub.s32 %v4785, %v4788
        %vm4790 = vcmp.lt.s32.totalorder %v4789, 0
        %v4791 = vsub.s32 0, %v4789
        %v4792 = vsel %vm4790, %v4791, %v4789
        %v4793 = vclz %v4792
        %v4794 = vsub.s32 %v4793, 2
        %vm4795 = vcmp.gt.s32.totalorder 0, %v4794
        %v4796 = vsel %vm4795, 0, %v4794
        %v4797 = vsub.s32 32, %v4796
        %v4798 = vshll.u32 %v4789, %v4796
        %v4799 = vshrl.u32 %v4781, %v4797
        %v4800 = vor.u32 %v4798, %v4799
        %v4801 = vsub.s32 4294967266, %v4796
        %v4802 = vadd.s32 %v4801, 127
        %v4803 = vshll.u32 %v4802, 23
        %v4804 = vor.u32 4788187, %v4803
        %v4805 = vand.u32 2147483647, %v4804
        %v4807 = vcvt.s32.f32 %v4800
        %v4808 = vmul.f32 %v4807, %v4805
        %v4809 = vxor.u32 %v4808, 2147483648
        %v4810 = vsel %vm4727, %v4809, %v4808
        %v4811 = vsub.s32 4, %v4787
        %v4812 = vsel %vm4727, %v4811, %v4787
        %v4813 = vsel %vm4726, %v4073, %v4810
        %v4814 = vsel %vm4726, 0, %v4812
        %v4815 = vcosq.f32.pop %v4813
        %v4816 = vsinq.f32.pop %v4813
        %vm4817 = vweird.f32 %v4073
        %v4818 = vadd.s32 %v4814, 3
        %v4819 = vand.u32 %v4818, 3
        %vm4820 = vcmp.lt.s32.totalorder %v4819, 2
        %vm4821 = vcmp.eq.s32.totalorder %v4819, 0
        %v4822 = vxor.u32 %v4816, 2147483648
        %v4823 = vsel %vm4821, %v4815, %v4822
        %vm4824 = vcmp.eq.s32.totalorder %v4819, 2
        %v4825 = vxor.u32 %v4815, 2147483648
        %v4826 = vsel %vm4824, %v4825, %v4816
        %v4827 = vsel %vm4820, %v4823, %v4826
        %v4828 = vsel %vm4817, nan, %v4827
        %v4829 = vand.u32 2147483647, %v4075
        %vm4830 = vcmp.le.f32.partialorder %v4829, 0.7853982
        %vm4831 = vcmp.lt.s32.totalorder %v4075, 0
        %v4832 = vand.u32 %v4075, 2139095040
        %v4833 = vshrl.u32 %v4832, 23
        %v4834 = vsub.s32 %v4833, 127
        %v4835 = vand.u32 2147483647, %v4075
        %v4836 = vand.u32 %v4835, 8388607
        %v4837 = vor.u32 %v4836, 8388608
        %v4838 = vsub.s32 0, %v4837
        %v4839 = vadd.s32 %v4834, 1
        %vm4840 = vcmp.gt.s32.totalorder %v4839, 0
        %v4841 = vsel %vm4840, %v4839, 0
        %v4842 = vshrl.u32 %v4841, 5
        %v4843 = vand.u32 %v4841, 31
        %v4844 = vsub.s32 32, %v4843
        %v4845 = vshrl.u32 683565275, %v4844
        %v4846 = vshll.u32 683565275, %v4843
        %v4847 = vshrl.u32 2475754826, %v4844
        %v4848 = vor.u32 %v4846, %v4847
        %v4849 = vshll.u32 2475754826, %v4843
        %v4850 = vshrl.u32 2131351028, %v4844
        %v4851 = vor.u32 %v4849, %v4850
        %v4852 = vshll.u32 2131351028, %v4843
        %v4853 = vshrl.u32 2102212464, %v4844
        %v4854 = vor.u32 %v4852, %v4853
        %v4855 = vshll.u32 2102212464, %v4843
        %v4856 = vshrl.u32 920167782, %v4844
        %v4857 = vor.u32 %v4855, %v4856
        %v4858 = vshll.u32 920167782, %v4843
        %v4859 = vshrl.u32 1326507024, %v4844
        %v4860 = vor.u32 %v4858, %v4859
        %vm4861 = vcmp.lt.s32.totalorder %v4842, 1
        %vm4862 = vcmp.lt.s32.totalorder %v4842, 2
        %vm4863 = vcmp.lt.s32.totalorder %v4842, 3
        %vm4864 = vcmp.lt.s32.totalorder %v4842, 4
        %v4865 = vsel %vm4861, %v4845, %v4848
        %v4866 = vsel %vm4864, %v4854, 2102212464
        %v4867 = vsel %vm4863, %v4851, %v4866
        %v4868 = vsel %vm4862, %v4865, %v4867
        %v4869 = vsel %vm4861, %v4848, %v4851
        %v4870 = vsel %vm4864, %v4857, 920167782
        %v4871 = vsel %vm4863, %v4854, %v4870
        %v4872 = vsel %vm4862, %v4869, %v4871
        %v4873 = vsel %vm4861, %v4851, %v4854
        %v4874 = vsel %vm4864, %v4860, 1326507024
        %v4875 = vsel %vm4863, %v4857, %v4874
        %v4876 = vsel %vm4862, %v4873, %v4875
        %v4877 = vshll.u32 %v4837, 8
        %v4878 = vmul.u32.u64.compose %v4877, %v4876
        %v4879 = vextract.low.u32 %v4878
        %v4880 = vextract.high.u32 %v4878
        %v4881 = vmul.u32.u64.compose %v4877, %v4872
        %v4882 = vextract.low.u32 %v4881
        %v4883 = vextract.high.u32 %v4881
        %v4884 = vmul.u32 %v4877, %v4868
        %v4885 = vadd.s32 %v4880, %v4882
        %vm4886 = vc.u32 %v4880, %v4882
        %v4887 = vadd.s32 %v4883, 1
        %v4888 = vsel %vm4886, %v4887, %v4883
        %v4889 = vadd.s32 %v4884, %v4888
        %v4890 = vadd.s32 %v4889, 536870912
        %v4891 = vshrl.u32 %v4890, 30
        %v4892 = vshll.u32 %v4891, 30
        %v4893 = vsub.s32 %v4889, %v4892
        %vm4894 = vcmp.lt.s32.totalorder %v4893, 0
        %v4895 = vsub.s32 0, %v4893
        %v4896 = vsel %vm4894, %v4895, %v4893
        %v4897 = vclz %v4896
        %v4898 = vsub.s32 %v4897, 2
        %vm4899 = vcmp.gt.s32.totalorder 0, %v4898
        %v4900 = vsel %vm4899, 0, %v4898
        %v4901 = vsub.s32 32, %v4900
        %v4902 = vshll.u32 %v4893, %v4900
        %v4903 = vshrl.u32 %v4885, %v4901
        %v4904 = vor.u32 %v4902, %v4903
        %v4905 = vsub.s32 4294967266, %v4900
        %v4906 = vadd.s32 %v4905, 127
        %v4907 = vshll.u32 %v4906, 23
        %v4908 = vor.u32 4788187, %v4907
        %v4909 = vand.u32 2147483647, %v4908
        %v4911 = vcvt.s32.f32 %v4904
        %v4912 = vmul.f32 %v4911, %v4909
        %v4913 = vxor.u32 %v4912, 2147483648
        %v4914 = vsel %vm4831, %v4913, %v4912
        %v4915 = vsub.s32 4, %v4891
        %v4916 = vsel %vm4831, %v4915, %v4891
        %v4917 = vsel %vm4830, %v4075, %v4914
        %v4918 = vsel %vm4830, 0, %v4916
        %v4919 = vcosq.f32.pop %v4917
        %v4920 = vsinq.f32.pop %v4917
        %vm4921 = vweird.f32 %v4075
        %v4922 = vadd.s32 %v4918, 3
        %v4923 = vand.u32 %v4922, 3
        %vm4924 = vcmp.lt.s32.totalorder %v4923, 2
        %vm4925 = vcmp.eq.s32.totalorder %v4923, 0
        %v4926 = vxor.u32 %v4920, 2147483648
        %v4927 = vsel %vm4925, %v4919, %v4926
        %vm4928 = vcmp.eq.s32.totalorder %v4923, 2
        %v4929 = vxor.u32 %v4919, 2147483648
        %v4930 = vsel %vm4928, %v4929, %v4920
        %v4931 = vsel %vm4924, %v4927, %v4930
        %v4932 = vsel %vm4921, nan, %v4931
        %v4933 = vand.u32 2147483647, %v4079
        %vm4934 = vcmp.le.f32.partialorder %v4933, 0.7853982
        %vm4935 = vcmp.lt.s32.totalorder %v4079, 0
        %v4936 = vand.u32 %v4079, 2139095040
        %v4937 = vshrl.u32 %v4936, 23
        %v4938 = vsub.s32 %v4937, 127
        %v4939 = vand.u32 2147483647, %v4079
        %v4940 = vand.u32 %v4939, 8388607
        %v4941 = vor.u32 %v4940, 8388608
        %v4942 = vsub.s32 0, %v4941
        %v4943 = vadd.s32 %v4938, 1
        %vm4944 = vcmp.gt.s32.totalorder %v4943, 0
        %v4945 = vsel %vm4944, %v4943, 0
        %v4946 = vshrl.u32 %v4945, 5
        %v4947 = vand.u32 %v4945, 31
        %v4948 = vsub.s32 32, %v4947
        %v4949 = vshrl.u32 683565275, %v4948
        %v4950 = vshll.u32 683565275, %v4947
        %v4951 = vshrl.u32 2475754826, %v4948
        %v4952 = vor.u32 %v4950, %v4951
        %v4953 = vshll.u32 2475754826, %v4947
        %v4954 = vshrl.u32 2131351028, %v4948
        %v4955 = vor.u32 %v4953, %v4954
        %v4956 = vshll.u32 2131351028, %v4947
        %v4957 = vshrl.u32 2102212464, %v4948
        %v4958 = vor.u32 %v4956, %v4957
        %v4959 = vshll.u32 2102212464, %v4947
        %v4960 = vshrl.u32 920167782, %v4948
        %v4961 = vor.u32 %v4959, %v4960
        %v4962 = vshll.u32 920167782, %v4947
        %v4963 = vshrl.u32 1326507024, %v4948
        %v4964 = vor.u32 %v4962, %v4963
        %vm4965 = vcmp.lt.s32.totalorder %v4946, 1
        %vm4966 = vcmp.lt.s32.totalorder %v4946, 2
        %vm4967 = vcmp.lt.s32.totalorder %v4946, 3
        %vm4968 = vcmp.lt.s32.totalorder %v4946, 4
        %v4969 = vsel %vm4965, %v4949, %v4952
        %v4970 = vsel %vm4968, %v4958, 2102212464
        %v4971 = vsel %vm4967, %v4955, %v4970
        %v4972 = vsel %vm4966, %v4969, %v4971
        %v4973 = vsel %vm4965, %v4952, %v4955
        %v4974 = vsel %vm4968, %v4961, 920167782
        %v4975 = vsel %vm4967, %v4958, %v4974
        %v4976 = vsel %vm4966, %v4973, %v4975
        %v4977 = vsel %vm4965, %v4955, %v4958
        %v4978 = vsel %vm4968, %v4964, 1326507024
        %v4979 = vsel %vm4967, %v4961, %v4978
        %v4980 = vsel %vm4966, %v4977, %v4979
        %v4981 = vshll.u32 %v4941, 8
        %v4982 = vmul.u32.u64.compose %v4981, %v4980
        %v4983 = vextract.low.u32 %v4982
        %v4984 = vextract.high.u32 %v4982
        %v4985 = vmul.u32.u64.compose %v4981, %v4976
        %v4986 = vextract.low.u32 %v4985
        %v4987 = vextract.high.u32 %v4985
        %v4988 = vmul.u32 %v4981, %v4972
        %v4989 = vadd.s32 %v4984, %v4986
        %vm4990 = vc.u32 %v4984, %v4986
        %v4991 = vadd.s32 %v4987, 1
        %v4992 = vsel %vm4990, %v4991, %v4987
        %v4993 = vadd.s32 %v4988, %v4992
        %v4994 = vadd.s32 %v4993, 536870912
        %v4995 = vshrl.u32 %v4994, 30
        %v4996 = vshll.u32 %v4995, 30
        %v4997 = vsub.s32 %v4993, %v4996
        %vm4998 = vcmp.lt.s32.totalorder %v4997, 0
        %v4999 = vsub.s32 0, %v4997
        %v5000 = vsel %vm4998, %v4999, %v4997
        %v5001 = vclz %v5000
        %v5002 = vsub.s32 %v5001, 2
        %vm5003 = vcmp.gt.s32.totalorder 0, %v5002
        %v5004 = vsel %vm5003, 0, %v5002
        %v5005 = vsub.s32 32, %v5004
        %v5006 = vshll.u32 %v4997, %v5004
        %v5007 = vshrl.u32 %v4989, %v5005
        %v5008 = vor.u32 %v5006, %v5007
        %v5009 = vsub.s32 4294967266, %v5004
        %v5010 = vadd.s32 %v5009, 127
        %v5011 = vshll.u32 %v5010, 23
        %v5012 = vor.u32 4788187, %v5011
        %v5013 = vand.u32 2147483647, %v5012
        %v5015 = vcvt.s32.f32 %v5008
        %v5016 = vmul.f32 %v5015, %v5013
        %v5017 = vxor.u32 %v5016, 2147483648
        %v5018 = vsel %vm4935, %v5017, %v5016
        %v5019 = vsub.s32 4, %v4995
        %v5020 = vsel %vm4935, %v5019, %v4995
        %v5021 = vsel %vm4934, %v4079, %v5018
        %v5022 = vsel %vm4934, 0, %v5020
        %v5023 = vcosq.f32.pop %v5021
        %v5024 = vsinq.f32.pop %v5021
        %vm5025 = vweird.f32 %v4079
        %v5026 = vadd.s32 %v5022, 3
        %v5027 = vand.u32 %v5026, 3
        %vm5028 = vcmp.lt.s32.totalorder %v5027, 2
        %vm5029 = vcmp.eq.s32.totalorder %v5027, 0
        %v5030 = vxor.u32 %v5024, 2147483648
        %v5031 = vsel %vm5029, %v5023, %v5030
        %vm5032 = vcmp.eq.s32.totalorder %v5027, 2
        %v5033 = vxor.u32 %v5023, 2147483648
        %v5034 = vsel %vm5032, %v5033, %v5024
        %v5035 = vsel %vm5028, %v5031, %v5034
        %v5036 = vsel %vm5025, nan, %v5035
        %v5037 = vand.u32 2147483647, %v4081
        %vm5038 = vcmp.le.f32.partialorder %v5037, 0.7853982
        %vm5039 = vcmp.lt.s32.totalorder %v4081, 0
        %v5040 = vand.u32 %v4081, 2139095040
        %v5041 = vshrl.u32 %v5040, 23
        %v5042 = vsub.s32 %v5041, 127
        %v5043 = vand.u32 2147483647, %v4081
        %v5044 = vand.u32 %v5043, 8388607
        %v5045 = vor.u32 %v5044, 8388608
        %v5046 = vsub.s32 0, %v5045
        %v5047 = vadd.s32 %v5042, 1
        %vm5048 = vcmp.gt.s32.totalorder %v5047, 0
        %v5049 = vsel %vm5048, %v5047, 0
        %v5050 = vshrl.u32 %v5049, 5
        %v5051 = vand.u32 %v5049, 31
        %v5052 = vsub.s32 32, %v5051
        %v5053 = vshrl.u32 683565275, %v5052
        %v5054 = vshll.u32 683565275, %v5051
        %v5055 = vshrl.u32 2475754826, %v5052
        %v5056 = vor.u32 %v5054, %v5055
        %v5057 = vshll.u32 2475754826, %v5051
        %v5058 = vshrl.u32 2131351028, %v5052
        %v5059 = vor.u32 %v5057, %v5058
        %v5060 = vshll.u32 2131351028, %v5051
        %v5061 = vshrl.u32 2102212464, %v5052
        %v5062 = vor.u32 %v5060, %v5061
        %v5063 = vshll.u32 2102212464, %v5051
        %v5064 = vshrl.u32 920167782, %v5052
        %v5065 = vor.u32 %v5063, %v5064
        %v5066 = vshll.u32 920167782, %v5051
        %v5067 = vshrl.u32 1326507024, %v5052
        %v5068 = vor.u32 %v5066, %v5067
        %vm5069 = vcmp.lt.s32.totalorder %v5050, 1
        %vm5070 = vcmp.lt.s32.totalorder %v5050, 2
        %vm5071 = vcmp.lt.s32.totalorder %v5050, 3
        %vm5072 = vcmp.lt.s32.totalorder %v5050, 4
        %v5073 = vsel %vm5069, %v5053, %v5056
        %v5074 = vsel %vm5072, %v5062, 2102212464
        %v5075 = vsel %vm5071, %v5059, %v5074
        %v5076 = vsel %vm5070, %v5073, %v5075
        %v5077 = vsel %vm5069, %v5056, %v5059
        %v5078 = vsel %vm5072, %v5065, 920167782
        %v5079 = vsel %vm5071, %v5062, %v5078
        %v5080 = vsel %vm5070, %v5077, %v5079
        %v5081 = vsel %vm5069, %v5059, %v5062
        %v5082 = vsel %vm5072, %v5068, 1326507024
        %v5083 = vsel %vm5071, %v5065, %v5082
        %v5084 = vsel %vm5070, %v5081, %v5083
        %v5085 = vshll.u32 %v5045, 8
        %v5086 = vmul.u32.u64.compose %v5085, %v5084
        %v5087 = vextract.low.u32 %v5086
        %v5088 = vextract.high.u32 %v5086
        %v5089 = vmul.u32.u64.compose %v5085, %v5080
        %v5090 = vextract.low.u32 %v5089
        %v5091 = vextract.high.u32 %v5089
        %v5092 = vmul.u32 %v5085, %v5076
        %v5093 = vadd.s32 %v5088, %v5090
        %vm5094 = vc.u32 %v5088, %v5090
        %v5095 = vadd.s32 %v5091, 1
        %v5096 = vsel %vm5094, %v5095, %v5091
        %v5097 = vadd.s32 %v5092, %v5096
        %v5098 = vadd.s32 %v5097, 536870912
        %v5099 = vshrl.u32 %v5098, 30
        %v5100 = vshll.u32 %v5099, 30
        %v5101 = vsub.s32 %v5097, %v5100
        %vm5102 = vcmp.lt.s32.totalorder %v5101, 0
        %v5103 = vsub.s32 0, %v5101
        %v5104 = vsel %vm5102, %v5103, %v5101
        %v5105 = vclz %v5104
        %v5106 = vsub.s32 %v5105, 2
        %vm5107 = vcmp.gt.s32.totalorder 0, %v5106
        %v5108 = vsel %vm5107, 0, %v5106
        %v5109 = vsub.s32 32, %v5108
        %v5110 = vshll.u32 %v5101, %v5108
        %v5111 = vshrl.u32 %v5093, %v5109
        %v5112 = vor.u32 %v5110, %v5111
        %v5113 = vsub.s32 4294967266, %v5108
        %v5114 = vadd.s32 %v5113, 127
        %v5115 = vshll.u32 %v5114, 23
        %v5116 = vor.u32 4788187, %v5115
        %v5117 = vand.u32 2147483647, %v5116
        %v5119 = vcvt.s32.f32 %v5112
        %v5120 = vmul.f32 %v5119, %v5117
        %v5121 = vxor.u32 %v5120, 2147483648
        %v5122 = vsel %vm5039, %v5121, %v5120
        %v5123 = vsub.s32 4, %v5099
        %v5124 = vsel %vm5039, %v5123, %v5099
        %v5125 = vsel %vm5038, %v4081, %v5122
        %v5126 = vsel %vm5038, 0, %v5124
        %v5127 = vcosq.f32.pop %v5125
        %v5128 = vsinq.f32.pop %v5125
        %vm5129 = vweird.f32 %v4081
        %v5130 = vadd.s32 %v5126, 3
        %v5131 = vand.u32 %v5130, 3
        %vm5132 = vcmp.lt.s32.totalorder %v5131, 2
        %vm5133 = vcmp.eq.s32.totalorder %v5131, 0
        %v5134 = vxor.u32 %v5128, 2147483648
        %v5135 = vsel %vm5133, %v5127, %v5134
        %vm5136 = vcmp.eq.s32.totalorder %v5131, 2
        %v5137 = vxor.u32 %v5127, 2147483648
        %v5138 = vsel %vm5136, %v5137, %v5128
        %v5139 = vsel %vm5132, %v5135, %v5138
        %v5140 = vsel %vm5129, nan, %v5139
        %v5141 = vand.u32 2147483647, %v4085
        %vm5142 = vcmp.le.f32.partialorder %v5141, 0.7853982
        %vm5143 = vcmp.lt.s32.totalorder %v4085, 0
        %v5144 = vand.u32 %v4085, 2139095040
        %v5145 = vshrl.u32 %v5144, 23
        %v5146 = vsub.s32 %v5145, 127
        %v5147 = vand.u32 2147483647, %v4085
        %v5148 = vand.u32 %v5147, 8388607
        %v5149 = vor.u32 %v5148, 8388608
        %v5150 = vsub.s32 0, %v5149
        %v5151 = vadd.s32 %v5146, 1
        %vm5152 = vcmp.gt.s32.totalorder %v5151, 0
        %v5153 = vsel %vm5152, %v5151, 0
        %v5154 = vshrl.u32 %v5153, 5
        %v5155 = vand.u32 %v5153, 31
        %v5156 = vsub.s32 32, %v5155
        %v5157 = vshrl.u32 683565275, %v5156
        %v5158 = vshll.u32 683565275, %v5155
        %v5159 = vshrl.u32 2475754826, %v5156
        %v5160 = vor.u32 %v5158, %v5159
        %v5161 = vshll.u32 2475754826, %v5155
        %v5162 = vshrl.u32 2131351028, %v5156
        %v5163 = vor.u32 %v5161, %v5162
        %v5164 = vshll.u32 2131351028, %v5155
        %v5165 = vshrl.u32 2102212464, %v5156
        %v5166 = vor.u32 %v5164, %v5165
        %v5167 = vshll.u32 2102212464, %v5155
        %v5168 = vshrl.u32 920167782, %v5156
        %v5169 = vor.u32 %v5167, %v5168
        %v5170 = vshll.u32 920167782, %v5155
        %v5171 = vshrl.u32 1326507024, %v5156
        %v5172 = vor.u32 %v5170, %v5171
        %vm5173 = vcmp.lt.s32.totalorder %v5154, 1
        %vm5174 = vcmp.lt.s32.totalorder %v5154, 2
        %vm5175 = vcmp.lt.s32.totalorder %v5154, 3
        %vm5176 = vcmp.lt.s32.totalorder %v5154, 4
        %v5177 = vsel %vm5173, %v5157, %v5160
        %v5178 = vsel %vm5176, %v5166, 2102212464
        %v5179 = vsel %vm5175, %v5163, %v5178
        %v5180 = vsel %vm5174, %v5177, %v5179
        %v5181 = vsel %vm5173, %v5160, %v5163
        %v5182 = vsel %vm5176, %v5169, 920167782
        %v5183 = vsel %vm5175, %v5166, %v5182
        %v5184 = vsel %vm5174, %v5181, %v5183
        %v5185 = vsel %vm5173, %v5163, %v5166
        %v5186 = vsel %vm5176, %v5172, 1326507024
        %v5187 = vsel %vm5175, %v5169, %v5186
        %v5188 = vsel %vm5174, %v5185, %v5187
        %v5189 = vshll.u32 %v5149, 8
        %v5190 = vmul.u32.u64.compose %v5189, %v5188
        %v5191 = vextract.low.u32 %v5190
        %v5192 = vextract.high.u32 %v5190
        %v5193 = vmul.u32.u64.compose %v5189, %v5184
        %v5194 = vextract.low.u32 %v5193
        %v5195 = vextract.high.u32 %v5193
        %v5196 = vmul.u32 %v5189, %v5180
        %v5197 = vadd.s32 %v5192, %v5194
        %vm5198 = vc.u32 %v5192, %v5194
        %v5199 = vadd.s32 %v5195, 1
        %v5200 = vsel %vm5198, %v5199, %v5195
        %v5201 = vadd.s32 %v5196, %v5200
        %v5202 = vadd.s32 %v5201, 536870912
        %v5203 = vshrl.u32 %v5202, 30
        %v5204 = vshll.u32 %v5203, 30
        %v5205 = vsub.s32 %v5201, %v5204
        %vm5206 = vcmp.lt.s32.totalorder %v5205, 0
        %v5207 = vsub.s32 0, %v5205
        %v5208 = vsel %vm5206, %v5207, %v5205
        %v5209 = vclz %v5208
        %v5210 = vsub.s32 %v5209, 2
        %vm5211 = vcmp.gt.s32.totalorder 0, %v5210
        %v5212 = vsel %vm5211, 0, %v5210
        %v5213 = vsub.s32 32, %v5212
        %v5214 = vshll.u32 %v5205, %v5212
        %v5215 = vshrl.u32 %v5197, %v5213
        %v5216 = vor.u32 %v5214, %v5215
        %v5217 = vsub.s32 4294967266, %v5212
        %v5218 = vadd.s32 %v5217, 127
        %v5219 = vshll.u32 %v5218, 23
        %v5220 = vor.u32 4788187, %v5219
        %v5221 = vand.u32 2147483647, %v5220
        %v5223 = vcvt.s32.f32 %v5216
        %v5224 = vmul.f32 %v5223, %v5221
        %v5225 = vxor.u32 %v5224, 2147483648
        %v5226 = vsel %vm5143, %v5225, %v5224
        %v5227 = vsub.s32 4, %v5203
        %v5228 = vsel %vm5143, %v5227, %v5203
        %v5229 = vsel %vm5142, %v4085, %v5226
        %v5230 = vsel %vm5142, 0, %v5228
        %v5231 = vcosq.f32.pop %v5229
        %v5232 = vsinq.f32.pop %v5229
        %vm5233 = vweird.f32 %v4085
        %v5234 = vadd.s32 %v5230, 3
        %v5235 = vand.u32 %v5234, 3
        %vm5236 = vcmp.lt.s32.totalorder %v5235, 2
        %vm5237 = vcmp.eq.s32.totalorder %v5235, 0
        %v5238 = vxor.u32 %v5232, 2147483648
        %v5239 = vsel %vm5237, %v5231, %v5238
        %vm5240 = vcmp.eq.s32.totalorder %v5235, 2
        %v5241 = vxor.u32 %v5231, 2147483648
        %v5242 = vsel %vm5240, %v5241, %v5232
        %v5243 = vsel %vm5236, %v5239, %v5242
        %v5244 = vsel %vm5233, nan, %v5243
        %v5245 = vand.u32 2147483647, %v4087
        %vm5246 = vcmp.le.f32.partialorder %v5245, 0.7853982
        %vm5247 = vcmp.lt.s32.totalorder %v4087, 0
        %v5248 = vand.u32 %v4087, 2139095040
        %v5249 = vshrl.u32 %v5248, 23
        %v5250 = vsub.s32 %v5249, 127
        %v5251 = vand.u32 2147483647, %v4087
        %v5252 = vand.u32 %v5251, 8388607
        %v5253 = vor.u32 %v5252, 8388608
        %v5254 = vsub.s32 0, %v5253
        %v5255 = vadd.s32 %v5250, 1
        %vm5256 = vcmp.gt.s32.totalorder %v5255, 0
        %v5257 = vsel %vm5256, %v5255, 0
        %v5258 = vshrl.u32 %v5257, 5
        %v5259 = vand.u32 %v5257, 31
        %v5260 = vsub.s32 32, %v5259
        %v5261 = vshrl.u32 683565275, %v5260
        %v5262 = vshll.u32 683565275, %v5259
        %v5263 = vshrl.u32 2475754826, %v5260
        %v5264 = vor.u32 %v5262, %v5263
        %v5265 = vshll.u32 2475754826, %v5259
        %v5266 = vshrl.u32 2131351028, %v5260
        %v5267 = vor.u32 %v5265, %v5266
        %v5268 = vshll.u32 2131351028, %v5259
        %v5269 = vshrl.u32 2102212464, %v5260
        %v5270 = vor.u32 %v5268, %v5269
        %v5271 = vshll.u32 2102212464, %v5259
        %v5272 = vshrl.u32 920167782, %v5260
        %v5273 = vor.u32 %v5271, %v5272
        %v5274 = vshll.u32 920167782, %v5259
        %v5275 = vshrl.u32 1326507024, %v5260
        %v5276 = vor.u32 %v5274, %v5275
        %vm5277 = vcmp.lt.s32.totalorder %v5258, 1
        %vm5278 = vcmp.lt.s32.totalorder %v5258, 2
        %vm5279 = vcmp.lt.s32.totalorder %v5258, 3
        %vm5280 = vcmp.lt.s32.totalorder %v5258, 4
        %v5281 = vsel %vm5277, %v5261, %v5264
        %v5282 = vsel %vm5280, %v5270, 2102212464
        %v5283 = vsel %vm5279, %v5267, %v5282
        %v5284 = vsel %vm5278, %v5281, %v5283
        %v5285 = vsel %vm5277, %v5264, %v5267
        %v5286 = vsel %vm5280, %v5273, 920167782
        %v5287 = vsel %vm5279, %v5270, %v5286
        %v5288 = vsel %vm5278, %v5285, %v5287
        %v5289 = vsel %vm5277, %v5267, %v5270
        %v5290 = vsel %vm5280, %v5276, 1326507024
        %v5291 = vsel %vm5279, %v5273, %v5290
        %v5292 = vsel %vm5278, %v5289, %v5291
        %v5293 = vshll.u32 %v5253, 8
        %v5294 = vmul.u32.u64.compose %v5293, %v5292
        %v5295 = vextract.low.u32 %v5294
        %v5296 = vextract.high.u32 %v5294
        %v5297 = vmul.u32.u64.compose %v5293, %v5288
        %v5298 = vextract.low.u32 %v5297
        %v5299 = vextract.high.u32 %v5297
        %v5300 = vmul.u32 %v5293, %v5284
        %v5301 = vadd.s32 %v5296, %v5298
        %vm5302 = vc.u32 %v5296, %v5298
        %v5303 = vadd.s32 %v5299, 1
        %v5304 = vsel %vm5302, %v5303, %v5299
        %v5305 = vadd.s32 %v5300, %v5304
        %v5306 = vadd.s32 %v5305, 536870912
        %v5307 = vshrl.u32 %v5306, 30
        %v5308 = vshll.u32 %v5307, 30
        %v5309 = vsub.s32 %v5305, %v5308
        %vm5310 = vcmp.lt.s32.totalorder %v5309, 0
        %v5311 = vsub.s32 0, %v5309
        %v5312 = vsel %vm5310, %v5311, %v5309
        %v5313 = vclz %v5312
        %v5314 = vsub.s32 %v5313, 2
        %vm5315 = vcmp.gt.s32.totalorder 0, %v5314
        %v5316 = vsel %vm5315, 0, %v5314
        %v5317 = vsub.s32 32, %v5316
        %v5318 = vshll.u32 %v5309, %v5316
        %v5319 = vshrl.u32 %v5301, %v5317
        %v5320 = vor.u32 %v5318, %v5319
        %v5321 = vsub.s32 4294967266, %v5316
        %v5322 = vadd.s32 %v5321, 127
        %v5323 = vshll.u32 %v5322, 23
        %v5324 = vor.u32 4788187, %v5323
        %v5325 = vand.u32 2147483647, %v5324
        %v5327 = vcvt.s32.f32 %v5320
        %v5328 = vmul.f32 %v5327, %v5325
        %v5329 = vxor.u32 %v5328, 2147483648
        %v5330 = vsel %vm5247, %v5329, %v5328
        %v5331 = vsub.s32 4, %v5307
        %v5332 = vsel %vm5247, %v5331, %v5307
        %v5333 = vsel %vm5246, %v4087, %v5330
        %v5334 = vsel %vm5246, 0, %v5332
        %v5335 = vcosq.f32.pop %v5333
        %v5336 = vsinq.f32.pop %v5333
        %vm5337 = vweird.f32 %v4087
        %v5338 = vadd.s32 %v5334, 3
        %v5339 = vand.u32 %v5338, 3
        %vm5340 = vcmp.lt.s32.totalorder %v5339, 2
        %vm5341 = vcmp.eq.s32.totalorder %v5339, 0
        %v5342 = vxor.u32 %v5336, 2147483648
        %v5343 = vsel %vm5341, %v5335, %v5342
        %vm5344 = vcmp.eq.s32.totalorder %v5339, 2
        %v5345 = vxor.u32 %v5335, 2147483648
        %v5346 = vsel %vm5344, %v5345, %v5336
        %v5347 = vsel %vm5340, %v5343, %v5346
        %v5348 = vsel %vm5337, nan, %v5347
        %v5349 = vand.u32 2147483647, %v4091
        %vm5350 = vcmp.le.f32.partialorder %v5349, 0.7853982
        %vm5351 = vcmp.lt.s32.totalorder %v4091, 0
        %v5352 = vand.u32 %v4091, 2139095040
        %v5353 = vshrl.u32 %v5352, 23
        %v5354 = vsub.s32 %v5353, 127
        %v5355 = vand.u32 2147483647, %v4091
        %v5356 = vand.u32 %v5355, 8388607
        %v5357 = vor.u32 %v5356, 8388608
        %v5358 = vsub.s32 0, %v5357
        %v5359 = vadd.s32 %v5354, 1
        %vm5360 = vcmp.gt.s32.totalorder %v5359, 0
        %v5361 = vsel %vm5360, %v5359, 0
        %v5362 = vshrl.u32 %v5361, 5
        %v5363 = vand.u32 %v5361, 31
        %v5364 = vsub.s32 32, %v5363
        %v5365 = vshrl.u32 683565275, %v5364
        %v5366 = vshll.u32 683565275, %v5363
        %v5367 = vshrl.u32 2475754826, %v5364
        %v5368 = vor.u32 %v5366, %v5367
        %v5369 = vshll.u32 2475754826, %v5363
        %v5370 = vshrl.u32 2131351028, %v5364
        %v5371 = vor.u32 %v5369, %v5370
        %v5372 = vshll.u32 2131351028, %v5363
        %v5373 = vshrl.u32 2102212464, %v5364
        %v5374 = vor.u32 %v5372, %v5373
        %v5375 = vshll.u32 2102212464, %v5363
        %v5376 = vshrl.u32 920167782, %v5364
        %v5377 = vor.u32 %v5375, %v5376
        %v5378 = vshll.u32 920167782, %v5363
        %v5379 = vshrl.u32 1326507024, %v5364
        %v5380 = vor.u32 %v5378, %v5379
        %vm5381 = vcmp.lt.s32.totalorder %v5362, 1
        %vm5382 = vcmp.lt.s32.totalorder %v5362, 2
        %vm5383 = vcmp.lt.s32.totalorder %v5362, 3
        %vm5384 = vcmp.lt.s32.totalorder %v5362, 4
        %v5385 = vsel %vm5381, %v5365, %v5368
        %v5386 = vsel %vm5384, %v5374, 2102212464
        %v5387 = vsel %vm5383, %v5371, %v5386
        %v5388 = vsel %vm5382, %v5385, %v5387
        %v5389 = vsel %vm5381, %v5368, %v5371
        %v5390 = vsel %vm5384, %v5377, 920167782
        %v5391 = vsel %vm5383, %v5374, %v5390
        %v5392 = vsel %vm5382, %v5389, %v5391
        %v5393 = vsel %vm5381, %v5371, %v5374
        %v5394 = vsel %vm5384, %v5380, 1326507024
        %v5395 = vsel %vm5383, %v5377, %v5394
        %v5396 = vsel %vm5382, %v5393, %v5395
        %v5397 = vshll.u32 %v5357, 8
        %v5398 = vmul.u32.u64.compose %v5397, %v5396
        %v5399 = vextract.low.u32 %v5398
        %v5400 = vextract.high.u32 %v5398
        %v5401 = vmul.u32.u64.compose %v5397, %v5392
        %v5402 = vextract.low.u32 %v5401
        %v5403 = vextract.high.u32 %v5401
        %v5404 = vmul.u32 %v5397, %v5388
        %v5405 = vadd.s32 %v5400, %v5402
        %vm5406 = vc.u32 %v5400, %v5402
        %v5407 = vadd.s32 %v5403, 1
        %v5408 = vsel %vm5406, %v5407, %v5403
        %v5409 = vadd.s32 %v5404, %v5408
        %v5410 = vadd.s32 %v5409, 536870912
        %v5411 = vshrl.u32 %v5410, 30
        %v5412 = vshll.u32 %v5411, 30
        %v5413 = vsub.s32 %v5409, %v5412
        %vm5414 = vcmp.lt.s32.totalorder %v5413, 0
        %v5415 = vsub.s32 0, %v5413
        %v5416 = vsel %vm5414, %v5415, %v5413
        %v5417 = vclz %v5416
        %v5418 = vsub.s32 %v5417, 2
        %vm5419 = vcmp.gt.s32.totalorder 0, %v5418
        %v5420 = vsel %vm5419, 0, %v5418
        %v5421 = vsub.s32 32, %v5420
        %v5422 = vshll.u32 %v5413, %v5420
        %v5423 = vshrl.u32 %v5405, %v5421
        %v5424 = vor.u32 %v5422, %v5423
        %v5425 = vsub.s32 4294967266, %v5420
        %v5426 = vadd.s32 %v5425, 127
        %v5427 = vshll.u32 %v5426, 23
        %v5428 = vor.u32 4788187, %v5427
        %v5429 = vand.u32 2147483647, %v5428
        %v5431 = vcvt.s32.f32 %v5424
        %v5432 = vmul.f32 %v5431, %v5429
        %v5433 = vxor.u32 %v5432, 2147483648
        %v5434 = vsel %vm5351, %v5433, %v5432
        %v5435 = vsub.s32 4, %v5411
        %v5436 = vsel %vm5351, %v5435, %v5411
        %v5437 = vsel %vm5350, %v4091, %v5434
        %v5438 = vsel %vm5350, 0, %v5436
        %v5439 = vcosq.f32.pop %v5437
        %v5440 = vsinq.f32.pop %v5437
        %vm5441 = vweird.f32 %v4091
        %v5442 = vadd.s32 %v5438, 3
        %v5443 = vand.u32 %v5442, 3
        %vm5444 = vcmp.lt.s32.totalorder %v5443, 2
        %vm5445 = vcmp.eq.s32.totalorder %v5443, 0
        %v5446 = vxor.u32 %v5440, 2147483648
        %v5447 = vsel %vm5445, %v5439, %v5446
        %vm5448 = vcmp.eq.s32.totalorder %v5443, 2
        %v5449 = vxor.u32 %v5439, 2147483648
        %v5450 = vsel %vm5448, %v5449, %v5440
        %v5451 = vsel %vm5444, %v5447, %v5450
        %v5452 = vsel %vm5441, nan, %v5451
        %v5453 = vand.u32 2147483647, %v4093
        %vm5454 = vcmp.le.f32.partialorder %v5453, 0.7853982
        %vm5455 = vcmp.lt.s32.totalorder %v4093, 0
        %v5456 = vand.u32 %v4093, 2139095040
        %v5457 = vshrl.u32 %v5456, 23
        %v5458 = vsub.s32 %v5457, 127
        %v5459 = vand.u32 2147483647, %v4093
        %v5460 = vand.u32 %v5459, 8388607
        %v5461 = vor.u32 %v5460, 8388608
        %v5462 = vsub.s32 0, %v5461
        %v5463 = vadd.s32 %v5458, 1
        %vm5464 = vcmp.gt.s32.totalorder %v5463, 0
        %v5465 = vsel %vm5464, %v5463, 0
        %v5466 = vshrl.u32 %v5465, 5
        %v5467 = vand.u32 %v5465, 31
        %v5468 = vsub.s32 32, %v5467
        %v5469 = vshrl.u32 683565275, %v5468
        %v5470 = vshll.u32 683565275, %v5467
        %v5471 = vshrl.u32 2475754826, %v5468
        %v5472 = vor.u32 %v5470, %v5471
        %v5473 = vshll.u32 2475754826, %v5467
        %v5474 = vshrl.u32 2131351028, %v5468
        %v5475 = vor.u32 %v5473, %v5474
        %v5476 = vshll.u32 2131351028, %v5467
        %v5477 = vshrl.u32 2102212464, %v5468
        %v5478 = vor.u32 %v5476, %v5477
        %v5479 = vshll.u32 2102212464, %v5467
        %v5480 = vshrl.u32 920167782, %v5468
        %v5481 = vor.u32 %v5479, %v5480
        %v5482 = vshll.u32 920167782, %v5467
        %v5483 = vshrl.u32 1326507024, %v5468
        %v5484 = vor.u32 %v5482, %v5483
        %vm5485 = vcmp.lt.s32.totalorder %v5466, 1
        %vm5486 = vcmp.lt.s32.totalorder %v5466, 2
        %vm5487 = vcmp.lt.s32.totalorder %v5466, 3
        %vm5488 = vcmp.lt.s32.totalorder %v5466, 4
        %v5489 = vsel %vm5485, %v5469, %v5472
        %v5490 = vsel %vm5488, %v5478, 2102212464
        %v5491 = vsel %vm5487, %v5475, %v5490
        %v5492 = vsel %vm5486, %v5489, %v5491
        %v5493 = vsel %vm5485, %v5472, %v5475
        %v5494 = vsel %vm5488, %v5481, 920167782
        %v5495 = vsel %vm5487, %v5478, %v5494
        %v5496 = vsel %vm5486, %v5493, %v5495
        %v5497 = vsel %vm5485, %v5475, %v5478
        %v5498 = vsel %vm5488, %v5484, 1326507024
        %v5499 = vsel %vm5487, %v5481, %v5498
        %v5500 = vsel %vm5486, %v5497, %v5499
        %v5501 = vshll.u32 %v5461, 8
        %v5502 = vmul.u32.u64.compose %v5501, %v5500
        %v5503 = vextract.low.u32 %v5502
        %v5504 = vextract.high.u32 %v5502
        %v5505 = vmul.u32.u64.compose %v5501, %v5496
        %v5506 = vextract.low.u32 %v5505
        %v5507 = vextract.high.u32 %v5505
        %v5508 = vmul.u32 %v5501, %v5492
        %v5509 = vadd.s32 %v5504, %v5506
        %vm5510 = vc.u32 %v5504, %v5506
        %v5511 = vadd.s32 %v5507, 1
        %v5512 = vsel %vm5510, %v5511, %v5507
        %v5513 = vadd.s32 %v5508, %v5512
        %v5514 = vadd.s32 %v5513, 536870912
        %v5515 = vshrl.u32 %v5514, 30
        %v5516 = vshll.u32 %v5515, 30
        %v5517 = vsub.s32 %v5513, %v5516
        %vm5518 = vcmp.lt.s32.totalorder %v5517, 0
        %v5519 = vsub.s32 0, %v5517
        %v5520 = vsel %vm5518, %v5519, %v5517
        %v5521 = vclz %v5520
        %v5522 = vsub.s32 %v5521, 2
        %vm5523 = vcmp.gt.s32.totalorder 0, %v5522
        %v5524 = vsel %vm5523, 0, %v5522
        %v5525 = vsub.s32 32, %v5524
        %v5526 = vshll.u32 %v5517, %v5524
        %v5527 = vshrl.u32 %v5509, %v5525
        %v5528 = vor.u32 %v5526, %v5527
        %v5529 = vsub.s32 4294967266, %v5524
        %v5530 = vadd.s32 %v5529, 127
        %v5531 = vshll.u32 %v5530, 23
        %v5532 = vor.u32 4788187, %v5531
        %v5533 = vand.u32 2147483647, %v5532
        %v5535 = vcvt.s32.f32 %v5528
        %v5536 = vmul.f32 %v5535, %v5533
        %v5537 = vxor.u32 %v5536, 2147483648
        %v5538 = vsel %vm5455, %v5537, %v5536
        %v5539 = vsub.s32 4, %v5515
        %v5540 = vsel %vm5455, %v5539, %v5515
        %v5541 = vsel %vm5454, %v4093, %v5538
        %v5542 = vsel %vm5454, 0, %v5540
        %v5543 = vcosq.f32.pop %v5541
        %v5544 = vsinq.f32.pop %v5541
        %vm5545 = vweird.f32 %v4093
        %v5546 = vadd.s32 %v5542, 3
        %v5547 = vand.u32 %v5546, 3
        %vm5548 = vcmp.lt.s32.totalorder %v5547, 2
        %vm5549 = vcmp.eq.s32.totalorder %v5547, 0
        %v5550 = vxor.u32 %v5544, 2147483648
        %v5551 = vsel %vm5549, %v5543, %v5550
        %vm5552 = vcmp.eq.s32.totalorder %v5547, 2
        %v5553 = vxor.u32 %v5543, 2147483648
        %v5554 = vsel %vm5552, %v5553, %v5544
        %v5555 = vsel %vm5548, %v5551, %v5554
        %v5556 = vsel %vm5545, nan, %v5555
        %v5557 = vand.u32 2147483647, %v4097
        %vm5558 = vcmp.le.f32.partialorder %v5557, 0.7853982
        %vm5559 = vcmp.lt.s32.totalorder %v4097, 0
        %v5560 = vand.u32 %v4097, 2139095040
        %v5561 = vshrl.u32 %v5560, 23
        %v5562 = vsub.s32 %v5561, 127
        %v5563 = vand.u32 2147483647, %v4097
        %v5564 = vand.u32 %v5563, 8388607
        %v5565 = vor.u32 %v5564, 8388608
        %v5566 = vsub.s32 0, %v5565
        %v5567 = vadd.s32 %v5562, 1
        %vm5568 = vcmp.gt.s32.totalorder %v5567, 0
        %v5569 = vsel %vm5568, %v5567, 0
        %v5570 = vshrl.u32 %v5569, 5
        %v5571 = vand.u32 %v5569, 31
        %v5572 = vsub.s32 32, %v5571
        %v5573 = vshrl.u32 683565275, %v5572
        %v5574 = vshll.u32 683565275, %v5571
        %v5575 = vshrl.u32 2475754826, %v5572
        %v5576 = vor.u32 %v5574, %v5575
        %v5577 = vshll.u32 2475754826, %v5571
        %v5578 = vshrl.u32 2131351028, %v5572
        %v5579 = vor.u32 %v5577, %v5578
        %v5580 = vshll.u32 2131351028, %v5571
        %v5581 = vshrl.u32 2102212464, %v5572
        %v5582 = vor.u32 %v5580, %v5581
        %v5583 = vshll.u32 2102212464, %v5571
        %v5584 = vshrl.u32 920167782, %v5572
        %v5585 = vor.u32 %v5583, %v5584
        %v5586 = vshll.u32 920167782, %v5571
        %v5587 = vshrl.u32 1326507024, %v5572
        %v5588 = vor.u32 %v5586, %v5587
        %vm5589 = vcmp.lt.s32.totalorder %v5570, 1
        %vm5590 = vcmp.lt.s32.totalorder %v5570, 2
        %vm5591 = vcmp.lt.s32.totalorder %v5570, 3
        %vm5592 = vcmp.lt.s32.totalorder %v5570, 4
        %v5593 = vsel %vm5589, %v5573, %v5576
        %v5594 = vsel %vm5592, %v5582, 2102212464
        %v5595 = vsel %vm5591, %v5579, %v5594
        %v5596 = vsel %vm5590, %v5593, %v5595
        %v5597 = vsel %vm5589, %v5576, %v5579
        %v5598 = vsel %vm5592, %v5585, 920167782
        %v5599 = vsel %vm5591, %v5582, %v5598
        %v5600 = vsel %vm5590, %v5597, %v5599
        %v5601 = vsel %vm5589, %v5579, %v5582
        %v5602 = vsel %vm5592, %v5588, 1326507024
        %v5603 = vsel %vm5591, %v5585, %v5602
        %v5604 = vsel %vm5590, %v5601, %v5603
        %v5605 = vshll.u32 %v5565, 8
        %v5606 = vmul.u32.u64.compose %v5605, %v5604
        %v5607 = vextract.low.u32 %v5606
        %v5608 = vextract.high.u32 %v5606
        %v5609 = vmul.u32.u64.compose %v5605, %v5600
        %v5610 = vextract.low.u32 %v5609
        %v5611 = vextract.high.u32 %v5609
        %v5612 = vmul.u32 %v5605, %v5596
        %v5613 = vadd.s32 %v5608, %v5610
        %vm5614 = vc.u32 %v5608, %v5610
        %v5615 = vadd.s32 %v5611, 1
        %v5616 = vsel %vm5614, %v5615, %v5611
        %v5617 = vadd.s32 %v5612, %v5616
        %v5618 = vadd.s32 %v5617, 536870912
        %v5619 = vshrl.u32 %v5618, 30
        %v5620 = vshll.u32 %v5619, 30
        %v5621 = vsub.s32 %v5617, %v5620
        %vm5622 = vcmp.lt.s32.totalorder %v5621, 0
        %v5623 = vsub.s32 0, %v5621
        %v5624 = vsel %vm5622, %v5623, %v5621
        %v5625 = vclz %v5624
        %v5626 = vsub.s32 %v5625, 2
        %vm5627 = vcmp.gt.s32.totalorder 0, %v5626
        %v5628 = vsel %vm5627, 0, %v5626
        %v5629 = vsub.s32 32, %v5628
        %v5630 = vshll.u32 %v5621, %v5628
        %v5631 = vshrl.u32 %v5613, %v5629
        %v5632 = vor.u32 %v5630, %v5631
        %v5633 = vsub.s32 4294967266, %v5628
        %v5634 = vadd.s32 %v5633, 127
        %v5635 = vshll.u32 %v5634, 23
        %v5636 = vor.u32 4788187, %v5635
        %v5637 = vand.u32 2147483647, %v5636
        %v5639 = vcvt.s32.f32 %v5632
        %v5640 = vmul.f32 %v5639, %v5637
        %v5641 = vxor.u32 %v5640, 2147483648
        %v5642 = vsel %vm5559, %v5641, %v5640
        %v5643 = vsub.s32 4, %v5619
        %v5644 = vsel %vm5559, %v5643, %v5619
        %v5645 = vsel %vm5558, %v4097, %v5642
        %v5646 = vsel %vm5558, 0, %v5644
        %v5647 = vcosq.f32.pop %v5645
        %v5648 = vsinq.f32.pop %v5645
        %vm5649 = vweird.f32 %v4097
        %v5650 = vadd.s32 %v5646, 3
        %v5651 = vand.u32 %v5650, 3
        %vm5652 = vcmp.lt.s32.totalorder %v5651, 2
        %vm5653 = vcmp.eq.s32.totalorder %v5651, 0
        %v5654 = vxor.u32 %v5648, 2147483648
        %v5655 = vsel %vm5653, %v5647, %v5654
        %vm5656 = vcmp.eq.s32.totalorder %v5651, 2
        %v5657 = vxor.u32 %v5647, 2147483648
        %v5658 = vsel %vm5656, %v5657, %v5648
        %v5659 = vsel %vm5652, %v5655, %v5658
        %v5660 = vsel %vm5649, nan, %v5659
        %v5661 = vand.u32 2147483647, %v4099
        %vm5662 = vcmp.le.f32.partialorder %v5661, 0.7853982
        %vm5663 = vcmp.lt.s32.totalorder %v4099, 0
        %v5664 = vand.u32 %v4099, 2139095040
        %v5665 = vshrl.u32 %v5664, 23
        %v5666 = vsub.s32 %v5665, 127
        %v5667 = vand.u32 2147483647, %v4099
        %v5668 = vand.u32 %v5667, 8388607
        %v5669 = vor.u32 %v5668, 8388608
        %v5670 = vsub.s32 0, %v5669
        %v5671 = vadd.s32 %v5666, 1
        %vm5672 = vcmp.gt.s32.totalorder %v5671, 0
        %v5673 = vsel %vm5672, %v5671, 0
        %v5674 = vshrl.u32 %v5673, 5
        %v5675 = vand.u32 %v5673, 31
        %v5676 = vsub.s32 32, %v5675
        %v5677 = vshrl.u32 683565275, %v5676
        %v5678 = vshll.u32 683565275, %v5675
        %v5679 = vshrl.u32 2475754826, %v5676
        %v5680 = vor.u32 %v5678, %v5679
        %v5681 = vshll.u32 2475754826, %v5675
        %v5682 = vshrl.u32 2131351028, %v5676
        %v5683 = vor.u32 %v5681, %v5682
        %v5684 = vshll.u32 2131351028, %v5675
        %v5685 = vshrl.u32 2102212464, %v5676
        %v5686 = vor.u32 %v5684, %v5685
        %v5687 = vshll.u32 2102212464, %v5675
        %v5688 = vshrl.u32 920167782, %v5676
        %v5689 = vor.u32 %v5687, %v5688
        %v5690 = vshll.u32 920167782, %v5675
        %v5691 = vshrl.u32 1326507024, %v5676
        %v5692 = vor.u32 %v5690, %v5691
        %vm5693 = vcmp.lt.s32.totalorder %v5674, 1
        %vm5694 = vcmp.lt.s32.totalorder %v5674, 2
        %vm5695 = vcmp.lt.s32.totalorder %v5674, 3
        %vm5696 = vcmp.lt.s32.totalorder %v5674, 4
        %v5697 = vsel %vm5693, %v5677, %v5680
        %v5698 = vsel %vm5696, %v5686, 2102212464
        %v5699 = vsel %vm5695, %v5683, %v5698
        %v5700 = vsel %vm5694, %v5697, %v5699
        %v5701 = vsel %vm5693, %v5680, %v5683
        %v5702 = vsel %vm5696, %v5689, 920167782
        %v5703 = vsel %vm5695, %v5686, %v5702
        %v5704 = vsel %vm5694, %v5701, %v5703
        %v5705 = vsel %vm5693, %v5683, %v5686
        %v5706 = vsel %vm5696, %v5692, 1326507024
        %v5707 = vsel %vm5695, %v5689, %v5706
        %v5708 = vsel %vm5694, %v5705, %v5707
        %v5709 = vshll.u32 %v5669, 8
        %v5710 = vmul.u32.u64.compose %v5709, %v5708
        %v5711 = vextract.low.u32 %v5710
        %v5712 = vextract.high.u32 %v5710
        %v5713 = vmul.u32.u64.compose %v5709, %v5704
        %v5714 = vextract.low.u32 %v5713
        %v5715 = vextract.high.u32 %v5713
        %v5716 = vmul.u32 %v5709, %v5700
        %v5717 = vadd.s32 %v5712, %v5714
        %vm5718 = vc.u32 %v5712, %v5714
        %v5719 = vadd.s32 %v5715, 1
        %v5720 = vsel %vm5718, %v5719, %v5715
        %v5721 = vadd.s32 %v5716, %v5720
        %v5722 = vadd.s32 %v5721, 536870912
        %v5723 = vshrl.u32 %v5722, 30
        %v5724 = vshll.u32 %v5723, 30
        %v5725 = vsub.s32 %v5721, %v5724
        %vm5726 = vcmp.lt.s32.totalorder %v5725, 0
        %v5727 = vsub.s32 0, %v5725
        %v5728 = vsel %vm5726, %v5727, %v5725
        %v5729 = vclz %v5728
        %v5730 = vsub.s32 %v5729, 2
        %vm5731 = vcmp.gt.s32.totalorder 0, %v5730
        %v5732 = vsel %vm5731, 0, %v5730
        %v5733 = vsub.s32 32, %v5732
        %v5734 = vshll.u32 %v5725, %v5732
        %v5735 = vshrl.u32 %v5717, %v5733
        %v5736 = vor.u32 %v5734, %v5735
        %v5737 = vsub.s32 4294967266, %v5732
        %v5738 = vadd.s32 %v5737, 127
        %v5739 = vshll.u32 %v5738, 23
        %v5740 = vor.u32 4788187, %v5739
        %v5741 = vand.u32 2147483647, %v5740
        %v5743 = vcvt.s32.f32 %v5736
        %v5744 = vmul.f32 %v5743, %v5741
        %v5745 = vxor.u32 %v5744, 2147483648
        %v5746 = vsel %vm5663, %v5745, %v5744
        %v5747 = vsub.s32 4, %v5723
        %v5748 = vsel %vm5663, %v5747, %v5723
        %v5749 = vsel %vm5662, %v4099, %v5746
        %v5750 = vsel %vm5662, 0, %v5748
        %v5751 = vcosq.f32.pop %v5749
        %v5752 = vsinq.f32.pop %v5749
        %vm5753 = vweird.f32 %v4099
        %v5754 = vadd.s32 %v5750, 3
        %v5755 = vand.u32 %v5754, 3
        %vm5756 = vcmp.lt.s32.totalorder %v5755, 2
        %vm5757 = vcmp.eq.s32.totalorder %v5755, 0
        %v5758 = vxor.u32 %v5752, 2147483648
        %v5759 = vsel %vm5757, %v5751, %v5758
        %vm5760 = vcmp.eq.s32.totalorder %v5755, 2
        %v5761 = vxor.u32 %v5751, 2147483648
        %v5762 = vsel %vm5760, %v5761, %v5752
        %v5763 = vsel %vm5756, %v5759, %v5762
        %v5764 = vsel %vm5753, nan, %v5763
        %v5765 = vld [vmem:[%s3] sm:$0x7]
        %5767 = vset.pattern.permute.xlu0 64
        %5768 = vperm.xlu0 %5767, %v5765
        %v5769 = vpop.permute.xlu0 %5768
        %v5771 = vsel %vm2121, %v5765, 0
        %5773 = vmatprep.subr.mxu0 0.0
        %5774 = vmatpush1.msra.mxu0 0.0
        %5775 = vmatprep.subr.mxu0 0.0
        %5776 = vmatpush1.msra.mxu0 0.0
        %5777 = vmatprep.subr.mxu0 0.0
        %5778 = vmatpush1.msra.mxu0 0.0
        %5779 = vmatprep.subr.mxu0 0.0
        %5780 = vmatpush1.msra.mxu0 0.0
        %5781 = vmatprep.subr.mxu0 0.0
        %5782 = vmatpush1.msra.mxu0 0.0
        %5783 = vmatprep.subr.mxu0 0.0
        %5784 = vmatpush1.msra.mxu0 0.0
        %5785 = vmatprep.subr.mxu0 0.0
        %5786 = vmatpush1.msra.mxu0 0.0
        %5787 = vmatprep.subr.mxu0 0.0
        %5788 = vmatpush1.msra.mxu0 0.0
        %5789 = vmatprep.subr.mxu0 %v5764
        %5790 = vmatpush1.msra.mxu0 %v5660
        %5791 = vmatprep.subr.mxu0 %v5556
        %5792 = vmatpush1.msra.mxu0 %v5452
        %5793 = vmatprep.subr.mxu0 %v5348
        %5794 = vmatpush1.msra.mxu0 %v5244
        %5795 = vmatprep.subr.mxu0 %v5140
        %5796 = vmatpush1.msra.mxu0 %v5036
        %5797 = vmatprep.subr.mxu0 %v4932
        %5798 = vmatpush1.msra.mxu0 %v4828
        %5799 = vmatprep.subr.mxu0 %v4724
        %5800 = vmatpush1.msra.mxu0 %v4620
        %5801 = vmatprep.subr.mxu0 %v4516
        %5802 = vmatpush1.msra.mxu0 %v4412
        %5803 = vmatprep.subr.mxu0 %v4308
        %5804 = vmatpush1.msra.mxu0 %v4204
        %5805 = vmatprep.subr.mxu0 0.0
        %5806 = vmatpush2.msra.mxu0 0.0
        %5807 = vmatprep.subr.mxu0 0.0
        %5808 = vmatpush2.msra.mxu0 0.0
        %5809 = vmatprep.subr.mxu0 0.0
        %5810 = vmatpush2.msra.mxu0 0.0
        %5811 = vmatprep.subr.mxu0 0.0
        %5812 = vmatpush2.msra.mxu0 0.0
        %5813 = vmatprep.subr.mxu0 0.0
        %5814 = vmatpush2.msra.mxu0 0.0
        %5815 = vmatprep.subr.mxu0 0.0
        %5816 = vmatpush2.msra.mxu0 0.0
        %5817 = vmatprep.subr.mxu0 0.0
        %5818 = vmatpush2.msra.mxu0 0.0
        %5819 = vmatprep.subr.mxu0 0.0
        %5820 = vmatpush2.msra.mxu0 0.0
        %5821 = vmatprep.subr.mxu0 0.0
        %5822 = vmatpush2.msra.mxu0 0.0
        %5823 = vmatprep.subr.mxu0 0.0
        %5824 = vmatpush2.msra.mxu0 0.0
        %5825 = vmatprep.subr.mxu0 0.0
        %5826 = vmatpush2.msra.mxu0 0.0
        %5827 = vmatprep.subr.mxu0 0.0
        %5828 = vmatpush2.msra.mxu0 0.0
        %5829 = vmatprep.subr.mxu0 0.0
        %5830 = vmatpush2.msra.mxu0 0.0
        %5831 = vmatprep.subr.mxu0 0.0
        %5832 = vmatpush2.msra.mxu0 0.0
        %5833 = vmatprep.subr.mxu0 0.0
        %5834 = vmatpush2.msra.mxu0 0.0
        %5835 = vmatprep.subr.mxu0 0.0
        %5836 = vmatpush2.msra.mxu0 0.0
        %5837 = vmatprep.mubr.f32.mxu0 0.0
        %5838 = vmatmul.mubr.f32.gmra.mxu0 %v5771
        %v5839 = vpop.f32.mrf.mxu0
        %v5840 = vadd.f32 %v5769, %v5839
        %v5841 = vpop.f32.mrf.mxu0
        %v5842 = vadd.f32 %v5769, %v5841
        %5843 = vdwg.mxu0
        %v5846 = vcombine.low %v5840, %v5842
        %5848 = vst [vmem:[%s206] sm:$0x77] %v5846
        %s5849 = sand.u32 %s116, 1
        %s5850 = scalar_lea.sflag [#allocation4], %s5849
        %s5851 = sand.u32 %s116, 1
        %s5852 = smul.addr %s5851, 8
        %s5853 = scalar_lea.vmem [#allocation5], %s5852
        // Predicated region
        $region41: #{tpu_custom_call.1} parent=35 // pred_check
          %p5854 = pneg %p126
        $region42: #{tpu_custom_call.1} parent=35 // pred_check_branch
          %5856 = sbr.rel (%p5854) target = $region44
        $region43: #{tpu_custom_call.1} parent=35 // pred_region
          %s5857 = smul.u32 2, %s19
          %s5859 = ssub.s32 128, 128
          %5860 = vsyncadd %s5850, %s5859
          %s5861 = smul.addr %s5857, 64
          %s5862 = scalar_lea.hbm %s4, %s5861
          %s5864 = sshll.u32 %s5853, 4
          %s5865 = int_to_ptr.vmem [resolvable:$true] %s5864
          %5867 = dma.vmem_to_hbm [thread:$0]  %s5865, 128, %s5862, %s5850
        $region44: #{tpu_custom_call.1} parent=35 // pred_fallthru
          _
      $region36: #{tpu_custom_call.1} parent=5 // pred_fallthru
        _
      %p5868 = scmp.le.s32.totalorder 2, %s14
      // Predicated region
      $region45: #{tpu_custom_call.1} parent=5 // pred_check
        %p5869 = pneg %p5868
      $region46: #{tpu_custom_call.1} parent=5 // pred_check_branch
        %5871 = sbr.rel (%p5869) target = $region48
      $region47: #{tpu_custom_call.1} parent=5 // pred_region
        %s5872 = ssub.s32 %s14, 2
        // Predicated region
        $region49: #{tpu_custom_call.1} parent=47 // pred_check
          %p5873 = pneg %p132
        $region50: #{tpu_custom_call.1} parent=47 // pred_check_branch
          %5875 = sbr.rel (%p5873) target = $region52
        $region51: #{tpu_custom_call.1} parent=47 // pred_region
          %s5876 = sand.u32 %s117, 1
          %s5877 = scalar_lea.sflag [#allocation4], %s5876
          %s5878 = sand.u32 %s117, 1
          %s5879 = smul.addr %s5878, 8
          %s5880 = scalar_lea.vmem [#allocation5], %s5879
          %5881 = dma.done %s5877, 128
        $region52: #{tpu_custom_call.1} parent=47 // pred_fallthru
          _
      $region48: #{tpu_custom_call.1} parent=5 // pred_fallthru
        _
    $region6: #{tpu_custom_call.1} parent=1 // loop_footer
      %s18 = sadd.s32 1, %s14
    $region7: #{tpu_custom_call.1} parent=1 // loop_footer_branch
      %13 = sbr.rel target = $region3
    $region8: #{tpu_custom_call.1} parent=1 // loop_exit
      _
    %5882 = vsyncpa [#allocation3], 1
    %s5883 = scalar_lea.sflag [#allocation3], 1
    %5884 = vsyncpa %s5883, 1
    %5885 = vsyncpa [#allocation4], 1
    %s5886 = scalar_lea.sflag [#allocation4], 1
    %5887 = vsyncpa %s5886, 1

</llo_original>
